<compile_context>
chip_gen: v6e
topology: v6e:2x2x1
jax: 0.10.0
libtpu: 0.0.40
codegen_flags: <defaults>
</compile_context>

<pallas_src>
import math

import jax
import jax.numpy as jnp
from jax.experimental import pallas as pl
from jax.experimental.pallas import tpu as pltpu


E = 128          # shared embedding dim
HEADS = 4
DH = E // HEADS
TXT_IN = 768
IMG_IN = 2048

_VMEM_LIMIT = 32 * 1024 * 1024   # kernel needs <8 MiB; safe on v5e/v6e/v7x


# ----------------------------------------------------------------------------
# Fused forward kernel: one grid step == one batch element.
# ----------------------------------------------------------------------------
def _fused_forward_kernel(txt_ref, img_ref,
                          w_txt_ref, b_txt_ref,
                          w_img_ref, b_img_ref,
                          w_qkv_ref, b_qkv_ref,
                          w_o_ref, b_o_ref,
                          o_ref):
    # ---- modality projections into the shared 128-d space (eval dropout = id)
    txt_e = jnp.dot(txt_ref[0], w_txt_ref[...],
                    preferred_element_type=jnp.float32) + b_txt_ref[...]      # (T, E)

    # Image features arrive channel-major (C, R): contract over C with a
    # transposed-LHS dot_general, folding the NCHW->region flatten into the
    # kernel (no standalone XLA transpose / extra HBM round trip).
    img_e = jax.lax.dot_general(
        img_ref[0], w_img_ref[...],
        dimension_numbers=(((0,), (0,)), ((), ())),
        preferred_element_type=jnp.float32) + b_img_ref[...]                  # (R, E)

    # ---- fused per-modality QKV in-projections, shared by both attentions.
    #   img columns: [q_i2t (pre-scaled) | k_t2i | v_t2i]
    #   txt columns: [q_t2i (pre-scaled) | k_i2t | v_i2t]
    img_qkv = jnp.dot(img_e.astype(jnp.bfloat16), w_qkv_ref[0],
                      preferred_element_type=jnp.float32) + b_qkv_ref[0]      # (R, 3E)
    txt_qkv = jnp.dot(txt_e.astype(jnp.bfloat16), w_qkv_ref[1],
                      preferred_element_type=jnp.float32) + b_qkv_ref[1]      # (T, 3E)

    q_img, k_t2i, v_t2i = img_qkv[:, :E], img_qkv[:, E:2 * E], img_qkv[:, 2 * E:]
    q_txt, k_i2t, v_i2t = txt_qkv[:, :E], txt_qkv[:, E:2 * E], txt_qkv[:, 2 * E:]

    # Per-head lane masks (static): every MXU operand stays 128 lanes wide,
    # no 32-lane slices / sub-lane-tile relayouts.
    lane = jax.lax.broadcasted_iota(jnp.int32, (1, E), 1)
    masks = [((lane >= h * DH) & (lane < (h + 1) * DH)).astype(jnp.float32)
             for h in range(HEADS)]

    def mha_pool(q, k, v):
        """Per-head softmax(q k^T) v with heads written to disjoint lanes,
        then mean over the query axis.  q is already scaled.  -> (1, E) f32."""
        k_b = k.astype(jnp.bfloat16)
        ctx = jnp.zeros((q.shape[0], E), jnp.float32)
        for m in masks:
            qh = (q * m).astype(jnp.bfloat16)                      # head-h lanes only
            s = jax.lax.dot_general(qh, k_b, (((1,), (1,)), ((), ())),
                                    preferred_element_type=jnp.float32)  # (Lq, Lk)
            s = s - jnp.max(s, axis=-1, keepdims=True)             # f32 softmax stats
            p = jnp.exp(s)
            p = p * pl.reciprocal(jnp.sum(p, axis=-1, keepdims=True), approx=True)
            vh = (v * m).astype(jnp.bfloat16)                      # (Lk, E), head-h lanes
            ctx = ctx + jnp.dot(p.astype(jnp.bfloat16), vh,
                                preferred_element_type=jnp.float32)
        return jnp.mean(ctx, axis=0, keepdims=True)                # (1, E)

    pool_i2t = mha_pool(q_img, k_i2t, v_i2t)     # image queries attend to text
    pool_t2i = mha_pool(q_txt, k_t2i, v_t2i)     # text queries attend to image

    # Out-projection commutes with the mean-pool: (mean ctx) @ Wo + bo.
    out_i2t = jnp.dot(pool_i2t.astype(jnp.bfloat16), w_o_ref[0],
                      preferred_element_type=jnp.float32) + b_o_ref[0]
    out_t2i = jnp.dot(pool_t2i.astype(jnp.bfloat16), w_o_ref[1],
                      preferred_element_type=jnp.float32) + b_o_ref[1]

    o_ref[0] = 0.5 * (out_i2t + out_t2i)                           # (1, E)


# ----------------------------------------------------------------------------
# One-time host-side weight packing (runs ONCE, outside the jitted forward).
# ----------------------------------------------------------------------------
def prepack_params(params):
    scale = 1.0 / math.sqrt(DH)                  # folded into Wq / bq

    i2t_w, i2t_b = params["i2t_in_w"], params["i2t_in_b"]
    t2i_w, t2i_b = params["t2i_in_w"], params["t2i_in_b"]

    # img modality feeds: q of i2t (scaled), k/v of t2i.
    w_img_qkv = jnp.concatenate(
        [i2t_w[:E].T * scale, t2i_w[E:2 * E].T, t2i_w[2 * E:].T], axis=1)    # (128, 384)
    b_img_qkv = jnp.concatenate(
        [i2t_b[:E] * scale, t2i_b[E:2 * E], t2i_b[2 * E:]])                  # (384,)
    # txt modality feeds: q of t2i (scaled), k/v of i2t.
    w_txt_qkv = jnp.concatenate(
        [t2i_w[:E].T * scale, i2t_w[E:2 * E].T, i2t_w[2 * E:].T], axis=1)
    b_txt_qkv = jnp.concatenate(
        [t2i_b[:E] * scale, i2t_b[E:2 * E], i2t_b[2 * E:]])

    return {
        "w_txt": params["txt_linear_w"].T.astype(jnp.bfloat16),             # (768, 128)
        "b_txt": params["txt_linear_b"].reshape(1, E).astype(jnp.float32),
        "w_img": params["img_linear_w"].T.astype(jnp.bfloat16),             # (2048, 128)
        "b_img": params["img_linear_b"].reshape(1, E).astype(jnp.float32),
        "w_qkv": jnp.stack([w_img_qkv, w_txt_qkv]).astype(jnp.bfloat16),    # (2, 128, 384)
        "b_qkv": jnp.stack([b_img_qkv, b_txt_qkv]
                           ).reshape(2, 1, 3 * E).astype(jnp.float32),
        "w_o": jnp.stack([params["i2t_out_w"].T,
                          params["t2i_out_w"].T]).astype(jnp.bfloat16),     # (2, 128, 128)
        "b_o": jnp.stack([params["i2t_out_b"],
                          params["t2i_out_b"]]).reshape(2, 1, E).astype(jnp.float32),
        "w_cls": params["cls_w"].T.astype(jnp.float32),                     # (128, 2)
        "b_cls": params["cls_b"].reshape(1, 2).astype(jnp.float32),
    }


# ----------------------------------------------------------------------------
# Parameter construction (deterministic, synthetic; PyTorch (out,in) layout)
# ----------------------------------------------------------------------------
def init_params(key):
    def dense(k, out_f, in_f, scale=0.02):
        kw, kb = jax.random.split(k)
        w = scale * jax.random.normal(kw, (out_f, in_f), jnp.float32)
        b = scale * jax.random.normal(kb, (out_f,), jnp.float32)
        return w, b

    keys = jax.random.split(key, 8)
    params = {}
    params["txt_linear_w"], params["txt_linear_b"] = dense(keys[0], 128, 768)
    params["img_linear_w"], params["img_linear_b"] = dense(keys[1], 128, 2048)
    params["i2t_in_w"], params["i2t_in_b"] = dense(keys[2], 3 * 128, 128)
    params["i2t_out_w"], params["i2t_out_b"] = dense(keys[3], 128, 128)
    params["t2i_in_w"], params["t2i_in_b"] = dense(keys[4], 3 * 128, 128)
    params["t2i_out_w"], params["t2i_out_b"] = dense(keys[5], 128, 128)
    params["cls_w"], params["cls_b"] = dense(keys[6], 2, 128)
    return params


# ----------------------------------------------------------------------------
# Forward pass: one pallas_call + a tiny XLA classifier.
# ----------------------------------------------------------------------------
def img_text_matching_forward(packed, text_feats, img_datas):
    """text_feats: (B, T, 768) f32; img_datas: (B, 2048, Hf, Wf) f32 (NCHW)."""
    B, T, _ = text_feats.shape
    _, C, Hf, Wf = img_datas.shape
    R = Hf * Wf

    txt_b = text_feats.astype(jnp.bfloat16)                    # halve input DMA
    img_b = img_datas.astype(jnp.bfloat16).reshape(B, C, R)    # free reshape; no transpose

    fused = pl.pallas_call(
        _fused_forward_kernel,
        out_shape=jax.ShapeDtypeStruct((B, 1, E), jnp.float32),
        grid=(B,),
        in_specs=[
            pl.BlockSpec((1, T, TXT_IN), lambda b: (b, 0, 0)),
            pl.BlockSpec((1, C, R), lambda b: (b, 0, 0)),
            pl.BlockSpec((TXT_IN, E), lambda b: (0, 0)),
            pl.BlockSpec((1, E), lambda b: (0, 0)),
            pl.BlockSpec((IMG_IN, E), lambda b: (0, 0)),
            pl.BlockSpec((1, E), lambda b: (0, 0)),
            pl.BlockSpec((2, E, 3 * E), lambda b: (0, 0, 0)),
            pl.BlockSpec((2, 1, 3 * E), lambda b: (0, 0, 0)),
            pl.BlockSpec((2, E, E), lambda b: (0, 0, 0)),
            pl.BlockSpec((2, 1, E), lambda b: (0, 0, 0)),
        ],
        out_specs=pl.BlockSpec((1, 1, E), lambda b: (b, 0, 0)),
        compiler_params=pltpu.CompilerParams(
            dimension_semantics=("parallel",),     # >=2 parallel steps feed both v7x TCs
            vmem_limit_bytes=_VMEM_LIMIT),
    )(txt_b, img_b,
      packed["w_txt"], packed["b_txt"],
      packed["w_img"], packed["b_img"],
      packed["w_qkv"], packed["b_qkv"],
      packed["w_o"], packed["b_o"])

    # Tiny 128->2 classifier: plain XLA (an in-kernel N=2 matmul saves nothing).
    return fused.reshape(B, E) @ packed["w_cls"] + packed["b_cls"]


# ----------------------------------------------------------------------------
if __name__ == "__main__":
    key = jax.random.PRNGKey(0)
    k_params, k_txt, k_img = jax.random.split(key, 3)

    B, T = 2, 8          # batch, text tokens
    Hf, Wf = 4, 4        # spatial extent of the (pre-extracted) ResNet feature map

    params = init_params(k_params)
    packed = prepack_params(params)          # one-time packing, outside the jit

    text_feats = jax.random.normal(k_txt, (B, T, TXT_IN), jnp.float32)
    img_datas = jax.random.normal(k_img, (B, IMG_IN, Hf, Wf), jnp.float32)

    fwd = jax.jit(img_text_matching_forward)
    logits = fwd(packed, text_feats, img_datas)
    logits = jax.block_until_ready(logits)

    assert logits.shape == (B, 2) and logits.dtype == jnp.float32
    print("KERNEL_OK")
</pallas_src>

<mosaic_0001>
module attributes {stable_mosaic.version = 11 : i64} {
  func.func @_fused_forward_kernel(%arg0: i32, %arg1: memref<1x8x768xbf16, #tpu.memory_space<vmem>>, %arg2: memref<1x2048x16xbf16, #tpu.memory_space<vmem>>, %arg3: memref<768x128xbf16, #tpu.memory_space<vmem>>, %arg4: memref<1x128xf32, #tpu.memory_space<vmem>>, %arg5: memref<2048x128xbf16, #tpu.memory_space<vmem>>, %arg6: memref<1x128xf32, #tpu.memory_space<vmem>>, %arg7: memref<2x128x384xbf16, #tpu.memory_space<vmem>>, %arg8: memref<2x1x384xf32, #tpu.memory_space<vmem>>, %arg9: memref<2x128x128xbf16, #tpu.memory_space<vmem>>, %arg10: memref<2x1x128xf32, #tpu.memory_space<vmem>>, %arg11: memref<1x1x128xf32, #tpu.memory_space<vmem>>) attributes {dimension_semantics = [#tpu.dimension_semantics<parallel>], iteration_bounds = array<i64: 2>, scalar_prefetch = 0 : i64, scratch_operands = 0 : i64, tpu.core_type = #tpu.core_type<tc>, window_params = [{transform_indices = @transform_0, window_bounds = array<i64: 1, 8, 768>}, {transform_indices = @transform_1, window_bounds = array<i64: 1, 2048, 16>}, {pipeline_mode = #tpu.pipeline_mode<synchronous>, transform_indices = @transform_2, window_bounds = array<i64: 768, 128>}, {pipeline_mode = #tpu.pipeline_mode<synchronous>, transform_indices = @transform_3, window_bounds = array<i64: 1, 128>}, {pipeline_mode = #tpu.pipeline_mode<synchronous>, transform_indices = @transform_4, window_bounds = array<i64: 2048, 128>}, {pipeline_mode = #tpu.pipeline_mode<synchronous>, transform_indices = @transform_5, window_bounds = array<i64: 1, 128>}, {pipeline_mode = #tpu.pipeline_mode<synchronous>, transform_indices = @transform_6, window_bounds = array<i64: 2, 128, 384>}, {pipeline_mode = #tpu.pipeline_mode<synchronous>, transform_indices = @transform_7, window_bounds = array<i64: 2, 1, 384>}, {pipeline_mode = #tpu.pipeline_mode<synchronous>, transform_indices = @transform_8, window_bounds = array<i64: 2, 128, 128>}, {pipeline_mode = #tpu.pipeline_mode<synchronous>, transform_indices = @transform_9, window_bounds = array<i64: 2, 1, 128>}, {transform_indices = @transform_10, window_bounds = array<i64: 1, 1, 128>}]} {
    %c0 = arith.constant 0 : index
    %c0_0 = arith.constant 0 : index
    %c0_1 = arith.constant 0 : index
    %0 = vector.load %arg1[%c0, %c0_0, %c0_1] : memref<1x8x768xbf16, #tpu.memory_space<vmem>>, vector<1x8x768xbf16>
    %1 = vector.shape_cast %0 : vector<1x8x768xbf16> to vector<8x768xbf16>
    %c0_2 = arith.constant 0 : index
    %c0_3 = arith.constant 0 : index
    %2 = vector.load %arg3[%c0_2, %c0_3] : memref<768x128xbf16, #tpu.memory_space<vmem>>, vector<768x128xbf16>
    %cst = arith.constant dense<0.000000e+00> : vector<8x128xf32>
    %3 = tpu.matmul %1, %2, %cst {dimension_numbers = #tpu.dot_dimension_numbers<[1], [0], [0], [1], [0, 0, 1, 1], [], []>} : vector<8x768xbf16>, vector<768x128xbf16>, vector<8x128xf32> -> vector<8x128xf32>
    %c0_4 = arith.constant 0 : index
    %c0_5 = arith.constant 0 : index
    %4 = vector.load %arg4[%c0_4, %c0_5] : memref<1x128xf32, #tpu.memory_space<vmem>>, vector<1x128xf32>
    %5 = vector.broadcast %4 : vector<1x128xf32> to vector<8x128xf32>
    %6 = arith.addf %3, %5 : vector<8x128xf32>
    %c0_6 = arith.constant 0 : index
    %c0_7 = arith.constant 0 : index
    %c0_8 = arith.constant 0 : index
    %7 = vector.load %arg2[%c0_6, %c0_7, %c0_8] : memref<1x2048x16xbf16, #tpu.memory_space<vmem>>, vector<1x2048x16xbf16>
    %8 = vector.shape_cast %7 : vector<1x2048x16xbf16> to vector<2048x16xbf16>
    %c0_9 = arith.constant 0 : index
    %c0_10 = arith.constant 0 : index
    %9 = vector.load %arg5[%c0_9, %c0_10] : memref<2048x128xbf16, #tpu.memory_space<vmem>>, vector<2048x128xbf16>
    %cst_11 = arith.constant dense<0.000000e+00> : vector<16x128xf32>
    %10 = tpu.matmul %8, %9, %cst_11 {dimension_numbers = #tpu.dot_dimension_numbers<[0], [0], [1], [1], [0, 1, 1, 1], [], []>} : vector<2048x16xbf16>, vector<2048x128xbf16>, vector<16x128xf32> -> vector<16x128xf32>
    %c0_12 = arith.constant 0 : index
    %c0_13 = arith.constant 0 : index
    %11 = vector.load %arg6[%c0_12, %c0_13] : memref<1x128xf32, #tpu.memory_space<vmem>>, vector<1x128xf32>
    %12 = vector.broadcast %11 : vector<1x128xf32> to vector<16x128xf32>
    %13 = arith.addf %10, %12 : vector<16x128xf32>
    %14 = arith.truncf %13 : vector<16x128xf32> to vector<16x128xbf16>
    %c0_14 = arith.constant 0 : index
    %c0_15 = arith.constant 0 : index
    %c0_16 = arith.constant 0 : index
    %15 = vector.load %arg7[%c0_14, %c0_15, %c0_16] : memref<2x128x384xbf16, #tpu.memory_space<vmem>>, vector<1x128x384xbf16>
    %16 = vector.shape_cast %15 : vector<1x128x384xbf16> to vector<128x384xbf16>
    %cst_17 = arith.constant dense<0.000000e+00> : vector<16x384xf32>
    %17 = tpu.matmul %14, %16, %cst_17 {dimension_numbers = #tpu.dot_dimension_numbers<[1], [0], [0], [1], [0, 0, 1, 1], [], []>} : vector<16x128xbf16>, vector<128x384xbf16>, vector<16x384xf32> -> vector<16x384xf32>
    %c0_18 = arith.constant 0 : index
    %c0_19 = arith.constant 0 : index
    %c0_20 = arith.constant 0 : index
    %18 = vector.load %arg8[%c0_18, %c0_19, %c0_20] : memref<2x1x384xf32, #tpu.memory_space<vmem>>, vector<1x1x384xf32>
    %19 = vector.shape_cast %18 : vector<1x1x384xf32> to vector<1x384xf32>
    %20 = vector.broadcast %19 : vector<1x384xf32> to vector<16x384xf32>
    %21 = arith.addf %17, %20 : vector<16x384xf32>
    %22 = arith.truncf %6 : vector<8x128xf32> to vector<8x128xbf16>
    %c1 = arith.constant 1 : index
    %c0_21 = arith.constant 0 : index
    %c0_22 = arith.constant 0 : index
    %23 = vector.load %arg7[%c1, %c0_21, %c0_22] : memref<2x128x384xbf16, #tpu.memory_space<vmem>>, vector<1x128x384xbf16>
    %24 = vector.shape_cast %23 : vector<1x128x384xbf16> to vector<128x384xbf16>
    %cst_23 = arith.constant dense<0.000000e+00> : vector<8x384xf32>
    %25 = tpu.matmul %22, %24, %cst_23 {dimension_numbers = #tpu.dot_dimension_numbers<[1], [0], [0], [1], [0, 0, 1, 1], [], []>} : vector<8x128xbf16>, vector<128x384xbf16>, vector<8x384xf32> -> vector<8x384xf32>
    %c1_24 = arith.constant 1 : index
    %c0_25 = arith.constant 0 : index
    %c0_26 = arith.constant 0 : index
    %26 = vector.load %arg8[%c1_24, %c0_25, %c0_26] : memref<2x1x384xf32, #tpu.memory_space<vmem>>, vector<1x1x384xf32>
    %27 = vector.shape_cast %26 : vector<1x1x384xf32> to vector<1x384xf32>
    %28 = vector.broadcast %27 : vector<1x384xf32> to vector<8x384xf32>
    %29 = arith.addf %25, %28 : vector<8x384xf32>
    %30 = vector.extract_strided_slice %21 {offsets = [0, 0], sizes = [16, 128], strides = [1, 1]} : vector<16x384xf32> to vector<16x128xf32>
    %31 = vector.extract_strided_slice %21 {offsets = [0, 128], sizes = [16, 128], strides = [1, 1]} : vector<16x384xf32> to vector<16x128xf32>
    %32 = vector.extract_strided_slice %21 {offsets = [0, 256], sizes = [16, 128], strides = [1, 1]} : vector<16x384xf32> to vector<16x128xf32>
    %33 = vector.extract_strided_slice %29 {offsets = [0, 0], sizes = [8, 128], strides = [1, 1]} : vector<8x384xf32> to vector<8x128xf32>
    %34 = vector.extract_strided_slice %29 {offsets = [0, 128], sizes = [8, 128], strides = [1, 1]} : vector<8x384xf32> to vector<8x128xf32>
    %35 = vector.extract_strided_slice %29 {offsets = [0, 256], sizes = [8, 128], strides = [1, 1]} : vector<8x384xf32> to vector<8x128xf32>
    %36 = tpu.iota {dimensions = array<i32: 1>} : vector<1x128xi32>
    %c0_i32 = arith.constant 0 : i32
    %37 = vector.broadcast %c0_i32 : i32 to vector<1x128xi32>
    %38 = arith.cmpi sge, %36, %37 : vector<1x128xi32>
    %c32_i32 = arith.constant 32 : i32
    %39 = vector.broadcast %c32_i32 : i32 to vector<1x128xi32>
    %40 = arith.cmpi slt, %36, %39 : vector<1x128xi32>
    %41 = arith.andi %38, %40 : vector<1x128xi1>
    %42 = arith.extui %41 : vector<1x128xi1> to vector<1x128xi32>
    %43 = arith.sitofp %42 : vector<1x128xi32> to vector<1x128xf32>
    %c32_i32_27 = arith.constant 32 : i32
    %44 = vector.broadcast %c32_i32_27 : i32 to vector<1x128xi32>
    %45 = arith.cmpi sge, %36, %44 : vector<1x128xi32>
    %c64_i32 = arith.constant 64 : i32
    %46 = vector.broadcast %c64_i32 : i32 to vector<1x128xi32>
    %47 = arith.cmpi slt, %36, %46 : vector<1x128xi32>
    %48 = arith.andi %45, %47 : vector<1x128xi1>
    %49 = arith.extui %48 : vector<1x128xi1> to vector<1x128xi32>
    %50 = arith.sitofp %49 : vector<1x128xi32> to vector<1x128xf32>
    %c64_i32_28 = arith.constant 64 : i32
    %51 = vector.broadcast %c64_i32_28 : i32 to vector<1x128xi32>
    %52 = arith.cmpi sge, %36, %51 : vector<1x128xi32>
    %c96_i32 = arith.constant 96 : i32
    %53 = vector.broadcast %c96_i32 : i32 to vector<1x128xi32>
    %54 = arith.cmpi slt, %36, %53 : vector<1x128xi32>
    %55 = arith.andi %52, %54 : vector<1x128xi1>
    %56 = arith.extui %55 : vector<1x128xi1> to vector<1x128xi32>
    %57 = arith.sitofp %56 : vector<1x128xi32> to vector<1x128xf32>
    %c96_i32_29 = arith.constant 96 : i32
    %58 = vector.broadcast %c96_i32_29 : i32 to vector<1x128xi32>
    %59 = arith.cmpi sge, %36, %58 : vector<1x128xi32>
    %c128_i32 = arith.constant 128 : i32
    %60 = vector.broadcast %c128_i32 : i32 to vector<1x128xi32>
    %61 = arith.cmpi slt, %36, %60 : vector<1x128xi32>
    %62 = arith.andi %59, %61 : vector<1x128xi1>
    %63 = arith.extui %62 : vector<1x128xi1> to vector<1x128xi32>
    %64 = arith.sitofp %63 : vector<1x128xi32> to vector<1x128xf32>
    %65 = arith.truncf %34 : vector<8x128xf32> to vector<8x128xbf16>
    %cst_30 = arith.constant 0.000000e+00 : f32
    %66 = vector.broadcast %cst_30 : f32 to vector<16x128xf32>
    %67 = vector.broadcast %43 : vector<1x128xf32> to vector<16x128xf32>
    %68 = arith.mulf %30, %67 : vector<16x128xf32>
    %69 = arith.truncf %68 : vector<16x128xf32> to vector<16x128xbf16>
    %cst_31 = arith.constant dense<0.000000e+00> : vector<16x8xf32>
    %70 = tpu.matmul %69, %65, %cst_31 {dimension_numbers = #tpu.dot_dimension_numbers<[1], [1], [0], [0], [0, 0, 1, 0], [], []>} : vector<16x128xbf16>, vector<8x128xbf16>, vector<16x8xf32> -> vector<16x8xf32>
    %cst_32 = arith.constant dense<0xFF800000> : vector<16xf32>
    %71 = vector.multi_reduction <maximumf>, %70, %cst_32 [1] : vector<16x8xf32> to vector<16xf32>
    %72 = vector.shape_cast %71 : vector<16xf32> to vector<16x1xf32>
    %73 = vector.broadcast %72 : vector<16x1xf32> to vector<16x8xf32>
    %74 = arith.subf %70, %73 : vector<16x8xf32>
    %75 = math.exp %74 : vector<16x8xf32>
    %cst_33 = arith.constant dense<0.000000e+00> : vector<16xf32>
    %76 = vector.multi_reduction <add>, %75, %cst_33 [1] : vector<16x8xf32> to vector<16xf32>
    %77 = vector.shape_cast %76 : vector<16xf32> to vector<16x1xf32>
    %78 = tpu.reciprocal %77 {approx = true} : vector<16x1xf32> -> vector<16x1xf32>
    %79 = vector.broadcast %78 : vector<16x1xf32> to vector<16x8xf32>
    %80 = arith.mulf %75, %79 : vector<16x8xf32>
    %81 = vector.broadcast %43 : vector<1x128xf32> to vector<8x128xf32>
    %82 = arith.mulf %35, %81 : vector<8x128xf32>
    %83 = arith.truncf %82 : vector<8x128xf32> to vector<8x128xbf16>
    %84 = arith.truncf %80 : vector<16x8xf32> to vector<16x8xbf16>
    %cst_34 = arith.constant dense<0.000000e+00> : vector<16x128xf32>
    %85 = tpu.matmul %84, %83, %cst_34 {dimension_numbers = #tpu.dot_dimension_numbers<[1], [0], [0], [1], [0, 0, 1, 1], [], []>} : vector<16x8xbf16>, vector<8x128xbf16>, vector<16x128xf32> -> vector<16x128xf32>
    %86 = arith.addf %66, %85 : vector<16x128xf32>
    %87 = vector.broadcast %50 : vector<1x128xf32> to vector<16x128xf32>
    %88 = arith.mulf %30, %87 : vector<16x128xf32>
    %89 = arith.truncf %88 : vector<16x128xf32> to vector<16x128xbf16>
    %cst_35 = arith.constant dense<0.000000e+00> : vector<16x8xf32>
    %90 = tpu.matmul %89, %65, %cst_35 {dimension_numbers = #tpu.dot_dimension_numbers<[1], [1], [0], [0], [0, 0, 1, 0], [], []>} : vector<16x128xbf16>, vector<8x128xbf16>, vector<16x8xf32> -> vector<16x8xf32>
    %cst_36 = arith.constant dense<0xFF800000> : vector<16xf32>
    %91 = vector.multi_reduction <maximumf>, %90, %cst_36 [1] : vector<16x8xf32> to vector<16xf32>
    %92 = vector.shape_cast %91 : vector<16xf32> to vector<16x1xf32>
    %93 = vector.broadcast %92 : vector<16x1xf32> to vector<16x8xf32>
    %94 = arith.subf %90, %93 : vector<16x8xf32>
    %95 = math.exp %94 : vector<16x8xf32>
    %cst_37 = arith.constant dense<0.000000e+00> : vector<16xf32>
    %96 = vector.multi_reduction <add>, %95, %cst_37 [1] : vector<16x8xf32> to vector<16xf32>
    %97 = vector.shape_cast %96 : vector<16xf32> to vector<16x1xf32>
    %98 = tpu.reciprocal %97 {approx = true} : vector<16x1xf32> -> vector<16x1xf32>
    %99 = vector.broadcast %98 : vector<16x1xf32> to vector<16x8xf32>
    %100 = arith.mulf %95, %99 : vector<16x8xf32>
    %101 = vector.broadcast %50 : vector<1x128xf32> to vector<8x128xf32>
    %102 = arith.mulf %35, %101 : vector<8x128xf32>
    %103 = arith.truncf %102 : vector<8x128xf32> to vector<8x128xbf16>
    %104 = arith.truncf %100 : vector<16x8xf32> to vector<16x8xbf16>
    %cst_38 = arith.constant dense<0.000000e+00> : vector<16x128xf32>
    %105 = tpu.matmul %104, %103, %cst_38 {dimension_numbers = #tpu.dot_dimension_numbers<[1], [0], [0], [1], [0, 0, 1, 1], [], []>} : vector<16x8xbf16>, vector<8x128xbf16>, vector<16x128xf32> -> vector<16x128xf32>
    %106 = arith.addf %86, %105 : vector<16x128xf32>
    %107 = vector.broadcast %57 : vector<1x128xf32> to vector<16x128xf32>
    %108 = arith.mulf %30, %107 : vector<16x128xf32>
    %109 = arith.truncf %108 : vector<16x128xf32> to vector<16x128xbf16>
    %cst_39 = arith.constant dense<0.000000e+00> : vector<16x8xf32>
    %110 = tpu.matmul %109, %65, %cst_39 {dimension_numbers = #tpu.dot_dimension_numbers<[1], [1], [0], [0], [0, 0, 1, 0], [], []>} : vector<16x128xbf16>, vector<8x128xbf16>, vector<16x8xf32> -> vector<16x8xf32>
    %cst_40 = arith.constant dense<0xFF800000> : vector<16xf32>
    %111 = vector.multi_reduction <maximumf>, %110, %cst_40 [1] : vector<16x8xf32> to vector<16xf32>
    %112 = vector.shape_cast %111 : vector<16xf32> to vector<16x1xf32>
    %113 = vector.broadcast %112 : vector<16x1xf32> to vector<16x8xf32>
    %114 = arith.subf %110, %113 : vector<16x8xf32>
    %115 = math.exp %114 : vector<16x8xf32>
    %cst_41 = arith.constant dense<0.000000e+00> : vector<16xf32>
    %116 = vector.multi_reduction <add>, %115, %cst_41 [1] : vector<16x8xf32> to vector<16xf32>
    %117 = vector.shape_cast %116 : vector<16xf32> to vector<16x1xf32>
    %118 = tpu.reciprocal %117 {approx = true} : vector<16x1xf32> -> vector<16x1xf32>
    %119 = vector.broadcast %118 : vector<16x1xf32> to vector<16x8xf32>
    %120 = arith.mulf %115, %119 : vector<16x8xf32>
    %121 = vector.broadcast %57 : vector<1x128xf32> to vector<8x128xf32>
    %122 = arith.mulf %35, %121 : vector<8x128xf32>
    %123 = arith.truncf %122 : vector<8x128xf32> to vector<8x128xbf16>
    %124 = arith.truncf %120 : vector<16x8xf32> to vector<16x8xbf16>
    %cst_42 = arith.constant dense<0.000000e+00> : vector<16x128xf32>
    %125 = tpu.matmul %124, %123, %cst_42 {dimension_numbers = #tpu.dot_dimension_numbers<[1], [0], [0], [1], [0, 0, 1, 1], [], []>} : vector<16x8xbf16>, vector<8x128xbf16>, vector<16x128xf32> -> vector<16x128xf32>
    %126 = arith.addf %106, %125 : vector<16x128xf32>
    %127 = vector.broadcast %64 : vector<1x128xf32> to vector<16x128xf32>
    %128 = arith.mulf %30, %127 : vector<16x128xf32>
    %129 = arith.truncf %128 : vector<16x128xf32> to vector<16x128xbf16>
    %cst_43 = arith.constant dense<0.000000e+00> : vector<16x8xf32>
    %130 = tpu.matmul %129, %65, %cst_43 {dimension_numbers = #tpu.dot_dimension_numbers<[1], [1], [0], [0], [0, 0, 1, 0], [], []>} : vector<16x128xbf16>, vector<8x128xbf16>, vector<16x8xf32> -> vector<16x8xf32>
    %cst_44 = arith.constant dense<0xFF800000> : vector<16xf32>
    %131 = vector.multi_reduction <maximumf>, %130, %cst_44 [1] : vector<16x8xf32> to vector<16xf32>
    %132 = vector.shape_cast %131 : vector<16xf32> to vector<16x1xf32>
    %133 = vector.broadcast %132 : vector<16x1xf32> to vector<16x8xf32>
    %134 = arith.subf %130, %133 : vector<16x8xf32>
    %135 = math.exp %134 : vector<16x8xf32>
    %cst_45 = arith.constant dense<0.000000e+00> : vector<16xf32>
    %136 = vector.multi_reduction <add>, %135, %cst_45 [1] : vector<16x8xf32> to vector<16xf32>
    %137 = vector.shape_cast %136 : vector<16xf32> to vector<16x1xf32>
    %138 = tpu.reciprocal %137 {approx = true} : vector<16x1xf32> -> vector<16x1xf32>
    %139 = vector.broadcast %138 : vector<16x1xf32> to vector<16x8xf32>
    %140 = arith.mulf %135, %139 : vector<16x8xf32>
    %141 = vector.broadcast %64 : vector<1x128xf32> to vector<8x128xf32>
    %142 = arith.mulf %35, %141 : vector<8x128xf32>
    %143 = arith.truncf %142 : vector<8x128xf32> to vector<8x128xbf16>
    %144 = arith.truncf %140 : vector<16x8xf32> to vector<16x8xbf16>
    %cst_46 = arith.constant dense<0.000000e+00> : vector<16x128xf32>
    %145 = tpu.matmul %144, %143, %cst_46 {dimension_numbers = #tpu.dot_dimension_numbers<[1], [0], [0], [1], [0, 0, 1, 1], [], []>} : vector<16x8xbf16>, vector<8x128xbf16>, vector<16x128xf32> -> vector<16x128xf32>
    %146 = arith.addf %126, %145 : vector<16x128xf32>
    %cst_47 = arith.constant dense<0.000000e+00> : vector<128xf32>
    %147 = vector.multi_reduction <add>, %146, %cst_47 [0] : vector<16x128xf32> to vector<128xf32>
    %148 = vector.shape_cast %147 : vector<128xf32> to vector<1x128xf32>
    %cst_48 = arith.constant 1.600000e+01 : f32
    %149 = vector.broadcast %cst_48 : f32 to vector<1x128xf32>
    %150 = arith.divf %148, %149 : vector<1x128xf32>
    %151 = arith.truncf %31 : vector<16x128xf32> to vector<16x128xbf16>
    %cst_49 = arith.constant 0.000000e+00 : f32
    %152 = vector.broadcast %cst_49 : f32 to vector<8x128xf32>
    %153 = vector.broadcast %43 : vector<1x128xf32> to vector<8x128xf32>
    %154 = arith.mulf %33, %153 : vector<8x128xf32>
    %155 = arith.truncf %154 : vector<8x128xf32> to vector<8x128xbf16>
    %cst_50 = arith.constant dense<0.000000e+00> : vector<8x16xf32>
    %156 = tpu.matmul %155, %151, %cst_50 {dimension_numbers = #tpu.dot_dimension_numbers<[1], [1], [0], [0], [0, 0, 1, 0], [], []>} : vector<8x128xbf16>, vector<16x128xbf16>, vector<8x16xf32> -> vector<8x16xf32>
    %cst_51 = arith.constant dense<0xFF800000> : vector<8xf32>
    %157 = vector.multi_reduction <maximumf>, %156, %cst_51 [1] : vector<8x16xf32> to vector<8xf32>
    %158 = vector.shape_cast %157 : vector<8xf32> to vector<8x1xf32>
    %159 = vector.broadcast %158 : vector<8x1xf32> to vector<8x16xf32>
    %160 = arith.subf %156, %159 : vector<8x16xf32>
    %161 = math.exp %160 : vector<8x16xf32>
    %cst_52 = arith.constant dense<0.000000e+00> : vector<8xf32>
    %162 = vector.multi_reduction <add>, %161, %cst_52 [1] : vector<8x16xf32> to vector<8xf32>
    %163 = vector.shape_cast %162 : vector<8xf32> to vector<8x1xf32>
    %164 = tpu.reciprocal %163 {approx = true} : vector<8x1xf32> -> vector<8x1xf32>
    %165 = vector.broadcast %164 : vector<8x1xf32> to vector<8x16xf32>
    %166 = arith.mulf %161, %165 : vector<8x16xf32>
    %167 = vector.broadcast %43 : vector<1x128xf32> to vector<16x128xf32>
    %168 = arith.mulf %32, %167 : vector<16x128xf32>
    %169 = arith.truncf %168 : vector<16x128xf32> to vector<16x128xbf16>
    %170 = arith.truncf %166 : vector<8x16xf32> to vector<8x16xbf16>
    %cst_53 = arith.constant dense<0.000000e+00> : vector<8x128xf32>
    %171 = tpu.matmul %170, %169, %cst_53 {dimension_numbers = #tpu.dot_dimension_numbers<[1], [0], [0], [1], [0, 0, 1, 1], [], []>} : vector<8x16xbf16>, vector<16x128xbf16>, vector<8x128xf32> -> vector<8x128xf32>
    %172 = arith.addf %152, %171 : vector<8x128xf32>
    %173 = vector.broadcast %50 : vector<1x128xf32> to vector<8x128xf32>
    %174 = arith.mulf %33, %173 : vector<8x128xf32>
    %175 = arith.truncf %174 : vector<8x128xf32> to vector<8x128xbf16>
    %cst_54 = arith.constant dense<0.000000e+00> : vector<8x16xf32>
    %176 = tpu.matmul %175, %151, %cst_54 {dimension_numbers = #tpu.dot_dimension_numbers<[1], [1], [0], [0], [0, 0, 1, 0], [], []>} : vector<8x128xbf16>, vector<16x128xbf16>, vector<8x16xf32> -> vector<8x16xf32>
    %cst_55 = arith.constant dense<0xFF800000> : vector<8xf32>
    %177 = vector.multi_reduction <maximumf>, %176, %cst_55 [1] : vector<8x16xf32> to vector<8xf32>
    %178 = vector.shape_cast %177 : vector<8xf32> to vector<8x1xf32>
    %179 = vector.broadcast %178 : vector<8x1xf32> to vector<8x16xf32>
    %180 = arith.subf %176, %179 : vector<8x16xf32>
    %181 = math.exp %180 : vector<8x16xf32>
    %cst_56 = arith.constant dense<0.000000e+00> : vector<8xf32>
    %182 = vector.multi_reduction <add>, %181, %cst_56 [1] : vector<8x16xf32> to vector<8xf32>
    %183 = vector.shape_cast %182 : vector<8xf32> to vector<8x1xf32>
    %184 = tpu.reciprocal %183 {approx = true} : vector<8x1xf32> -> vector<8x1xf32>
    %185 = vector.broadcast %184 : vector<8x1xf32> to vector<8x16xf32>
    %186 = arith.mulf %181, %185 : vector<8x16xf32>
    %187 = vector.broadcast %50 : vector<1x128xf32> to vector<16x128xf32>
    %188 = arith.mulf %32, %187 : vector<16x128xf32>
    %189 = arith.truncf %188 : vector<16x128xf32> to vector<16x128xbf16>
    %190 = arith.truncf %186 : vector<8x16xf32> to vector<8x16xbf16>
    %cst_57 = arith.constant dense<0.000000e+00> : vector<8x128xf32>
    %191 = tpu.matmul %190, %189, %cst_57 {dimension_numbers = #tpu.dot_dimension_numbers<[1], [0], [0], [1], [0, 0, 1, 1], [], []>} : vector<8x16xbf16>, vector<16x128xbf16>, vector<8x128xf32> -> vector<8x128xf32>
    %192 = arith.addf %172, %191 : vector<8x128xf32>
    %193 = vector.broadcast %57 : vector<1x128xf32> to vector<8x128xf32>
    %194 = arith.mulf %33, %193 : vector<8x128xf32>
    %195 = arith.truncf %194 : vector<8x128xf32> to vector<8x128xbf16>
    %cst_58 = arith.constant dense<0.000000e+00> : vector<8x16xf32>
    %196 = tpu.matmul %195, %151, %cst_58 {dimension_numbers = #tpu.dot_dimension_numbers<[1], [1], [0], [0], [0, 0, 1, 0], [], []>} : vector<8x128xbf16>, vector<16x128xbf16>, vector<8x16xf32> -> vector<8x16xf32>
    %cst_59 = arith.constant dense<0xFF800000> : vector<8xf32>
    %197 = vector.multi_reduction <maximumf>, %196, %cst_59 [1] : vector<8x16xf32> to vector<8xf32>
    %198 = vector.shape_cast %197 : vector<8xf32> to vector<8x1xf32>
    %199 = vector.broadcast %198 : vector<8x1xf32> to vector<8x16xf32>
    %200 = arith.subf %196, %199 : vector<8x16xf32>
    %201 = math.exp %200 : vector<8x16xf32>
    %cst_60 = arith.constant dense<0.000000e+00> : vector<8xf32>
    %202 = vector.multi_reduction <add>, %201, %cst_60 [1] : vector<8x16xf32> to vector<8xf32>
    %203 = vector.shape_cast %202 : vector<8xf32> to vector<8x1xf32>
    %204 = tpu.reciprocal %203 {approx = true} : vector<8x1xf32> -> vector<8x1xf32>
    %205 = vector.broadcast %204 : vector<8x1xf32> to vector<8x16xf32>
    %206 = arith.mulf %201, %205 : vector<8x16xf32>
    %207 = vector.broadcast %57 : vector<1x128xf32> to vector<16x128xf32>
    %208 = arith.mulf %32, %207 : vector<16x128xf32>
    %209 = arith.truncf %208 : vector<16x128xf32> to vector<16x128xbf16>
    %210 = arith.truncf %206 : vector<8x16xf32> to vector<8x16xbf16>
    %cst_61 = arith.constant dense<0.000000e+00> : vector<8x128xf32>
    %211 = tpu.matmul %210, %209, %cst_61 {dimension_numbers = #tpu.dot_dimension_numbers<[1], [0], [0], [1], [0, 0, 1, 1], [], []>} : vector<8x16xbf16>, vector<16x128xbf16>, vector<8x128xf32> -> vector<8x128xf32>
    %212 = arith.addf %192, %211 : vector<8x128xf32>
    %213 = vector.broadcast %64 : vector<1x128xf32> to vector<8x128xf32>
    %214 = arith.mulf %33, %213 : vector<8x128xf32>
    %215 = arith.truncf %214 : vector<8x128xf32> to vector<8x128xbf16>
    %cst_62 = arith.constant dense<0.000000e+00> : vector<8x16xf32>
    %216 = tpu.matmul %215, %151, %cst_62 {dimension_numbers = #tpu.dot_dimension_numbers<[1], [1], [0], [0], [0, 0, 1, 0], [], []>} : vector<8x128xbf16>, vector<16x128xbf16>, vector<8x16xf32> -> vector<8x16xf32>
    %cst_63 = arith.constant dense<0xFF800000> : vector<8xf32>
    %217 = vector.multi_reduction <maximumf>, %216, %cst_63 [1] : vector<8x16xf32> to vector<8xf32>
    %218 = vector.shape_cast %217 : vector<8xf32> to vector<8x1xf32>
    %219 = vector.broadcast %218 : vector<8x1xf32> to vector<8x16xf32>
    %220 = arith.subf %216, %219 : vector<8x16xf32>
    %221 = math.exp %220 : vector<8x16xf32>
    %cst_64 = arith.constant dense<0.000000e+00> : vector<8xf32>
    %222 = vector.multi_reduction <add>, %221, %cst_64 [1] : vector<8x16xf32> to vector<8xf32>
    %223 = vector.shape_cast %222 : vector<8xf32> to vector<8x1xf32>
    %224 = tpu.reciprocal %223 {approx = true} : vector<8x1xf32> -> vector<8x1xf32>
    %225 = vector.broadcast %224 : vector<8x1xf32> to vector<8x16xf32>
    %226 = arith.mulf %221, %225 : vector<8x16xf32>
    %227 = vector.broadcast %64 : vector<1x128xf32> to vector<16x128xf32>
    %228 = arith.mulf %32, %227 : vector<16x128xf32>
    %229 = arith.truncf %228 : vector<16x128xf32> to vector<16x128xbf16>
    %230 = arith.truncf %226 : vector<8x16xf32> to vector<8x16xbf16>
    %cst_65 = arith.constant dense<0.000000e+00> : vector<8x128xf32>
    %231 = tpu.matmul %230, %229, %cst_65 {dimension_numbers = #tpu.dot_dimension_numbers<[1], [0], [0], [1], [0, 0, 1, 1], [], []>} : vector<8x16xbf16>, vector<16x128xbf16>, vector<8x128xf32> -> vector<8x128xf32>
    %232 = arith.addf %212, %231 : vector<8x128xf32>
    %cst_66 = arith.constant dense<0.000000e+00> : vector<128xf32>
    %233 = vector.multi_reduction <add>, %232, %cst_66 [0] : vector<8x128xf32> to vector<128xf32>
    %234 = vector.shape_cast %233 : vector<128xf32> to vector<1x128xf32>
    %cst_67 = arith.constant 8.000000e+00 : f32
    %235 = vector.broadcast %cst_67 : f32 to vector<1x128xf32>
    %236 = arith.divf %234, %235 : vector<1x128xf32>
    %237 = arith.truncf %150 : vector<1x128xf32> to vector<1x128xbf16>
    %c0_68 = arith.constant 0 : index
    %c0_69 = arith.constant 0 : index
    %c0_70 = arith.constant 0 : index
    %238 = vector.load %arg9[%c0_68, %c0_69, %c0_70] : memref<2x128x128xbf16, #tpu.memory_space<vmem>>, vector<1x128x128xbf16>
    %239 = vector.shape_cast %238 : vector<1x128x128xbf16> to vector<128x128xbf16>
    %cst_71 = arith.constant dense<0.000000e+00> : vector<1x128xf32>
    %240 = tpu.matmul %237, %239, %cst_71 {dimension_numbers = #tpu.dot_dimension_numbers<[1], [0], [0], [1], [0, 0, 1, 1], [], []>} : vector<1x128xbf16>, vector<128x128xbf16>, vector<1x128xf32> -> vector<1x128xf32>
    %c0_72 = arith.constant 0 : index
    %c0_73 = arith.constant 0 : index
    %c0_74 = arith.constant 0 : index
    %241 = vector.load %arg10[%c0_72, %c0_73, %c0_74] : memref<2x1x128xf32, #tpu.memory_space<vmem>>, vector<1x1x128xf32>
    %242 = vector.shape_cast %241 : vector<1x1x128xf32> to vector<1x128xf32>
    %243 = arith.addf %240, %242 : vector<1x128xf32>
    %244 = arith.truncf %236 : vector<1x128xf32> to vector<1x128xbf16>
    %c1_75 = arith.constant 1 : index
    %c0_76 = arith.constant 0 : index
    %c0_77 = arith.constant 0 : index
    %245 = vector.load %arg9[%c1_75, %c0_76, %c0_77] : memref<2x128x128xbf16, #tpu.memory_space<vmem>>, vector<1x128x128xbf16>
    %246 = vector.shape_cast %245 : vector<1x128x128xbf16> to vector<128x128xbf16>
    %cst_78 = arith.constant dense<0.000000e+00> : vector<1x128xf32>
    %247 = tpu.matmul %244, %246, %cst_78 {dimension_numbers = #tpu.dot_dimension_numbers<[1], [0], [0], [1], [0, 0, 1, 1], [], []>} : vector<1x128xbf16>, vector<128x128xbf16>, vector<1x128xf32> -> vector<1x128xf32>
    %c1_79 = arith.constant 1 : index
    %c0_80 = arith.constant 0 : index
    %c0_81 = arith.constant 0 : index
    %248 = vector.load %arg10[%c1_79, %c0_80, %c0_81] : memref<2x1x128xf32, #tpu.memory_space<vmem>>, vector<1x1x128xf32>
    %249 = vector.shape_cast %248 : vector<1x1x128xf32> to vector<1x128xf32>
    %250 = arith.addf %247, %249 : vector<1x128xf32>
    %251 = arith.addf %243, %250 : vector<1x128xf32>
    %cst_82 = arith.constant 5.000000e-01 : f32
    %252 = vector.broadcast %cst_82 : f32 to vector<1x128xf32>
    %253 = arith.mulf %252, %251 : vector<1x128xf32>
    %c0_83 = arith.constant 0 : index
    %c0_84 = arith.constant 0 : index
    %c0_85 = arith.constant 0 : index
    %254 = vector.load %arg11[%c0_83, %c0_84, %c0_85] : memref<1x1x128xf32, #tpu.memory_space<vmem>>, vector<1x1x128xf32>
    %255 = vector.shape_cast %254 : vector<1x1x128xf32> to vector<1x128xf32>
    %256 = vector.shape_cast %253 : vector<1x128xf32> to vector<1x1x128xf32>
    tpu.vector_store %arg11[%c0_83, %c0_84, %c0_85], %256 {strides = array<i32>} : memref<1x1x128xf32, #tpu.memory_space<vmem>>, vector<1x1x128xf32>,
    return
  }
  func.func @transform_0(%arg0: i32) -> (i32, i32, i32) {
    %c0_i32 = arith.constant 0 : i32
    %c0_i32_0 = arith.constant 0 : i32
    %c0_i32_1 = arith.constant 0 : i32
    return %arg0, %c0_i32, %c0_i32_0 : i32, i32, i32
  }
  func.func @transform_1(%arg0: i32) -> (i32, i32, i32) {
    %c0_i32 = arith.constant 0 : i32
    %c0_i32_0 = arith.constant 0 : i32
    %c0_i32_1 = arith.constant 0 : i32
    return %arg0, %c0_i32, %c0_i32_0 : i32, i32, i32
  }
  func.func @transform_2(%arg0: i32) -> (i32, i32) {
    %c0_i32 = arith.constant 0 : i32
    %c0_i32_0 = arith.constant 0 : i32
    %c0_i32_1 = arith.constant 0 : i32
    return %c0_i32, %c0_i32_0 : i32, i32
  }
  func.func @transform_3(%arg0: i32) -> (i32, i32) {
    %c0_i32 = arith.constant 0 : i32
    %c0_i32_0 = arith.constant 0 : i32
    %c0_i32_1 = arith.constant 0 : i32
    return %c0_i32, %c0_i32_0 : i32, i32
  }
  func.func @transform_4(%arg0: i32) -> (i32, i32) {
    %c0_i32 = arith.constant 0 : i32
    %c0_i32_0 = arith.constant 0 : i32
    %c0_i32_1 = arith.constant 0 : i32
    return %c0_i32, %c0_i32_0 : i32, i32
  }
  func.func @transform_5(%arg0: i32) -> (i32, i32) {
    %c0_i32 = arith.constant 0 : i32
    %c0_i32_0 = arith.constant 0 : i32
    %c0_i32_1 = arith.constant 0 : i32
    return %c0_i32, %c0_i32_0 : i32, i32
  }
  func.func @transform_6(%arg0: i32) -> (i32, i32, i32) {
    %c0_i32 = arith.constant 0 : i32
    %c0_i32_0 = arith.constant 0 : i32
    %c0_i32_1 = arith.constant 0 : i32
    %c0_i32_2 = arith.constant 0 : i32
    return %c0_i32, %c0_i32_0, %c0_i32_1 : i32, i32, i32
  }
  func.func @transform_7(%arg0: i32) -> (i32, i32, i32) {
    %c0_i32 = arith.constant 0 : i32
    %c0_i32_0 = arith.constant 0 : i32
    %c0_i32_1 = arith.constant 0 : i32
    %c0_i32_2 = arith.constant 0 : i32
    return %c0_i32, %c0_i32_0, %c0_i32_1 : i32, i32, i32
  }
  func.func @transform_8(%arg0: i32) -> (i32, i32, i32) {
    %c0_i32 = arith.constant 0 : i32
    %c0_i32_0 = arith.constant 0 : i32
    %c0_i32_1 = arith.constant 0 : i32
    %c0_i32_2 = arith.constant 0 : i32
    return %c0_i32, %c0_i32_0, %c0_i32_1 : i32, i32, i32
  }
  func.func @transform_9(%arg0: i32) -> (i32, i32, i32) {
    %c0_i32 = arith.constant 0 : i32
    %c0_i32_0 = arith.constant 0 : i32
    %c0_i32_1 = arith.constant 0 : i32
    %c0_i32_2 = arith.constant 0 : i32
    return %c0_i32, %c0_i32_0, %c0_i32_1 : i32, i32, i32
  }
  func.func @transform_10(%arg0: i32) -> (i32, i32, i32) {
    %c0_i32 = arith.constant 0 : i32
    %c0_i32_0 = arith.constant 0 : i32
    %c0_i32_1 = arith.constant 0 : i32
    return %arg0, %c0_i32, %c0_i32_0 : i32, i32, i32
  }
}

</mosaic_0001>

<llo_original>
// kernel: img_text_matching_forward.1
$region0: #{img_text_matching_forward.1}
  #allocation0 [shape = 'u32[]', space=smem, size = 0x4, offset = 0x4, fixed_abs, tag = 'smem constant byte address 0x4 - core index']
  #allocation1 [shape = 'u32[144,128]{1,0:T(1,128)}', space=vmem, size = 0x12000, scoped, tag = 'internal scratch']
  %s0 = inlined_call_operand.vmem [shape: bf16[2,8,768], index: 0, kind: input, shape index: {}]
  %s1 = inlined_call_operand.vmem [shape: bf16[2,2048,16], index: 1, kind: input, shape index: {}]
  %s2 = inlined_call_operand.vmem [shape: bf16[768,128], index: 2, kind: input, shape index: {}]
  %s3 = inlined_call_operand.vmem [shape: f32[1,128], index: 3, kind: input, shape index: {}]
  %s4 = inlined_call_operand.vmem [shape: bf16[2048,128], index: 4, kind: input, shape index: {}]
  %s5 = inlined_call_operand.vmem [shape: f32[1,128], index: 5, kind: input, shape index: {}]
  %s6 = inlined_call_operand.vmem [shape: bf16[2,128,384], index: 6, kind: input, shape index: {}]
  %s7 = inlined_call_operand.vmem [shape: f32[2,1,384], index: 7, kind: input, shape index: {}]
  %s8 = inlined_call_operand.vmem [shape: bf16[2,128,128], index: 8, kind: input, shape index: {}]
  %s9 = inlined_call_operand.vmem [shape: f32[2,1,128], index: 9, kind: input, shape index: {}]
  %s10 = inlined_call_operand.vmem [shape: f32[2,1,128], index: 10, kind: output, shape index: {}]
  %s11 = sld [smem:[#allocation0]]
  $region73: #{img_text_matching_forward.1} parent=0
    _
  %s13 = ssub.s32 1, %s11
  %s14 = scalar_select 0, %s13, %s11
  loop: start=0, step=1, limit=4
  $region2: #{img_text_matching_forward.1} parent=0 // loop_pre_header
    _
  $region3: #{img_text_matching_forward.1} parent=0 // loop_header
    %s16 = sphi 0, %s20
    %p17 = scmp.ge.s32.totalorder %s16, 4
    %s26 = sphi 0, %s28
    %s29 = sphi 0, %s26
    %s30 = sphi 0, %s29
    %s46 = sphi 0, %s30
    %s52 = sphi 0, %s54
    %s55 = sphi 0, %s52
    %s56 = sphi 0, %s55
    %s72 = sphi 0, %s56
    %s76 = sphi 0, %s76
    %s78 = sphi 0, %s76
    %s79 = sphi 0, %s78
    %s93 = sphi 0, %s79
    %s97 = sphi 0, %s97
    %s99 = sphi 0, %s97
    %s100 = sphi 0, %s99
    %s114 = sphi 0, %s100
    %s118 = sphi 0, %s118
    %s120 = sphi 0, %s118
    %s121 = sphi 0, %s120
    %s135 = sphi 0, %s121
    %s139 = sphi 0, %s139
    %s141 = sphi 0, %s139
    %s142 = sphi 0, %s141
    %s156 = sphi 0, %s142
    %s160 = sphi 0, %s160
    %s162 = sphi 0, %s160
    %s163 = sphi 0, %s162
    %s177 = sphi 0, %s163
    %s181 = sphi 0, %s181
    %s183 = sphi 0, %s181
    %s184 = sphi 0, %s183
    %s198 = sphi 0, %s184
    %s202 = sphi 0, %s202
    %s204 = sphi 0, %s202
    %s205 = sphi 0, %s204
    %s219 = sphi 0, %s205
    %s223 = sphi 0, %s223
    %s225 = sphi 0, %s223
    %s226 = sphi 0, %s225
    %s240 = sphi 0, %s226
    %s246 = sphi 0, %s248
    %s249 = sphi 0, %s246
    %s250 = sphi 0, %s249
    %s266 = sphi 0, %s250
  $region4: #{img_text_matching_forward.1} parent=0 // loop_header_branch
    %19 = sbr.rel (%p17) target = $region8
  $region5: #{img_text_matching_forward.1} parent=0 // loop_body
    %s21 = ssub.s32 %s16, 1
    %s22 = ssub.s32 %s16, 2
    %s23 = sadd.s32 %s16, 1
    %s24 = ssub.s32 %s16, %s23
    %p25 = scmp.eq.s32.totalorder %s24, 0
    %s27 = sadd.s32 %s26, 1
    %s28 = scalar_select %p25, %s26, %s27
    %p31 = pneg %p25
    %p32 = scmp.eq.s32.totalorder %s16, 1
    %p33 = por %p31, %p32
    %p34 = scmp.ne.s32.totalorder %s26, %s29
    %p35 = scmp.eq.s32.totalorder %s16, 0
    %p36 = por %p34, %p35
    %p37 = scmp.ne.s32.totalorder %s26, %s29
    %p38 = scmp.eq.s32.totalorder %s21, 1
    %p39 = por %p37, %p38
    %p40 = scmp.ne.s32.totalorder %s29, %s30
    %p41 = scmp.eq.s32.totalorder %s21, 0
    %p42 = por %p40, %p41
    %p43 = scmp.ne.s32.totalorder %s29, %s30
    %p44 = scmp.eq.s32.totalorder %s22, 1
    %p45 = por %p43, %p44
    %p47 = scmp.ne.s32.totalorder %s30, %s46
    %p48 = scmp.eq.s32.totalorder %s22, 0
    %p49 = por %p47, %p48
    %s50 = ssub.s32 %s16, %s23
    %p51 = scmp.eq.s32.totalorder %s50, 0
    %s53 = sadd.s32 %s52, 1
    %s54 = scalar_select %p51, %s52, %s53
    %p57 = pneg %p51
    %p58 = scmp.eq.s32.totalorder %s16, 1
    %p59 = por %p57, %p58
    %p60 = scmp.ne.s32.totalorder %s52, %s55
    %p61 = scmp.eq.s32.totalorder %s16, 0
    %p62 = por %p60, %p61
    %p63 = scmp.ne.s32.totalorder %s52, %s55
    %p64 = scmp.eq.s32.totalorder %s21, 1
    %p65 = por %p63, %p64
    %p66 = scmp.ne.s32.totalorder %s55, %s56
    %p67 = scmp.eq.s32.totalorder %s21, 0
    %p68 = por %p66, %p67
    %p69 = scmp.ne.s32.totalorder %s55, %s56
    %p70 = scmp.eq.s32.totalorder %s22, 1
    %p71 = por %p69, %p70
    %p73 = scmp.ne.s32.totalorder %s56, %s72
    %p74 = scmp.eq.s32.totalorder %s22, 0
    %p75 = por %p73, %p74
    %s77 = sadd.s32 %s76, 1
    %p80 = scmp.eq.s32.totalorder %s16, 1
    %p81 = scmp.ne.s32.totalorder %s76, %s78
    %p82 = scmp.eq.s32.totalorder %s16, 0
    %p83 = por %p81, %p82
    %p84 = scmp.ne.s32.totalorder %s76, %s78
    %p85 = scmp.eq.s32.totalorder %s21, 1
    %p86 = por %p84, %p85
    %p87 = scmp.ne.s32.totalorder %s78, %s79
    %p88 = scmp.eq.s32.totalorder %s21, 0
    %p89 = por %p87, %p88
    %p90 = scmp.ne.s32.totalorder %s78, %s79
    %p91 = scmp.eq.s32.totalorder %s22, 1
    %p92 = por %p90, %p91
    %p94 = scmp.ne.s32.totalorder %s79, %s93
    %p95 = scmp.eq.s32.totalorder %s22, 0
    %p96 = por %p94, %p95
    %s98 = sadd.s32 %s97, 1
    %p101 = scmp.eq.s32.totalorder %s16, 1
    %p102 = scmp.ne.s32.totalorder %s97, %s99
    %p103 = scmp.eq.s32.totalorder %s16, 0
    %p104 = por %p102, %p103
    %p105 = scmp.ne.s32.totalorder %s97, %s99
    %p106 = scmp.eq.s32.totalorder %s21, 1
    %p107 = por %p105, %p106
    %p108 = scmp.ne.s32.totalorder %s99, %s100
    %p109 = scmp.eq.s32.totalorder %s21, 0
    %p110 = por %p108, %p109
    %p111 = scmp.ne.s32.totalorder %s99, %s100
    %p112 = scmp.eq.s32.totalorder %s22, 1
    %p113 = por %p111, %p112
    %p115 = scmp.ne.s32.totalorder %s100, %s114
    %p116 = scmp.eq.s32.totalorder %s22, 0
    %p117 = por %p115, %p116
    %s119 = sadd.s32 %s118, 1
    %p122 = scmp.eq.s32.totalorder %s16, 1
    %p123 = scmp.ne.s32.totalorder %s118, %s120
    %p124 = scmp.eq.s32.totalorder %s16, 0
    %p125 = por %p123, %p124
    %p126 = scmp.ne.s32.totalorder %s118, %s120
    %p127 = scmp.eq.s32.totalorder %s21, 1
    %p128 = por %p126, %p127
    %p129 = scmp.ne.s32.totalorder %s120, %s121
    %p130 = scmp.eq.s32.totalorder %s21, 0
    %p131 = por %p129, %p130
    %p132 = scmp.ne.s32.totalorder %s120, %s121
    %p133 = scmp.eq.s32.totalorder %s22, 1
    %p134 = por %p132, %p133
    %p136 = scmp.ne.s32.totalorder %s121, %s135
    %p137 = scmp.eq.s32.totalorder %s22, 0
    %p138 = por %p136, %p137
    %s140 = sadd.s32 %s139, 1
    %p143 = scmp.eq.s32.totalorder %s16, 1
    %p144 = scmp.ne.s32.totalorder %s139, %s141
    %p145 = scmp.eq.s32.totalorder %s16, 0
    %p146 = por %p144, %p145
    %p147 = scmp.ne.s32.totalorder %s139, %s141
    %p148 = scmp.eq.s32.totalorder %s21, 1
    %p149 = por %p147, %p148
    %p150 = scmp.ne.s32.totalorder %s141, %s142
    %p151 = scmp.eq.s32.totalorder %s21, 0
    %p152 = por %p150, %p151
    %p153 = scmp.ne.s32.totalorder %s141, %s142
    %p154 = scmp.eq.s32.totalorder %s22, 1
    %p155 = por %p153, %p154
    %p157 = scmp.ne.s32.totalorder %s142, %s156
    %p158 = scmp.eq.s32.totalorder %s22, 0
    %p159 = por %p157, %p158
    %s161 = sadd.s32 %s160, 1
    %p164 = scmp.eq.s32.totalorder %s16, 1
    %p165 = scmp.ne.s32.totalorder %s160, %s162
    %p166 = scmp.eq.s32.totalorder %s16, 0
    %p167 = por %p165, %p166
    %p168 = scmp.ne.s32.totalorder %s160, %s162
    %p169 = scmp.eq.s32.totalorder %s21, 1
    %p170 = por %p168, %p169
    %p171 = scmp.ne.s32.totalorder %s162, %s163
    %p172 = scmp.eq.s32.totalorder %s21, 0
    %p173 = por %p171, %p172
    %p174 = scmp.ne.s32.totalorder %s162, %s163
    %p175 = scmp.eq.s32.totalorder %s22, 1
    %p176 = por %p174, %p175
    %p178 = scmp.ne.s32.totalorder %s163, %s177
    %p179 = scmp.eq.s32.totalorder %s22, 0
    %p180 = por %p178, %p179
    %s182 = sadd.s32 %s181, 1
    %p185 = scmp.eq.s32.totalorder %s16, 1
    %p186 = scmp.ne.s32.totalorder %s181, %s183
    %p187 = scmp.eq.s32.totalorder %s16, 0
    %p188 = por %p186, %p187
    %p189 = scmp.ne.s32.totalorder %s181, %s183
    %p190 = scmp.eq.s32.totalorder %s21, 1
    %p191 = por %p189, %p190
    %p192 = scmp.ne.s32.totalorder %s183, %s184
    %p193 = scmp.eq.s32.totalorder %s21, 0
    %p194 = por %p192, %p193
    %p195 = scmp.ne.s32.totalorder %s183, %s184
    %p196 = scmp.eq.s32.totalorder %s22, 1
    %p197 = por %p195, %p196
    %p199 = scmp.ne.s32.totalorder %s184, %s198
    %p200 = scmp.eq.s32.totalorder %s22, 0
    %p201 = por %p199, %p200
    %s203 = sadd.s32 %s202, 1
    %p206 = scmp.eq.s32.totalorder %s16, 1
    %p207 = scmp.ne.s32.totalorder %s202, %s204
    %p208 = scmp.eq.s32.totalorder %s16, 0
    %p209 = por %p207, %p208
    %p210 = scmp.ne.s32.totalorder %s202, %s204
    %p211 = scmp.eq.s32.totalorder %s21, 1
    %p212 = por %p210, %p211
    %p213 = scmp.ne.s32.totalorder %s204, %s205
    %p214 = scmp.eq.s32.totalorder %s21, 0
    %p215 = por %p213, %p214
    %p216 = scmp.ne.s32.totalorder %s204, %s205
    %p217 = scmp.eq.s32.totalorder %s22, 1
    %p218 = por %p216, %p217
    %p220 = scmp.ne.s32.totalorder %s205, %s219
    %p221 = scmp.eq.s32.totalorder %s22, 0
    %p222 = por %p220, %p221
    %s224 = sadd.s32 %s223, 1
    %p227 = scmp.eq.s32.totalorder %s16, 1
    %p228 = scmp.ne.s32.totalorder %s223, %s225
    %p229 = scmp.eq.s32.totalorder %s16, 0
    %p230 = por %p228, %p229
    %p231 = scmp.ne.s32.totalorder %s223, %s225
    %p232 = scmp.eq.s32.totalorder %s21, 1
    %p233 = por %p231, %p232
    %p234 = scmp.ne.s32.totalorder %s225, %s226
    %p235 = scmp.eq.s32.totalorder %s21, 0
    %p236 = por %p234, %p235
    %p237 = scmp.ne.s32.totalorder %s225, %s226
    %p238 = scmp.eq.s32.totalorder %s22, 1
    %p239 = por %p237, %p238
    %p241 = scmp.ne.s32.totalorder %s226, %s240
    %p242 = scmp.eq.s32.totalorder %s22, 0
    %p243 = por %p241, %p242
    %s244 = ssub.s32 %s16, %s23
    %p245 = scmp.eq.s32.totalorder %s244, 0
    %s247 = sadd.s32 %s246, 1
    %s248 = scalar_select %p245, %s246, %s247
    %p251 = pneg %p245
    %p252 = scmp.eq.s32.totalorder %s16, 1
    %p253 = por %p251, %p252
    %p254 = scmp.ne.s32.totalorder %s246, %s249
    %p255 = scmp.eq.s32.totalorder %s16, 0
    %p256 = por %p254, %p255
    %p257 = scmp.ne.s32.totalorder %s246, %s249
    %p258 = scmp.eq.s32.totalorder %s21, 1
    %p259 = por %p257, %p258
    %p260 = scmp.ne.s32.totalorder %s249, %s250
    %p261 = scmp.eq.s32.totalorder %s21, 0
    %p262 = por %p260, %p261
    %p263 = scmp.ne.s32.totalorder %s249, %s250
    %p264 = scmp.eq.s32.totalorder %s22, 1
    %p265 = por %p263, %p264
    %p267 = scmp.ne.s32.totalorder %s250, %s266
    %p268 = scmp.eq.s32.totalorder %s22, 0
    %p269 = por %p267, %p268
    %p270 = scmp.le.s32.totalorder 1, %s16
    %p271 = scmp.lt.s32.totalorder %s16, 3
    %p272 = pnand %p270, %p271
    %p273 = pneg %p272
    // Predicated region
    $region9: #{img_text_matching_forward.1} parent=5 // pred_check
      _
    $region10: #{img_text_matching_forward.1} parent=5 // pred_check_branch
      %275 = sbr.rel (%p272) target = $region12
    $region11: #{img_text_matching_forward.1} parent=5 // pred_region
      %s276 = ssub.s32 %s16, 1
      // Predicated region
      $region13: #{img_text_matching_forward.1} parent=11 // pred_check
        %p277 = pneg %p89
      $region14: #{img_text_matching_forward.1} parent=11 // pred_check_branch
        %279 = sbr.rel (%p277) target = $region16
      $region15: #{img_text_matching_forward.1} parent=11 // pred_region
        _
      $region16: #{img_text_matching_forward.1} parent=11 // pred_fallthru
        _
      // Predicated region
      $region17: #{img_text_matching_forward.1} parent=11 // pred_check
        %p280 = pneg %p110
      $region18: #{img_text_matching_forward.1} parent=11 // pred_check_branch
        %282 = sbr.rel (%p280) target = $region20
      $region19: #{img_text_matching_forward.1} parent=11 // pred_region
        _
      $region20: #{img_text_matching_forward.1} parent=11 // pred_fallthru
        _
      // Predicated region
      $region21: #{img_text_matching_forward.1} parent=11 // pred_check
        %p283 = pneg %p131
      $region22: #{img_text_matching_forward.1} parent=11 // pred_check_branch
        %285 = sbr.rel (%p283) target = $region24
      $region23: #{img_text_matching_forward.1} parent=11 // pred_region
        _
      $region24: #{img_text_matching_forward.1} parent=11 // pred_fallthru
        _
      // Predicated region
      $region25: #{img_text_matching_forward.1} parent=11 // pred_check
        %p286 = pneg %p152
      $region26: #{img_text_matching_forward.1} parent=11 // pred_check_branch
        %288 = sbr.rel (%p286) target = $region28
      $region27: #{img_text_matching_forward.1} parent=11 // pred_region
        _
      $region28: #{img_text_matching_forward.1} parent=11 // pred_fallthru
        _
      // Predicated region
      $region29: #{img_text_matching_forward.1} parent=11 // pred_check
        %p289 = pneg %p173
      $region30: #{img_text_matching_forward.1} parent=11 // pred_check_branch
        %291 = sbr.rel (%p289) target = $region32
      $region31: #{img_text_matching_forward.1} parent=11 // pred_region
        _
      $region32: #{img_text_matching_forward.1} parent=11 // pred_fallthru
        _
      // Predicated region
      $region33: #{img_text_matching_forward.1} parent=11 // pred_check
        %p292 = pneg %p194
      $region34: #{img_text_matching_forward.1} parent=11 // pred_check_branch
        %294 = sbr.rel (%p292) target = $region36
      $region35: #{img_text_matching_forward.1} parent=11 // pred_region
        _
      $region36: #{img_text_matching_forward.1} parent=11 // pred_fallthru
        _
      // Predicated region
      $region37: #{img_text_matching_forward.1} parent=11 // pred_check
        %p295 = pneg %p215
      $region38: #{img_text_matching_forward.1} parent=11 // pred_check_branch
        %297 = sbr.rel (%p295) target = $region40
      $region39: #{img_text_matching_forward.1} parent=11 // pred_region
        _
      $region40: #{img_text_matching_forward.1} parent=11 // pred_fallthru
        _
      // Predicated region
      $region41: #{img_text_matching_forward.1} parent=11 // pred_check
        %p298 = pneg %p236
      $region42: #{img_text_matching_forward.1} parent=11 // pred_check_branch
        %300 = sbr.rel (%p298) target = $region44
      $region43: #{img_text_matching_forward.1} parent=11 // pred_region
        _
      $region44: #{img_text_matching_forward.1} parent=11 // pred_fallthru
        _
    $region12: #{img_text_matching_forward.1} parent=5 // pred_fallthru
      _
    %p301 = scmp.lt.s32.totalorder %s16, 2
    // Predicated region
    $region45: #{img_text_matching_forward.1} parent=5 // pred_check
      %p302 = pneg %p301
    $region46: #{img_text_matching_forward.1} parent=5 // pred_check_branch
      %304 = sbr.rel (%p302) target = $region48
    $region47: #{img_text_matching_forward.1} parent=5 // pred_region
      // Predicated region
      $region49: #{img_text_matching_forward.1} parent=47 // pred_check
        %p305 = pneg %p36
      $region50: #{img_text_matching_forward.1} parent=47 // pred_check_branch
        %307 = sbr.rel (%p305) target = $region52
      $region51: #{img_text_matching_forward.1} parent=47 // pred_region
        %p308 = scmp.lt.s32.totalorder %s16, 1
        %s309 = scalar_select %p308, %s16, 1
        %s310 = smul.addr %s309, 6
        %s311 = smul.addr %s310, 4
        %s312 = scalar_lea.vmem %s0, %s311
      $region52: #{img_text_matching_forward.1} parent=47 // pred_fallthru
        _
      // Predicated region
      $region53: #{img_text_matching_forward.1} parent=47 // pred_check
        %p313 = pneg %p62
      $region54: #{img_text_matching_forward.1} parent=47 // pred_check_branch
        %315 = sbr.rel (%p313) target = $region56
      $region55: #{img_text_matching_forward.1} parent=47 // pred_region
        %p316 = scmp.lt.s32.totalorder %s16, 1
        %s317 = scalar_select %p316, %s16, 1
        %s318 = smul.addr %s317, 256
        %s319 = smul.addr %s318, 4
        %s320 = scalar_lea.vmem %s1, %s319
      $region56: #{img_text_matching_forward.1} parent=47 // pred_fallthru
        _
    $region48: #{img_text_matching_forward.1} parent=5 // pred_fallthru
      _
    %p321 = scmp.le.s32.totalorder 1, %s16
    %p322 = scmp.lt.s32.totalorder %s16, 3
    %p323 = pnand %p321, %p322
    %p324 = pneg %p323
    // Predicated region
    $region57: #{img_text_matching_forward.1} parent=5 // pred_check
      _
    $region58: #{img_text_matching_forward.1} parent=5 // pred_check_branch
      %326 = sbr.rel (%p323) target = $region60
    $region59: #{img_text_matching_forward.1} parent=5 // pred_region
      %s327 = ssub.s32 %s16, 1
      %p328 = scmp.lt.s32.totalorder %s21, 1
      %s329 = scalar_select %p328, %s21, 1
      %s330 = smul.addr %s329, 6
      %s331 = smul.addr %s330, 4
      %s332 = scalar_lea.vmem %s0, %s331
      %p333 = pneg %p42
      %p334 = pneg %p39
      %p335 = scmp.lt.s32.totalorder %s21, 1
      %s336 = scalar_select %p335, %s21, 1
      %s337 = smul.addr %s336, 256
      %s338 = smul.addr %s337, 4
      %s339 = scalar_lea.vmem %s1, %s338
      %p340 = pneg %p68
      %p341 = pneg %p65
      %p342 = pneg %p89
      %p343 = pneg %p86
      %p344 = pneg %p110
      %p345 = pneg %p107
      %p346 = pneg %p131
      %p347 = pneg %p128
      %p348 = pneg %p152
      %p349 = pneg %p149
      %p350 = pneg %p173
      %p351 = pneg %p170
      %p352 = pneg %p194
      %p353 = pneg %p191
      %p354 = pneg %p215
      %p355 = pneg %p212
      %p356 = pneg %p236
      %p357 = pneg %p233
      %p358 = pneg %p262
      %p359 = pneg %p259
      %p360 = scmp.lt.s32.totalorder %s21, 1
      %s361 = scalar_select %p360, %s21, 1
      %s362 = scalar_lea.vmem %s10, %s361
      %p363 = scmp.lt.s32.totalorder %s21, 1
      %s364 = scalar_select %p363, %s21, 1
      %s365 = smul.addr %s364, 6
      %s366 = smul.addr %s365, 4
      %s367 = scalar_lea.vmem %s0, %s366
      %p368 = scmp.lt.s32.totalorder %s21, 1
      %s369 = scalar_select %p368, %s21, 1
      %s370 = smul.addr %s369, 256
      %s371 = smul.addr %s370, 4
      %s372 = scalar_lea.vmem %s1, %s371
      %p373 = scmp.lt.s32.totalorder %s21, 1
      %s374 = scalar_select %p373, %s21, 1
      %s375 = scalar_lea.vmem %s10, %s374
      %v377 = vld [vmem:[%s367] sm:$0xff]
      %v378 = vld [vmem:[%s367 + $0x8] sm:$0xff]
      %v379 = vld [vmem:[%s367 + $0x10] sm:$0xff]
      %v380 = vld [vmem:[%s2] sm:$0xf]
      %v381 = vld [vmem:[%s2 + $0x4] sm:$0xf]
      %v382 = vld [vmem:[%s2 + $0x8] sm:$0xf]
      %v383 = vld [vmem:[%s2 + $0xc] sm:$0xf]
      %v384 = vld [vmem:[%s2 + $0x10] sm:$0xf]
      %v385 = vld [vmem:[%s2 + $0x14] sm:$0xf]
      %v386 = vld [vmem:[%s2 + $0x18] sm:$0xf]
      %v387 = vld [vmem:[%s2 + $0x1c] sm:$0xf]
      %v388 = vld [vmem:[%s2 + $0x20] sm:$0xf]
      %v389 = vld [vmem:[%s2 + $0x24] sm:$0xf]
      %v390 = vld [vmem:[%s2 + $0x28] sm:$0xf]
      %v391 = vld [vmem:[%s2 + $0x2c] sm:$0xf]
      %v392 = vld [vmem:[%s2 + $0x30] sm:$0xf]
      %v393 = vld [vmem:[%s2 + $0x34] sm:$0xf]
      %v394 = vld [vmem:[%s2 + $0x38] sm:$0xf]
      %v395 = vld [vmem:[%s2 + $0x3c] sm:$0xf]
      %v396 = vld [vmem:[%s2 + $0x40] sm:$0xf]
      %v397 = vld [vmem:[%s2 + $0x44] sm:$0xf]
      %v398 = vld [vmem:[%s2 + $0x48] sm:$0xf]
      %v399 = vld [vmem:[%s2 + $0x4c] sm:$0xf]
      %v400 = vld [vmem:[%s2 + $0x50] sm:$0xf]
      %v401 = vld [vmem:[%s2 + $0x54] sm:$0xf]
      %v402 = vld [vmem:[%s2 + $0x58] sm:$0xf]
      %v403 = vld [vmem:[%s2 + $0x5c] sm:$0xf]
      %v404 = vld [vmem:[%s2 + $0x60] sm:$0xf]
      %v405 = vld [vmem:[%s2 + $0x64] sm:$0xf]
      %v406 = vld [vmem:[%s2 + $0x68] sm:$0xf]
      %v407 = vld [vmem:[%s2 + $0x6c] sm:$0xf]
      %v408 = vld [vmem:[%s2 + $0x70] sm:$0xf]
      %v409 = vld [vmem:[%s2 + $0x74] sm:$0xf]
      %v410 = vld [vmem:[%s2 + $0x78] sm:$0xf]
      %v411 = vld [vmem:[%s2 + $0x7c] sm:$0xf]
      %v412 = vld [vmem:[%s2 + $0x80] sm:$0xf]
      %v413 = vld [vmem:[%s2 + $0x84] sm:$0xf]
      %v414 = vld [vmem:[%s2 + $0x88] sm:$0xf]
      %v415 = vld [vmem:[%s2 + $0x8c] sm:$0xf]
      %v416 = vld [vmem:[%s2 + $0x90] sm:$0xf]
      %v417 = vld [vmem:[%s2 + $0x94] sm:$0xf]
      %v418 = vld [vmem:[%s2 + $0x98] sm:$0xf]
      %v419 = vld [vmem:[%s2 + $0x9c] sm:$0xf]
      %v420 = vld [vmem:[%s2 + $0xa0] sm:$0xf]
      %v421 = vld [vmem:[%s2 + $0xa4] sm:$0xf]
      %v422 = vld [vmem:[%s2 + $0xa8] sm:$0xf]
      %v423 = vld [vmem:[%s2 + $0xac] sm:$0xf]
      %v424 = vld [vmem:[%s2 + $0xb0] sm:$0xf]
      %v425 = vld [vmem:[%s2 + $0xb4] sm:$0xf]
      %v426 = vld [vmem:[%s2 + $0xb8] sm:$0xf]
      %v427 = vld [vmem:[%s2 + $0xbc] sm:$0xf]
      %v428 = vld [vmem:[%s2 + $0xc0] sm:$0xf]
      %v429 = vld [vmem:[%s2 + $0xc4] sm:$0xf]
      %v430 = vld [vmem:[%s2 + $0xc8] sm:$0xf]
      %v431 = vld [vmem:[%s2 + $0xcc] sm:$0xf]
      %v432 = vld [vmem:[%s2 + $0xd0] sm:$0xf]
      %v433 = vld [vmem:[%s2 + $0xd4] sm:$0xf]
      %v434 = vld [vmem:[%s2 + $0xd8] sm:$0xf]
      %v435 = vld [vmem:[%s2 + $0xdc] sm:$0xf]
      %v436 = vld [vmem:[%s2 + $0xe0] sm:$0xf]
      %v437 = vld [vmem:[%s2 + $0xe4] sm:$0xf]
      %v438 = vld [vmem:[%s2 + $0xe8] sm:$0xf]
      %v439 = vld [vmem:[%s2 + $0xec] sm:$0xf]
      %v440 = vld [vmem:[%s2 + $0xf0] sm:$0xf]
      %v441 = vld [vmem:[%s2 + $0xf4] sm:$0xf]
      %v442 = vld [vmem:[%s2 + $0xf8] sm:$0xf]
      %v443 = vld [vmem:[%s2 + $0xfc] sm:$0xf]
      %v444 = vld [vmem:[%s2 + $0x100] sm:$0xf]
      %v445 = vld [vmem:[%s2 + $0x104] sm:$0xf]
      %v446 = vld [vmem:[%s2 + $0x108] sm:$0xf]
      %v447 = vld [vmem:[%s2 + $0x10c] sm:$0xf]
      %v448 = vld [vmem:[%s2 + $0x110] sm:$0xf]
      %v449 = vld [vmem:[%s2 + $0x114] sm:$0xf]
      %v450 = vld [vmem:[%s2 + $0x118] sm:$0xf]
      %v451 = vld [vmem:[%s2 + $0x11c] sm:$0xf]
      %v452 = vld [vmem:[%s2 + $0x120] sm:$0xf]
      %v453 = vld [vmem:[%s2 + $0x124] sm:$0xf]
      %v454 = vld [vmem:[%s2 + $0x128] sm:$0xf]
      %v455 = vld [vmem:[%s2 + $0x12c] sm:$0xf]
      %v456 = vld [vmem:[%s2 + $0x130] sm:$0xf]
      %v457 = vld [vmem:[%s2 + $0x134] sm:$0xf]
      %v458 = vld [vmem:[%s2 + $0x138] sm:$0xf]
      %v459 = vld [vmem:[%s2 + $0x13c] sm:$0xf]
      %v460 = vld [vmem:[%s2 + $0x140] sm:$0xf]
      %v461 = vld [vmem:[%s2 + $0x144] sm:$0xf]
      %v462 = vld [vmem:[%s2 + $0x148] sm:$0xf]
      %v463 = vld [vmem:[%s2 + $0x14c] sm:$0xf]
      %v464 = vld [vmem:[%s2 + $0x150] sm:$0xf]
      %v465 = vld [vmem:[%s2 + $0x154] sm:$0xf]
      %v466 = vld [vmem:[%s2 + $0x158] sm:$0xf]
      %v467 = vld [vmem:[%s2 + $0x15c] sm:$0xf]
      %v468 = vld [vmem:[%s2 + $0x160] sm:$0xf]
      %v469 = vld [vmem:[%s2 + $0x164] sm:$0xf]
      %v470 = vld [vmem:[%s2 + $0x168] sm:$0xf]
      %v471 = vld [vmem:[%s2 + $0x16c] sm:$0xf]
      %v472 = vld [vmem:[%s2 + $0x170] sm:$0xf]
      %v473 = vld [vmem:[%s2 + $0x174] sm:$0xf]
      %v474 = vld [vmem:[%s2 + $0x178] sm:$0xf]
      %v475 = vld [vmem:[%s2 + $0x17c] sm:$0xf]
      %v476 = vld [vmem:[%s3] sm:$0x1]
      %v478 = vlaneseq
      %v479 = vshrl.u32 %v478, 7
      %v480 = vsub.s32 0, %v479
      %v481 = vrot.slane %v476, %v480
      %v486 = vunpack.c.l.b16 %v377
      %v487 = vunpack.c.h.b16 %v377
      %v488 = vunpack.c.l.b16 %v378
      %v489 = vunpack.c.h.b16 %v378
      %v490 = vunpack.c.l.b16 %v379
      %v491 = vunpack.c.h.b16 %v379
      %v492 = vpack.c.b16 %v486, %v486
      %v493 = vpack.c.b16 %v487, %v487
      %v494 = vpack.c.b16 %v488, %v488
      %v495 = vpack.c.b16 %v489, %v489
      %v496 = vpack.c.b16 %v490, %v490
      %v497 = vpack.c.b16 %v491, %v491
      %v600 = vunpack.c.l.b16 %v380
      %v601 = vunpack.c.l.b16 %v381
      %v602 = vunpack.c.l.b16 %v382
      %v603 = vunpack.c.l.b16 %v383
      %v604 = vunpack.c.l.b16 %v384
      %v605 = vunpack.c.l.b16 %v385
      %v606 = vunpack.c.l.b16 %v386
      %v607 = vunpack.c.l.b16 %v387
      %v608 = vunpack.c.l.b16 %v388
      %v609 = vunpack.c.l.b16 %v389
      %v610 = vunpack.c.l.b16 %v390
      %v611 = vunpack.c.l.b16 %v391
      %v612 = vunpack.c.l.b16 %v392
      %v613 = vunpack.c.l.b16 %v393
      %v614 = vunpack.c.l.b16 %v394
      %v615 = vunpack.c.l.b16 %v395
      %v616 = vunpack.c.l.b16 %v396
      %v617 = vunpack.c.l.b16 %v397
      %v618 = vunpack.c.l.b16 %v398
      %v619 = vunpack.c.l.b16 %v399
      %v620 = vunpack.c.l.b16 %v400
      %v621 = vunpack.c.l.b16 %v401
      %v622 = vunpack.c.l.b16 %v402
      %v623 = vunpack.c.l.b16 %v403
      %v624 = vunpack.c.l.b16 %v404
      %v625 = vunpack.c.l.b16 %v405
      %v626 = vunpack.c.l.b16 %v406
      %v627 = vunpack.c.l.b16 %v407
      %v628 = vunpack.c.l.b16 %v408
      %v629 = vunpack.c.l.b16 %v409
      %v630 = vunpack.c.l.b16 %v410
      %v631 = vunpack.c.l.b16 %v411
      %v632 = vunpack.c.l.b16 %v412
      %v633 = vunpack.c.l.b16 %v413
      %v634 = vunpack.c.l.b16 %v414
      %v635 = vunpack.c.l.b16 %v415
      %v636 = vunpack.c.l.b16 %v416
      %v637 = vunpack.c.l.b16 %v417
      %v638 = vunpack.c.l.b16 %v418
      %v639 = vunpack.c.l.b16 %v419
      %v640 = vunpack.c.l.b16 %v420
      %v641 = vunpack.c.l.b16 %v421
      %v642 = vunpack.c.l.b16 %v422
      %v643 = vunpack.c.l.b16 %v423
      %v644 = vunpack.c.l.b16 %v424
      %v645 = vunpack.c.l.b16 %v425
      %v646 = vunpack.c.l.b16 %v426
      %v647 = vunpack.c.l.b16 %v427
      %v648 = vunpack.c.l.b16 %v428
      %v649 = vunpack.c.l.b16 %v429
      %v650 = vunpack.c.l.b16 %v430
      %v651 = vunpack.c.l.b16 %v431
      %v652 = vunpack.c.l.b16 %v432
      %v653 = vunpack.c.l.b16 %v433
      %v654 = vunpack.c.l.b16 %v434
      %v655 = vunpack.c.l.b16 %v435
      %v656 = vunpack.c.l.b16 %v436
      %v657 = vunpack.c.l.b16 %v437
      %v658 = vunpack.c.l.b16 %v438
      %v659 = vunpack.c.l.b16 %v439
      %v660 = vunpack.c.l.b16 %v440
      %v661 = vunpack.c.l.b16 %v441
      %v662 = vunpack.c.l.b16 %v442
      %v663 = vunpack.c.l.b16 %v443
      %v664 = vunpack.c.l.b16 %v444
      %v665 = vunpack.c.l.b16 %v445
      %v666 = vunpack.c.l.b16 %v446
      %v667 = vunpack.c.l.b16 %v447
      %v668 = vunpack.c.l.b16 %v448
      %v669 = vunpack.c.l.b16 %v449
      %v670 = vunpack.c.l.b16 %v450
      %v671 = vunpack.c.l.b16 %v451
      %v672 = vunpack.c.l.b16 %v452
      %v673 = vunpack.c.l.b16 %v453
      %v674 = vunpack.c.l.b16 %v454
      %v675 = vunpack.c.l.b16 %v455
      %v676 = vunpack.c.l.b16 %v456
      %v677 = vunpack.c.l.b16 %v457
      %v678 = vunpack.c.l.b16 %v458
      %v679 = vunpack.c.l.b16 %v459
      %v680 = vunpack.c.l.b16 %v460
      %v681 = vunpack.c.l.b16 %v461
      %v682 = vunpack.c.l.b16 %v462
      %v683 = vunpack.c.l.b16 %v463
      %v684 = vunpack.c.l.b16 %v464
      %v685 = vunpack.c.l.b16 %v465
      %v686 = vunpack.c.l.b16 %v466
      %v687 = vunpack.c.l.b16 %v467
      %v688 = vunpack.c.l.b16 %v468
      %v689 = vunpack.c.l.b16 %v469
      %v690 = vunpack.c.l.b16 %v470
      %v691 = vunpack.c.l.b16 %v471
      %v692 = vunpack.c.l.b16 %v472
      %v693 = vunpack.c.l.b16 %v473
      %v694 = vunpack.c.l.b16 %v474
      %v695 = vunpack.c.l.b16 %v475
      %v696 = vpack.c.b16 %v601, %v600
      %v697 = vpack.c.b16 %v603, %v602
      %v698 = vpack.c.b16 %v605, %v604
      %v699 = vpack.c.b16 %v607, %v606
      %v700 = vpack.c.b16 %v609, %v608
      %v701 = vpack.c.b16 %v611, %v610
      %v702 = vpack.c.b16 %v613, %v612
      %v703 = vpack.c.b16 %v615, %v614
      %v704 = vpack.c.b16 %v617, %v616
      %v705 = vpack.c.b16 %v619, %v618
      %v706 = vpack.c.b16 %v621, %v620
      %v707 = vpack.c.b16 %v623, %v622
      %v708 = vpack.c.b16 %v625, %v624
      %v709 = vpack.c.b16 %v627, %v626
      %v710 = vpack.c.b16 %v629, %v628
      %v711 = vpack.c.b16 %v631, %v630
      %v712 = vpack.c.b16 %v633, %v632
      %v713 = vpack.c.b16 %v635, %v634
      %v714 = vpack.c.b16 %v637, %v636
      %v715 = vpack.c.b16 %v639, %v638
      %v716 = vpack.c.b16 %v641, %v640
      %v717 = vpack.c.b16 %v643, %v642
      %v718 = vpack.c.b16 %v645, %v644
      %v719 = vpack.c.b16 %v647, %v646
      %v720 = vpack.c.b16 %v649, %v648
      %v721 = vpack.c.b16 %v651, %v650
      %v722 = vpack.c.b16 %v653, %v652
      %v723 = vpack.c.b16 %v655, %v654
      %v724 = vpack.c.b16 %v657, %v656
      %v725 = vpack.c.b16 %v659, %v658
      %v726 = vpack.c.b16 %v661, %v660
      %v727 = vpack.c.b16 %v663, %v662
      %v728 = vpack.c.b16 %v665, %v664
      %v729 = vpack.c.b16 %v667, %v666
      %v730 = vpack.c.b16 %v669, %v668
      %v731 = vpack.c.b16 %v671, %v670
      %v732 = vpack.c.b16 %v673, %v672
      %v733 = vpack.c.b16 %v675, %v674
      %v734 = vpack.c.b16 %v677, %v676
      %v735 = vpack.c.b16 %v679, %v678
      %v736 = vpack.c.b16 %v681, %v680
      %v737 = vpack.c.b16 %v683, %v682
      %v738 = vpack.c.b16 %v685, %v684
      %v739 = vpack.c.b16 %v687, %v686
      %v740 = vpack.c.b16 %v689, %v688
      %v741 = vpack.c.b16 %v691, %v690
      %v742 = vpack.c.b16 %v693, %v692
      %v743 = vpack.c.b16 %v695, %v694
      %792 = vmatprep.subr.bf16.mxu0 0
      %793 = vmatpush1.bf16.msra.mxu0 %v703
      %794 = vmatprep.subr.bf16.mxu0 0
      %795 = vmatpush1.bf16.msra.mxu0 %v702
      %796 = vmatprep.subr.bf16.mxu0 0
      %797 = vmatpush1.bf16.msra.mxu0 %v701
      %798 = vmatprep.subr.bf16.mxu0 0
      %799 = vmatpush1.bf16.msra.mxu0 %v700
      %800 = vmatprep.subr.bf16.mxu0 0
      %801 = vmatpush1.bf16.msra.mxu0 %v699
      %802 = vmatprep.subr.bf16.mxu0 0
      %803 = vmatpush1.bf16.msra.mxu0 %v698
      %804 = vmatprep.subr.bf16.mxu0 0
      %805 = vmatpush1.bf16.msra.mxu0 %v697
      %806 = vmatprep.subr.bf16.mxu0 0
      %807 = vmatpush1.bf16.msra.mxu0 %v696
      %808 = vmatprep.subr.bf16.mxu0 0
      %809 = vmatpush2.bf16.msra.mxu0 %v711
      %810 = vmatprep.subr.bf16.mxu0 0
      %811 = vmatpush2.bf16.msra.mxu0 %v710
      %812 = vmatprep.subr.bf16.mxu0 0
      %813 = vmatpush2.bf16.msra.mxu0 %v709
      %814 = vmatprep.subr.bf16.mxu0 0
      %815 = vmatpush2.bf16.msra.mxu0 %v708
      %816 = vmatprep.subr.bf16.mxu0 0
      %817 = vmatpush2.bf16.msra.mxu0 %v707
      %818 = vmatprep.subr.bf16.mxu0 0
      %819 = vmatpush2.bf16.msra.mxu0 %v706
      %820 = vmatprep.subr.bf16.mxu0 0
      %821 = vmatpush2.bf16.msra.mxu0 %v705
      %822 = vmatprep.subr.bf16.mxu0 0
      %823 = vmatpush2.bf16.msra.mxu0 %v704
      %824 = vmatprep.mubr.bf16.mxu0 %v493
      %825 = vmatmul.mubr.bf16.gmra.mxu0 %v492
      %v826 = vpop.f32.mrf.mxu0
      %v827 = vadd.f32 %v481, %v826
      %v828 = vpop.f32.mrf.mxu0
      %v829 = vpop.f32.mrf.mxu0
      %v830 = vpop.f32.mrf.mxu0
      %831 = vdwg.mxu0
      %832 = vmatprep.subr.bf16.mxu0 0
      %833 = vmatpush1.bf16.msra.mxu0 %v719
      %834 = vmatprep.subr.bf16.mxu0 0
      %835 = vmatpush1.bf16.msra.mxu0 %v718
      %836 = vmatprep.subr.bf16.mxu0 0
      %837 = vmatpush1.bf16.msra.mxu0 %v717
      %838 = vmatprep.subr.bf16.mxu0 0
      %839 = vmatpush1.bf16.msra.mxu0 %v716
      %840 = vmatprep.subr.bf16.mxu0 0
      %841 = vmatpush1.bf16.msra.mxu0 %v715
      %842 = vmatprep.subr.bf16.mxu0 0
      %843 = vmatpush1.bf16.msra.mxu0 %v714
      %844 = vmatprep.subr.bf16.mxu0 0
      %845 = vmatpush1.bf16.msra.mxu0 %v713
      %846 = vmatprep.subr.bf16.mxu0 0
      %847 = vmatpush1.bf16.msra.mxu0 %v712
      %848 = vmatprep.subr.bf16.mxu0 0
      %849 = vmatpush2.bf16.msra.mxu0 %v727
      %850 = vmatprep.subr.bf16.mxu0 0
      %851 = vmatpush2.bf16.msra.mxu0 %v726
      %852 = vmatprep.subr.bf16.mxu0 0
      %853 = vmatpush2.bf16.msra.mxu0 %v725
      %854 = vmatprep.subr.bf16.mxu0 0
      %855 = vmatpush2.bf16.msra.mxu0 %v724
      %856 = vmatprep.subr.bf16.mxu0 0
      %857 = vmatpush2.bf16.msra.mxu0 %v723
      %858 = vmatprep.subr.bf16.mxu0 0
      %859 = vmatpush2.bf16.msra.mxu0 %v722
      %860 = vmatprep.subr.bf16.mxu0 0
      %861 = vmatpush2.bf16.msra.mxu0 %v721
      %862 = vmatprep.subr.bf16.mxu0 0
      %863 = vmatpush2.bf16.msra.mxu0 %v720
      %864 = vmatprep.mubr.bf16.mxu0 %v495
      %865 = vmatmul.mubr.bf16.gmra.mxu0 %v494
      %v866 = vpop.f32.mrf.mxu0
      %v867 = vadd.f32 %v827, %v866
      %v868 = vpop.f32.mrf.mxu0
      %v869 = vpop.f32.mrf.mxu0
      %v870 = vpop.f32.mrf.mxu0
      %871 = vdwg.mxu0
      %872 = vmatprep.subr.bf16.mxu0 0
      %873 = vmatpush1.bf16.msra.mxu0 %v735
      %874 = vmatprep.subr.bf16.mxu0 0
      %875 = vmatpush1.bf16.msra.mxu0 %v734
      %876 = vmatprep.subr.bf16.mxu0 0
      %877 = vmatpush1.bf16.msra.mxu0 %v733
      %878 = vmatprep.subr.bf16.mxu0 0
      %879 = vmatpush1.bf16.msra.mxu0 %v732
      %880 = vmatprep.subr.bf16.mxu0 0
      %881 = vmatpush1.bf16.msra.mxu0 %v731
      %882 = vmatprep.subr.bf16.mxu0 0
      %883 = vmatpush1.bf16.msra.mxu0 %v730
      %884 = vmatprep.subr.bf16.mxu0 0
      %885 = vmatpush1.bf16.msra.mxu0 %v729
      %886 = vmatprep.subr.bf16.mxu0 0
      %887 = vmatpush1.bf16.msra.mxu0 %v728
      %888 = vmatprep.subr.bf16.mxu0 0
      %889 = vmatpush2.bf16.msra.mxu0 %v743
      %890 = vmatprep.subr.bf16.mxu0 0
      %891 = vmatpush2.bf16.msra.mxu0 %v742
      %892 = vmatprep.subr.bf16.mxu0 0
      %893 = vmatpush2.bf16.msra.mxu0 %v741
      %894 = vmatprep.subr.bf16.mxu0 0
      %895 = vmatpush2.bf16.msra.mxu0 %v740
      %896 = vmatprep.subr.bf16.mxu0 0
      %897 = vmatpush2.bf16.msra.mxu0 %v739
      %898 = vmatprep.subr.bf16.mxu0 0
      %899 = vmatpush2.bf16.msra.mxu0 %v738
      %900 = vmatprep.subr.bf16.mxu0 0
      %901 = vmatpush2.bf16.msra.mxu0 %v737
      %902 = vmatprep.subr.bf16.mxu0 0
      %903 = vmatpush2.bf16.msra.mxu0 %v736
      %904 = vmatprep.mubr.bf16.mxu0 %v497
      %905 = vmatmul.mubr.bf16.gmra.mxu0 %v496
      %v906 = vpop.f32.mrf.mxu0
      %v907 = vadd.f32 %v867, %v906
      %v908 = vpop.f32.mrf.mxu0
      %v909 = vpop.f32.mrf.mxu0
      %v910 = vpop.f32.mrf.mxu0
      %911 = vdwg.mxu0
      %v912 = vld [vmem:[%s372] sm:$0xf]
      %v913 = vld [vmem:[%s372 + $0x4] sm:$0xf]
      %v914 = vld [vmem:[%s372 + $0x8] sm:$0xf]
      %v915 = vld [vmem:[%s372 + $0xc] sm:$0xf]
      %v916 = vld [vmem:[%s372 + $0x10] sm:$0xf]
      %v917 = vld [vmem:[%s372 + $0x14] sm:$0xf]
      %v918 = vld [vmem:[%s372 + $0x18] sm:$0xf]
      %v919 = vld [vmem:[%s372 + $0x1c] sm:$0xf]
      %v920 = vld [vmem:[%s372 + $0x20] sm:$0xf]
      %v921 = vld [vmem:[%s372 + $0x24] sm:$0xf]
      %v922 = vld [vmem:[%s372 + $0x28] sm:$0xf]
      %v923 = vld [vmem:[%s372 + $0x2c] sm:$0xf]
      %v924 = vld [vmem:[%s372 + $0x30] sm:$0xf]
      %v925 = vld [vmem:[%s372 + $0x34] sm:$0xf]
      %v926 = vld [vmem:[%s372 + $0x38] sm:$0xf]
      %v927 = vld [vmem:[%s372 + $0x3c] sm:$0xf]
      %v928 = vld [vmem:[%s372 + $0x40] sm:$0xf]
      %v929 = vld [vmem:[%s372 + $0x44] sm:$0xf]
      %v930 = vld [vmem:[%s372 + $0x48] sm:$0xf]
      %v931 = vld [vmem:[%s372 + $0x4c] sm:$0xf]
      %v932 = vld [vmem:[%s372 + $0x50] sm:$0xf]
      %v933 = vld [vmem:[%s372 + $0x54] sm:$0xf]
      %v934 = vld [vmem:[%s372 + $0x58] sm:$0xf]
      %v935 = vld [vmem:[%s372 + $0x5c] sm:$0xf]
      %v936 = vld [vmem:[%s372 + $0x60] sm:$0xf]
      %v937 = vld [vmem:[%s372 + $0x64] sm:$0xf]
      %v938 = vld [vmem:[%s372 + $0x68] sm:$0xf]
      %v939 = vld [vmem:[%s372 + $0x6c] sm:$0xf]
      %v940 = vld [vmem:[%s372 + $0x70] sm:$0xf]
      %v941 = vld [vmem:[%s372 + $0x74] sm:$0xf]
      %v942 = vld [vmem:[%s372 + $0x78] sm:$0xf]
      %v943 = vld [vmem:[%s372 + $0x7c] sm:$0xf]
      %v944 = vld [vmem:[%s372 + $0x80] sm:$0xf]
      %v945 = vld [vmem:[%s372 + $0x84] sm:$0xf]
      %v946 = vld [vmem:[%s372 + $0x88] sm:$0xf]
      %v947 = vld [vmem:[%s372 + $0x8c] sm:$0xf]
      %v948 = vld [vmem:[%s372 + $0x90] sm:$0xf]
      %v949 = vld [vmem:[%s372 + $0x94] sm:$0xf]
      %v950 = vld [vmem:[%s372 + $0x98] sm:$0xf]
      %v951 = vld [vmem:[%s372 + $0x9c] sm:$0xf]
      %v952 = vld [vmem:[%s372 + $0xa0] sm:$0xf]
      %v953 = vld [vmem:[%s372 + $0xa4] sm:$0xf]
      %v954 = vld [vmem:[%s372 + $0xa8] sm:$0xf]
      %v955 = vld [vmem:[%s372 + $0xac] sm:$0xf]
      %v956 = vld [vmem:[%s372 + $0xb0] sm:$0xf]
      %v957 = vld [vmem:[%s372 + $0xb4] sm:$0xf]
      %v958 = vld [vmem:[%s372 + $0xb8] sm:$0xf]
      %v959 = vld [vmem:[%s372 + $0xbc] sm:$0xf]
      %v960 = vld [vmem:[%s372 + $0xc0] sm:$0xf]
      %v961 = vld [vmem:[%s372 + $0xc4] sm:$0xf]
      %v962 = vld [vmem:[%s372 + $0xc8] sm:$0xf]
      %v963 = vld [vmem:[%s372 + $0xcc] sm:$0xf]
      %v964 = vld [vmem:[%s372 + $0xd0] sm:$0xf]
      %v965 = vld [vmem:[%s372 + $0xd4] sm:$0xf]
      %v966 = vld [vmem:[%s372 + $0xd8] sm:$0xf]
      %v967 = vld [vmem:[%s372 + $0xdc] sm:$0xf]
      %v968 = vld [vmem:[%s372 + $0xe0] sm:$0xf]
      %v969 = vld [vmem:[%s372 + $0xe4] sm:$0xf]
      %v970 = vld [vmem:[%s372 + $0xe8] sm:$0xf]
      %v971 = vld [vmem:[%s372 + $0xec] sm:$0xf]
      %v972 = vld [vmem:[%s372 + $0xf0] sm:$0xf]
      %v973 = vld [vmem:[%s372 + $0xf4] sm:$0xf]
      %v974 = vld [vmem:[%s372 + $0xf8] sm:$0xf]
      %v975 = vld [vmem:[%s372 + $0xfc] sm:$0xf]
      %v976 = vld [vmem:[%s372 + $0x100] sm:$0xf]
      %v977 = vld [vmem:[%s372 + $0x104] sm:$0xf]
      %v978 = vld [vmem:[%s372 + $0x108] sm:$0xf]
      %v979 = vld [vmem:[%s372 + $0x10c] sm:$0xf]
      %v980 = vld [vmem:[%s372 + $0x110] sm:$0xf]
      %v981 = vld [vmem:[%s372 + $0x114] sm:$0xf]
      %v982 = vld [vmem:[%s372 + $0x118] sm:$0xf]
      %v983 = vld [vmem:[%s372 + $0x11c] sm:$0xf]
      %v984 = vld [vmem:[%s372 + $0x120] sm:$0xf]
      %v985 = vld [vmem:[%s372 + $0x124] sm:$0xf]
      %v986 = vld [vmem:[%s372 + $0x128] sm:$0xf]
      %v987 = vld [vmem:[%s372 + $0x12c] sm:$0xf]
      %v988 = vld [vmem:[%s372 + $0x130] sm:$0xf]
      %v989 = vld [vmem:[%s372 + $0x134] sm:$0xf]
      %v990 = vld [vmem:[%s372 + $0x138] sm:$0xf]
      %v991 = vld [vmem:[%s372 + $0x13c] sm:$0xf]
      %v992 = vld [vmem:[%s372 + $0x140] sm:$0xf]
      %v993 = vld [vmem:[%s372 + $0x144] sm:$0xf]
      %v994 = vld [vmem:[%s372 + $0x148] sm:$0xf]
      %v995 = vld [vmem:[%s372 + $0x14c] sm:$0xf]
      %v996 = vld [vmem:[%s372 + $0x150] sm:$0xf]
      %v997 = vld [vmem:[%s372 + $0x154] sm:$0xf]
      %v998 = vld [vmem:[%s372 + $0x158] sm:$0xf]
      %v999 = vld [vmem:[%s372 + $0x15c] sm:$0xf]
      %v1000 = vld [vmem:[%s372 + $0x160] sm:$0xf]
      %v1001 = vld [vmem:[%s372 + $0x164] sm:$0xf]
      %v1002 = vld [vmem:[%s372 + $0x168] sm:$0xf]
      %v1003 = vld [vmem:[%s372 + $0x16c] sm:$0xf]
      %v1004 = vld [vmem:[%s372 + $0x170] sm:$0xf]
      %v1005 = vld [vmem:[%s372 + $0x174] sm:$0xf]
      %v1006 = vld [vmem:[%s372 + $0x178] sm:$0xf]
      %v1007 = vld [vmem:[%s372 + $0x17c] sm:$0xf]
      %v1008 = vld [vmem:[%s372 + $0x180] sm:$0xf]
      %v1009 = vld [vmem:[%s372 + $0x184] sm:$0xf]
      %v1010 = vld [vmem:[%s372 + $0x188] sm:$0xf]
      %v1011 = vld [vmem:[%s372 + $0x18c] sm:$0xf]
      %v1012 = vld [vmem:[%s372 + $0x190] sm:$0xf]
      %v1013 = vld [vmem:[%s372 + $0x194] sm:$0xf]
      %v1014 = vld [vmem:[%s372 + $0x198] sm:$0xf]
      %v1015 = vld [vmem:[%s372 + $0x19c] sm:$0xf]
      %v1016 = vld [vmem:[%s372 + $0x1a0] sm:$0xf]
      %v1017 = vld [vmem:[%s372 + $0x1a4] sm:$0xf]
      %v1018 = vld [vmem:[%s372 + $0x1a8] sm:$0xf]
      %v1019 = vld [vmem:[%s372 + $0x1ac] sm:$0xf]
      %v1020 = vld [vmem:[%s372 + $0x1b0] sm:$0xf]
      %v1021 = vld [vmem:[%s372 + $0x1b4] sm:$0xf]
      %v1022 = vld [vmem:[%s372 + $0x1b8] sm:$0xf]
      %v1023 = vld [vmem:[%s372 + $0x1bc] sm:$0xf]
      %v1024 = vld [vmem:[%s372 + $0x1c0] sm:$0xf]
      %v1025 = vld [vmem:[%s372 + $0x1c4] sm:$0xf]
      %v1026 = vld [vmem:[%s372 + $0x1c8] sm:$0xf]
      %v1027 = vld [vmem:[%s372 + $0x1cc] sm:$0xf]
      %v1028 = vld [vmem:[%s372 + $0x1d0] sm:$0xf]
      %v1029 = vld [vmem:[%s372 + $0x1d4] sm:$0xf]
      %v1030 = vld [vmem:[%s372 + $0x1d8] sm:$0xf]
      %v1031 = vld [vmem:[%s372 + $0x1dc] sm:$0xf]
      %v1032 = vld [vmem:[%s372 + $0x1e0] sm:$0xf]
      %v1033 = vld [vmem:[%s372 + $0x1e4] sm:$0xf]
      %v1034 = vld [vmem:[%s372 + $0x1e8] sm:$0xf]
      %v1035 = vld [vmem:[%s372 + $0x1ec] sm:$0xf]
      %v1036 = vld [vmem:[%s372 + $0x1f0] sm:$0xf]
      %v1037 = vld [vmem:[%s372 + $0x1f4] sm:$0xf]
      %v1038 = vld [vmem:[%s372 + $0x1f8] sm:$0xf]
      %v1039 = vld [vmem:[%s372 + $0x1fc] sm:$0xf]
      %v1040 = vld [vmem:[%s372 + $0x200] sm:$0xf]
      %v1041 = vld [vmem:[%s372 + $0x204] sm:$0xf]
      %v1042 = vld [vmem:[%s372 + $0x208] sm:$0xf]
      %v1043 = vld [vmem:[%s372 + $0x20c] sm:$0xf]
      %v1044 = vld [vmem:[%s372 + $0x210] sm:$0xf]
      %v1045 = vld [vmem:[%s372 + $0x214] sm:$0xf]
      %v1046 = vld [vmem:[%s372 + $0x218] sm:$0xf]
      %v1047 = vld [vmem:[%s372 + $0x21c] sm:$0xf]
      %v1048 = vld [vmem:[%s372 + $0x220] sm:$0xf]
      %v1049 = vld [vmem:[%s372 + $0x224] sm:$0xf]
      %v1050 = vld [vmem:[%s372 + $0x228] sm:$0xf]
      %v1051 = vld [vmem:[%s372 + $0x22c] sm:$0xf]
      %v1052 = vld [vmem:[%s372 + $0x230] sm:$0xf]
      %v1053 = vld [vmem:[%s372 + $0x234] sm:$0xf]
      %v1054 = vld [vmem:[%s372 + $0x238] sm:$0xf]
      %v1055 = vld [vmem:[%s372 + $0x23c] sm:$0xf]
      %v1056 = vld [vmem:[%s372 + $0x240] sm:$0xf]
      %v1057 = vld [vmem:[%s372 + $0x244] sm:$0xf]
      %v1058 = vld [vmem:[%s372 + $0x248] sm:$0xf]
      %v1059 = vld [vmem:[%s372 + $0x24c] sm:$0xf]
      %v1060 = vld [vmem:[%s372 + $0x250] sm:$0xf]
      %v1061 = vld [vmem:[%s372 + $0x254] sm:$0xf]
      %v1062 = vld [vmem:[%s372 + $0x258] sm:$0xf]
      %v1063 = vld [vmem:[%s372 + $0x25c] sm:$0xf]
      %v1064 = vld [vmem:[%s372 + $0x260] sm:$0xf]
      %v1065 = vld [vmem:[%s372 + $0x264] sm:$0xf]
      %v1066 = vld [vmem:[%s372 + $0x268] sm:$0xf]
      %v1067 = vld [vmem:[%s372 + $0x26c] sm:$0xf]
      %v1068 = vld [vmem:[%s372 + $0x270] sm:$0xf]
      %v1069 = vld [vmem:[%s372 + $0x274] sm:$0xf]
      %v1070 = vld [vmem:[%s372 + $0x278] sm:$0xf]
      %v1071 = vld [vmem:[%s372 + $0x27c] sm:$0xf]
      %v1072 = vld [vmem:[%s372 + $0x280] sm:$0xf]
      %v1073 = vld [vmem:[%s372 + $0x284] sm:$0xf]
      %v1074 = vld [vmem:[%s372 + $0x288] sm:$0xf]
      %v1075 = vld [vmem:[%s372 + $0x28c] sm:$0xf]
      %v1076 = vld [vmem:[%s372 + $0x290] sm:$0xf]
      %v1077 = vld [vmem:[%s372 + $0x294] sm:$0xf]
      %v1078 = vld [vmem:[%s372 + $0x298] sm:$0xf]
      %v1079 = vld [vmem:[%s372 + $0x29c] sm:$0xf]
      %v1080 = vld [vmem:[%s372 + $0x2a0] sm:$0xf]
      %v1081 = vld [vmem:[%s372 + $0x2a4] sm:$0xf]
      %v1082 = vld [vmem:[%s372 + $0x2a8] sm:$0xf]
      %v1083 = vld [vmem:[%s372 + $0x2ac] sm:$0xf]
      %v1084 = vld [vmem:[%s372 + $0x2b0] sm:$0xf]
      %v1085 = vld [vmem:[%s372 + $0x2b4] sm:$0xf]
      %v1086 = vld [vmem:[%s372 + $0x2b8] sm:$0xf]
      %v1087 = vld [vmem:[%s372 + $0x2bc] sm:$0xf]
      %v1088 = vld [vmem:[%s372 + $0x2c0] sm:$0xf]
      %v1089 = vld [vmem:[%s372 + $0x2c4] sm:$0xf]
      %v1090 = vld [vmem:[%s372 + $0x2c8] sm:$0xf]
      %v1091 = vld [vmem:[%s372 + $0x2cc] sm:$0xf]
      %v1092 = vld [vmem:[%s372 + $0x2d0] sm:$0xf]
      %v1093 = vld [vmem:[%s372 + $0x2d4] sm:$0xf]
      %v1094 = vld [vmem:[%s372 + $0x2d8] sm:$0xf]
      %v1095 = vld [vmem:[%s372 + $0x2dc] sm:$0xf]
      %v1096 = vld [vmem:[%s372 + $0x2e0] sm:$0xf]
      %v1097 = vld [vmem:[%s372 + $0x2e4] sm:$0xf]
      %v1098 = vld [vmem:[%s372 + $0x2e8] sm:$0xf]
      %v1099 = vld [vmem:[%s372 + $0x2ec] sm:$0xf]
      %v1100 = vld [vmem:[%s372 + $0x2f0] sm:$0xf]
      %v1101 = vld [vmem:[%s372 + $0x2f4] sm:$0xf]
      %v1102 = vld [vmem:[%s372 + $0x2f8] sm:$0xf]
      %v1103 = vld [vmem:[%s372 + $0x2fc] sm:$0xf]
      %v1104 = vld [vmem:[%s372 + $0x300] sm:$0xf]
      %v1105 = vld [vmem:[%s372 + $0x304] sm:$0xf]
      %v1106 = vld [vmem:[%s372 + $0x308] sm:$0xf]
      %v1107 = vld [vmem:[%s372 + $0x30c] sm:$0xf]
      %v1108 = vld [vmem:[%s372 + $0x310] sm:$0xf]
      %v1109 = vld [vmem:[%s372 + $0x314] sm:$0xf]
      %v1110 = vld [vmem:[%s372 + $0x318] sm:$0xf]
      %v1111 = vld [vmem:[%s372 + $0x31c] sm:$0xf]
      %v1112 = vld [vmem:[%s372 + $0x320] sm:$0xf]
      %v1113 = vld [vmem:[%s372 + $0x324] sm:$0xf]
      %v1114 = vld [vmem:[%s372 + $0x328] sm:$0xf]
      %v1115 = vld [vmem:[%s372 + $0x32c] sm:$0xf]
      %v1116 = vld [vmem:[%s372 + $0x330] sm:$0xf]
      %v1117 = vld [vmem:[%s372 + $0x334] sm:$0xf]
      %v1118 = vld [vmem:[%s372 + $0x338] sm:$0xf]
      %v1119 = vld [vmem:[%s372 + $0x33c] sm:$0xf]
      %v1120 = vld [vmem:[%s372 + $0x340] sm:$0xf]
      %v1121 = vld [vmem:[%s372 + $0x344] sm:$0xf]
      %v1122 = vld [vmem:[%s372 + $0x348] sm:$0xf]
      %v1123 = vld [vmem:[%s372 + $0x34c] sm:$0xf]
      %v1124 = vld [vmem:[%s372 + $0x350] sm:$0xf]
      %v1125 = vld [vmem:[%s372 + $0x354] sm:$0xf]
      %v1126 = vld [vmem:[%s372 + $0x358] sm:$0xf]
      %v1127 = vld [vmem:[%s372 + $0x35c] sm:$0xf]
      %v1128 = vld [vmem:[%s372 + $0x360] sm:$0xf]
      %v1129 = vld [vmem:[%s372 + $0x364] sm:$0xf]
      %v1130 = vld [vmem:[%s372 + $0x368] sm:$0xf]
      %v1131 = vld [vmem:[%s372 + $0x36c] sm:$0xf]
      %v1132 = vld [vmem:[%s372 + $0x370] sm:$0xf]
      %v1133 = vld [vmem:[%s372 + $0x374] sm:$0xf]
      %v1134 = vld [vmem:[%s372 + $0x378] sm:$0xf]
      %v1135 = vld [vmem:[%s372 + $0x37c] sm:$0xf]
      %v1136 = vld [vmem:[%s372 + $0x380] sm:$0xf]
      %v1137 = vld [vmem:[%s372 + $0x384] sm:$0xf]
      %v1138 = vld [vmem:[%s372 + $0x388] sm:$0xf]
      %v1139 = vld [vmem:[%s372 + $0x38c] sm:$0xf]
      %v1140 = vld [vmem:[%s372 + $0x390] sm:$0xf]
      %v1141 = vld [vmem:[%s372 + $0x394] sm:$0xf]
      %v1142 = vld [vmem:[%s372 + $0x398] sm:$0xf]
      %v1143 = vld [vmem:[%s372 + $0x39c] sm:$0xf]
      %v1144 = vld [vmem:[%s372 + $0x3a0] sm:$0xf]
      %v1145 = vld [vmem:[%s372 + $0x3a4] sm:$0xf]
      %v1146 = vld [vmem:[%s372 + $0x3a8] sm:$0xf]
      %v1147 = vld [vmem:[%s372 + $0x3ac] sm:$0xf]
      %v1148 = vld [vmem:[%s372 + $0x3b0] sm:$0xf]
      %v1149 = vld [vmem:[%s372 + $0x3b4] sm:$0xf]
      %v1150 = vld [vmem:[%s372 + $0x3b8] sm:$0xf]
      %v1151 = vld [vmem:[%s372 + $0x3bc] sm:$0xf]
      %v1152 = vld [vmem:[%s372 + $0x3c0] sm:$0xf]
      %v1153 = vld [vmem:[%s372 + $0x3c4] sm:$0xf]
      %v1154 = vld [vmem:[%s372 + $0x3c8] sm:$0xf]
      %v1155 = vld [vmem:[%s372 + $0x3cc] sm:$0xf]
      %v1156 = vld [vmem:[%s372 + $0x3d0] sm:$0xf]
      %v1157 = vld [vmem:[%s372 + $0x3d4] sm:$0xf]
      %v1158 = vld [vmem:[%s372 + $0x3d8] sm:$0xf]
      %v1159 = vld [vmem:[%s372 + $0x3dc] sm:$0xf]
      %v1160 = vld [vmem:[%s372 + $0x3e0] sm:$0xf]
      %v1161 = vld [vmem:[%s372 + $0x3e4] sm:$0xf]
      %v1162 = vld [vmem:[%s372 + $0x3e8] sm:$0xf]
      %v1163 = vld [vmem:[%s372 + $0x3ec] sm:$0xf]
      %v1164 = vld [vmem:[%s372 + $0x3f0] sm:$0xf]
      %v1165 = vld [vmem:[%s372 + $0x3f4] sm:$0xf]
      %v1166 = vld [vmem:[%s372 + $0x3f8] sm:$0xf]
      %v1167 = vld [vmem:[%s372 + $0x3fc] sm:$0xf]
      %v1168 = vld [vmem:[%s4] sm:$0xf]
      %v1169 = vld [vmem:[%s4 + $0x4] sm:$0xf]
      %v1170 = vld [vmem:[%s4 + $0x8] sm:$0xf]
      %v1171 = vld [vmem:[%s4 + $0xc] sm:$0xf]
      %v1172 = vld [vmem:[%s4 + $0x10] sm:$0xf]
      %v1173 = vld [vmem:[%s4 + $0x14] sm:$0xf]
      %v1174 = vld [vmem:[%s4 + $0x18] sm:$0xf]
      %v1175 = vld [vmem:[%s4 + $0x1c] sm:$0xf]
      %v1176 = vld [vmem:[%s4 + $0x20] sm:$0xf]
      %v1177 = vld [vmem:[%s4 + $0x24] sm:$0xf]
      %v1178 = vld [vmem:[%s4 + $0x28] sm:$0xf]
      %v1179 = vld [vmem:[%s4 + $0x2c] sm:$0xf]
      %v1180 = vld [vmem:[%s4 + $0x30] sm:$0xf]
      %v1181 = vld [vmem:[%s4 + $0x34] sm:$0xf]
      %v1182 = vld [vmem:[%s4 + $0x38] sm:$0xf]
      %v1183 = vld [vmem:[%s4 + $0x3c] sm:$0xf]
      %v1184 = vld [vmem:[%s4 + $0x40] sm:$0xf]
      %v1185 = vld [vmem:[%s4 + $0x44] sm:$0xf]
      %v1186 = vld [vmem:[%s4 + $0x48] sm:$0xf]
      %v1187 = vld [vmem:[%s4 + $0x4c] sm:$0xf]
      %v1188 = vld [vmem:[%s4 + $0x50] sm:$0xf]
      %v1189 = vld [vmem:[%s4 + $0x54] sm:$0xf]
      %v1190 = vld [vmem:[%s4 + $0x58] sm:$0xf]
      %v1191 = vld [vmem:[%s4 + $0x5c] sm:$0xf]
      %v1192 = vld [vmem:[%s4 + $0x60] sm:$0xf]
      %v1193 = vld [vmem:[%s4 + $0x64] sm:$0xf]
      %v1194 = vld [vmem:[%s4 + $0x68] sm:$0xf]
      %v1195 = vld [vmem:[%s4 + $0x6c] sm:$0xf]
      %v1196 = vld [vmem:[%s4 + $0x70] sm:$0xf]
      %v1197 = vld [vmem:[%s4 + $0x74] sm:$0xf]
      %v1198 = vld [vmem:[%s4 + $0x78] sm:$0xf]
      %v1199 = vld [vmem:[%s4 + $0x7c] sm:$0xf]
      %v1200 = vld [vmem:[%s4 + $0x80] sm:$0xf]
      %v1201 = vld [vmem:[%s4 + $0x84] sm:$0xf]
      %v1202 = vld [vmem:[%s4 + $0x88] sm:$0xf]
      %v1203 = vld [vmem:[%s4 + $0x8c] sm:$0xf]
      %v1204 = vld [vmem:[%s4 + $0x90] sm:$0xf]
      %v1205 = vld [vmem:[%s4 + $0x94] sm:$0xf]
      %v1206 = vld [vmem:[%s4 + $0x98] sm:$0xf]
      %v1207 = vld [vmem:[%s4 + $0x9c] sm:$0xf]
      %v1208 = vld [vmem:[%s4 + $0xa0] sm:$0xf]
      %v1209 = vld [vmem:[%s4 + $0xa4] sm:$0xf]
      %v1210 = vld [vmem:[%s4 + $0xa8] sm:$0xf]
      %v1211 = vld [vmem:[%s4 + $0xac] sm:$0xf]
      %v1212 = vld [vmem:[%s4 + $0xb0] sm:$0xf]
      %v1213 = vld [vmem:[%s4 + $0xb4] sm:$0xf]
      %v1214 = vld [vmem:[%s4 + $0xb8] sm:$0xf]
      %v1215 = vld [vmem:[%s4 + $0xbc] sm:$0xf]
      %v1216 = vld [vmem:[%s4 + $0xc0] sm:$0xf]
      %v1217 = vld [vmem:[%s4 + $0xc4] sm:$0xf]
      %v1218 = vld [vmem:[%s4 + $0xc8] sm:$0xf]
      %v1219 = vld [vmem:[%s4 + $0xcc] sm:$0xf]
      %v1220 = vld [vmem:[%s4 + $0xd0] sm:$0xf]
      %v1221 = vld [vmem:[%s4 + $0xd4] sm:$0xf]
      %v1222 = vld [vmem:[%s4 + $0xd8] sm:$0xf]
      %v1223 = vld [vmem:[%s4 + $0xdc] sm:$0xf]
      %v1224 = vld [vmem:[%s4 + $0xe0] sm:$0xf]
      %v1225 = vld [vmem:[%s4 + $0xe4] sm:$0xf]
      %v1226 = vld [vmem:[%s4 + $0xe8] sm:$0xf]
      %v1227 = vld [vmem:[%s4 + $0xec] sm:$0xf]
      %v1228 = vld [vmem:[%s4 + $0xf0] sm:$0xf]
      %v1229 = vld [vmem:[%s4 + $0xf4] sm:$0xf]
      %v1230 = vld [vmem:[%s4 + $0xf8] sm:$0xf]
      %v1231 = vld [vmem:[%s4 + $0xfc] sm:$0xf]
      %v1232 = vld [vmem:[%s4 + $0x100] sm:$0xf]
      %v1233 = vld [vmem:[%s4 + $0x104] sm:$0xf]
      %v1234 = vld [vmem:[%s4 + $0x108] sm:$0xf]
      %v1235 = vld [vmem:[%s4 + $0x10c] sm:$0xf]
      %v1236 = vld [vmem:[%s4 + $0x110] sm:$0xf]
      %v1237 = vld [vmem:[%s4 + $0x114] sm:$0xf]
      %v1238 = vld [vmem:[%s4 + $0x118] sm:$0xf]
      %v1239 = vld [vmem:[%s4 + $0x11c] sm:$0xf]
      %v1240 = vld [vmem:[%s4 + $0x120] sm:$0xf]
      %v1241 = vld [vmem:[%s4 + $0x124] sm:$0xf]
      %v1242 = vld [vmem:[%s4 + $0x128] sm:$0xf]
      %v1243 = vld [vmem:[%s4 + $0x12c] sm:$0xf]
      %v1244 = vld [vmem:[%s4 + $0x130] sm:$0xf]
      %v1245 = vld [vmem:[%s4 + $0x134] sm:$0xf]
      %v1246 = vld [vmem:[%s4 + $0x138] sm:$0xf]
      %v1247 = vld [vmem:[%s4 + $0x13c] sm:$0xf]
      %v1248 = vld [vmem:[%s4 + $0x140] sm:$0xf]
      %v1249 = vld [vmem:[%s4 + $0x144] sm:$0xf]
      %v1250 = vld [vmem:[%s4 + $0x148] sm:$0xf]
      %v1251 = vld [vmem:[%s4 + $0x14c] sm:$0xf]
      %v1252 = vld [vmem:[%s4 + $0x150] sm:$0xf]
      %v1253 = vld [vmem:[%s4 + $0x154] sm:$0xf]
      %v1254 = vld [vmem:[%s4 + $0x158] sm:$0xf]
      %v1255 = vld [vmem:[%s4 + $0x15c] sm:$0xf]
      %v1256 = vld [vmem:[%s4 + $0x160] sm:$0xf]
      %v1257 = vld [vmem:[%s4 + $0x164] sm:$0xf]
      %v1258 = vld [vmem:[%s4 + $0x168] sm:$0xf]
      %v1259 = vld [vmem:[%s4 + $0x16c] sm:$0xf]
      %v1260 = vld [vmem:[%s4 + $0x170] sm:$0xf]
      %v1261 = vld [vmem:[%s4 + $0x174] sm:$0xf]
      %v1262 = vld [vmem:[%s4 + $0x178] sm:$0xf]
      %v1263 = vld [vmem:[%s4 + $0x17c] sm:$0xf]
      %v1264 = vld [vmem:[%s4 + $0x180] sm:$0xf]
      %v1265 = vld [vmem:[%s4 + $0x184] sm:$0xf]
      %v1266 = vld [vmem:[%s4 + $0x188] sm:$0xf]
      %v1267 = vld [vmem:[%s4 + $0x18c] sm:$0xf]
      %v1268 = vld [vmem:[%s4 + $0x190] sm:$0xf]
      %v1269 = vld [vmem:[%s4 + $0x194] sm:$0xf]
      %v1270 = vld [vmem:[%s4 + $0x198] sm:$0xf]
      %v1271 = vld [vmem:[%s4 + $0x19c] sm:$0xf]
      %v1272 = vld [vmem:[%s4 + $0x1a0] sm:$0xf]
      %v1273 = vld [vmem:[%s4 + $0x1a4] sm:$0xf]
      %v1274 = vld [vmem:[%s4 + $0x1a8] sm:$0xf]
      %v1275 = vld [vmem:[%s4 + $0x1ac] sm:$0xf]
      %v1276 = vld [vmem:[%s4 + $0x1b0] sm:$0xf]
      %v1277 = vld [vmem:[%s4 + $0x1b4] sm:$0xf]
      %v1278 = vld [vmem:[%s4 + $0x1b8] sm:$0xf]
      %v1279 = vld [vmem:[%s4 + $0x1bc] sm:$0xf]
      %v1280 = vld [vmem:[%s4 + $0x1c0] sm:$0xf]
      %v1281 = vld [vmem:[%s4 + $0x1c4] sm:$0xf]
      %v1282 = vld [vmem:[%s4 + $0x1c8] sm:$0xf]
      %v1283 = vld [vmem:[%s4 + $0x1cc] sm:$0xf]
      %v1284 = vld [vmem:[%s4 + $0x1d0] sm:$0xf]
      %v1285 = vld [vmem:[%s4 + $0x1d4] sm:$0xf]
      %v1286 = vld [vmem:[%s4 + $0x1d8] sm:$0xf]
      %v1287 = vld [vmem:[%s4 + $0x1dc] sm:$0xf]
      %v1288 = vld [vmem:[%s4 + $0x1e0] sm:$0xf]
      %v1289 = vld [vmem:[%s4 + $0x1e4] sm:$0xf]
      %v1290 = vld [vmem:[%s4 + $0x1e8] sm:$0xf]
      %v1291 = vld [vmem:[%s4 + $0x1ec] sm:$0xf]
      %v1292 = vld [vmem:[%s4 + $0x1f0] sm:$0xf]
      %v1293 = vld [vmem:[%s4 + $0x1f4] sm:$0xf]
      %v1294 = vld [vmem:[%s4 + $0x1f8] sm:$0xf]
      %v1295 = vld [vmem:[%s4 + $0x1fc] sm:$0xf]
      %v1296 = vld [vmem:[%s4 + $0x200] sm:$0xf]
      %v1297 = vld [vmem:[%s4 + $0x204] sm:$0xf]
      %v1298 = vld [vmem:[%s4 + $0x208] sm:$0xf]
      %v1299 = vld [vmem:[%s4 + $0x20c] sm:$0xf]
      %v1300 = vld [vmem:[%s4 + $0x210] sm:$0xf]
      %v1301 = vld [vmem:[%s4 + $0x214] sm:$0xf]
      %v1302 = vld [vmem:[%s4 + $0x218] sm:$0xf]
      %v1303 = vld [vmem:[%s4 + $0x21c] sm:$0xf]
      %v1304 = vld [vmem:[%s4 + $0x220] sm:$0xf]
      %v1305 = vld [vmem:[%s4 + $0x224] sm:$0xf]
      %v1306 = vld [vmem:[%s4 + $0x228] sm:$0xf]
      %v1307 = vld [vmem:[%s4 + $0x22c] sm:$0xf]
      %v1308 = vld [vmem:[%s4 + $0x230] sm:$0xf]
      %v1309 = vld [vmem:[%s4 + $0x234] sm:$0xf]
      %v1310 = vld [vmem:[%s4 + $0x238] sm:$0xf]
      %v1311 = vld [vmem:[%s4 + $0x23c] sm:$0xf]
      %v1312 = vld [vmem:[%s4 + $0x240] sm:$0xf]
      %v1313 = vld [vmem:[%s4 + $0x244] sm:$0xf]
      %v1314 = vld [vmem:[%s4 + $0x248] sm:$0xf]
      %v1315 = vld [vmem:[%s4 + $0x24c] sm:$0xf]
      %v1316 = vld [vmem:[%s4 + $0x250] sm:$0xf]
      %v1317 = vld [vmem:[%s4 + $0x254] sm:$0xf]
      %v1318 = vld [vmem:[%s4 + $0x258] sm:$0xf]
      %v1319 = vld [vmem:[%s4 + $0x25c] sm:$0xf]
      %v1320 = vld [vmem:[%s4 + $0x260] sm:$0xf]
      %v1321 = vld [vmem:[%s4 + $0x264] sm:$0xf]
      %v1322 = vld [vmem:[%s4 + $0x268] sm:$0xf]
      %v1323 = vld [vmem:[%s4 + $0x26c] sm:$0xf]
      %v1324 = vld [vmem:[%s4 + $0x270] sm:$0xf]
      %v1325 = vld [vmem:[%s4 + $0x274] sm:$0xf]
      %v1326 = vld [vmem:[%s4 + $0x278] sm:$0xf]
      %v1327 = vld [vmem:[%s4 + $0x27c] sm:$0xf]
      %v1328 = vld [vmem:[%s4 + $0x280] sm:$0xf]
      %v1329 = vld [vmem:[%s4 + $0x284] sm:$0xf]
      %v1330 = vld [vmem:[%s4 + $0x288] sm:$0xf]
      %v1331 = vld [vmem:[%s4 + $0x28c] sm:$0xf]
      %v1332 = vld [vmem:[%s4 + $0x290] sm:$0xf]
      %v1333 = vld [vmem:[%s4 + $0x294] sm:$0xf]
      %v1334 = vld [vmem:[%s4 + $0x298] sm:$0xf]
      %v1335 = vld [vmem:[%s4 + $0x29c] sm:$0xf]
      %v1336 = vld [vmem:[%s4 + $0x2a0] sm:$0xf]
      %v1337 = vld [vmem:[%s4 + $0x2a4] sm:$0xf]
      %v1338 = vld [vmem:[%s4 + $0x2a8] sm:$0xf]
      %v1339 = vld [vmem:[%s4 + $0x2ac] sm:$0xf]
      %v1340 = vld [vmem:[%s4 + $0x2b0] sm:$0xf]
      %v1341 = vld [vmem:[%s4 + $0x2b4] sm:$0xf]
      %v1342 = vld [vmem:[%s4 + $0x2b8] sm:$0xf]
      %v1343 = vld [vmem:[%s4 + $0x2bc] sm:$0xf]
      %v1344 = vld [vmem:[%s4 + $0x2c0] sm:$0xf]
      %v1345 = vld [vmem:[%s4 + $0x2c4] sm:$0xf]
      %v1346 = vld [vmem:[%s4 + $0x2c8] sm:$0xf]
      %v1347 = vld [vmem:[%s4 + $0x2cc] sm:$0xf]
      %v1348 = vld [vmem:[%s4 + $0x2d0] sm:$0xf]
      %v1349 = vld [vmem:[%s4 + $0x2d4] sm:$0xf]
      %v1350 = vld [vmem:[%s4 + $0x2d8] sm:$0xf]
      %v1351 = vld [vmem:[%s4 + $0x2dc] sm:$0xf]
      %v1352 = vld [vmem:[%s4 + $0x2e0] sm:$0xf]
      %v1353 = vld [vmem:[%s4 + $0x2e4] sm:$0xf]
      %v1354 = vld [vmem:[%s4 + $0x2e8] sm:$0xf]
      %v1355 = vld [vmem:[%s4 + $0x2ec] sm:$0xf]
      %v1356 = vld [vmem:[%s4 + $0x2f0] sm:$0xf]
      %v1357 = vld [vmem:[%s4 + $0x2f4] sm:$0xf]
      %v1358 = vld [vmem:[%s4 + $0x2f8] sm:$0xf]
      %v1359 = vld [vmem:[%s4 + $0x2fc] sm:$0xf]
      %v1360 = vld [vmem:[%s4 + $0x300] sm:$0xf]
      %v1361 = vld [vmem:[%s4 + $0x304] sm:$0xf]
      %v1362 = vld [vmem:[%s4 + $0x308] sm:$0xf]
      %v1363 = vld [vmem:[%s4 + $0x30c] sm:$0xf]
      %v1364 = vld [vmem:[%s4 + $0x310] sm:$0xf]
      %v1365 = vld [vmem:[%s4 + $0x314] sm:$0xf]
      %v1366 = vld [vmem:[%s4 + $0x318] sm:$0xf]
      %v1367 = vld [vmem:[%s4 + $0x31c] sm:$0xf]
      %v1368 = vld [vmem:[%s4 + $0x320] sm:$0xf]
      %v1369 = vld [vmem:[%s4 + $0x324] sm:$0xf]
      %v1370 = vld [vmem:[%s4 + $0x328] sm:$0xf]
      %v1371 = vld [vmem:[%s4 + $0x32c] sm:$0xf]
      %v1372 = vld [vmem:[%s4 + $0x330] sm:$0xf]
      %v1373 = vld [vmem:[%s4 + $0x334] sm:$0xf]
      %v1374 = vld [vmem:[%s4 + $0x338] sm:$0xf]
      %v1375 = vld [vmem:[%s4 + $0x33c] sm:$0xf]
      %v1376 = vld [vmem:[%s4 + $0x340] sm:$0xf]
      %v1377 = vld [vmem:[%s4 + $0x344] sm:$0xf]
      %v1378 = vld [vmem:[%s4 + $0x348] sm:$0xf]
      %v1379 = vld [vmem:[%s4 + $0x34c] sm:$0xf]
      %v1380 = vld [vmem:[%s4 + $0x350] sm:$0xf]
      %v1381 = vld [vmem:[%s4 + $0x354] sm:$0xf]
      %v1382 = vld [vmem:[%s4 + $0x358] sm:$0xf]
      %v1383 = vld [vmem:[%s4 + $0x35c] sm:$0xf]
      %v1384 = vld [vmem:[%s4 + $0x360] sm:$0xf]
      %v1385 = vld [vmem:[%s4 + $0x364] sm:$0xf]
      %v1386 = vld [vmem:[%s4 + $0x368] sm:$0xf]
      %v1387 = vld [vmem:[%s4 + $0x36c] sm:$0xf]
      %v1388 = vld [vmem:[%s4 + $0x370] sm:$0xf]
      %v1389 = vld [vmem:[%s4 + $0x374] sm:$0xf]
      %v1390 = vld [vmem:[%s4 + $0x378] sm:$0xf]
      %v1391 = vld [vmem:[%s4 + $0x37c] sm:$0xf]
      %v1392 = vld [vmem:[%s4 + $0x380] sm:$0xf]
      %v1393 = vld [vmem:[%s4 + $0x384] sm:$0xf]
      %v1394 = vld [vmem:[%s4 + $0x388] sm:$0xf]
      %v1395 = vld [vmem:[%s4 + $0x38c] sm:$0xf]
      %v1396 = vld [vmem:[%s4 + $0x390] sm:$0xf]
      %v1397 = vld [vmem:[%s4 + $0x394] sm:$0xf]
      %v1398 = vld [vmem:[%s4 + $0x398] sm:$0xf]
      %v1399 = vld [vmem:[%s4 + $0x39c] sm:$0xf]
      %v1400 = vld [vmem:[%s4 + $0x3a0] sm:$0xf]
      %v1401 = vld [vmem:[%s4 + $0x3a4] sm:$0xf]
      %v1402 = vld [vmem:[%s4 + $0x3a8] sm:$0xf]
      %v1403 = vld [vmem:[%s4 + $0x3ac] sm:$0xf]
      %v1404 = vld [vmem:[%s4 + $0x3b0] sm:$0xf]
      %v1405 = vld [vmem:[%s4 + $0x3b4] sm:$0xf]
      %v1406 = vld [vmem:[%s4 + $0x3b8] sm:$0xf]
      %v1407 = vld [vmem:[%s4 + $0x3bc] sm:$0xf]
      %v1408 = vld [vmem:[%s4 + $0x3c0] sm:$0xf]
      %v1409 = vld [vmem:[%s4 + $0x3c4] sm:$0xf]
      %v1410 = vld [vmem:[%s4 + $0x3c8] sm:$0xf]
      %v1411 = vld [vmem:[%s4 + $0x3cc] sm:$0xf]
      %v1412 = vld [vmem:[%s4 + $0x3d0] sm:$0xf]
      %v1413 = vld [vmem:[%s4 + $0x3d4] sm:$0xf]
      %v1414 = vld [vmem:[%s4 + $0x3d8] sm:$0xf]
      %v1415 = vld [vmem:[%s4 + $0x3dc] sm:$0xf]
      %v1416 = vld [vmem:[%s4 + $0x3e0] sm:$0xf]
      %v1417 = vld [vmem:[%s4 + $0x3e4] sm:$0xf]
      %v1418 = vld [vmem:[%s4 + $0x3e8] sm:$0xf]
      %v1419 = vld [vmem:[%s4 + $0x3ec] sm:$0xf]
      %v1420 = vld [vmem:[%s4 + $0x3f0] sm:$0xf]
      %v1421 = vld [vmem:[%s4 + $0x3f4] sm:$0xf]
      %v1422 = vld [vmem:[%s4 + $0x3f8] sm:$0xf]
      %v1423 = vld [vmem:[%s4 + $0x3fc] sm:$0xf]
      %v1424 = vld [vmem:[%s5] sm:$0x1]
      %v1426 = vlaneseq
      %v1427 = vshrl.u32 %v1426, 7
      %v1428 = vsub.s32 0, %v1427
      %v1429 = vrot.slane %v1424, %v1428
      %v1687 = vunpack.c.l.b16 %v912
      %v1688 = vunpack.c.l.b16 %v913
      %v1689 = vunpack.c.l.b16 %v914
      %v1690 = vunpack.c.l.b16 %v915
      %v1691 = vunpack.c.l.b16 %v916
      %v1692 = vunpack.c.l.b16 %v917
      %v1693 = vunpack.c.l.b16 %v918
      %v1694 = vunpack.c.l.b16 %v919
      %v1695 = vunpack.c.l.b16 %v920
      %v1696 = vunpack.c.l.b16 %v921
      %v1697 = vunpack.c.l.b16 %v922
      %v1698 = vunpack.c.l.b16 %v923
      %v1699 = vunpack.c.l.b16 %v924
      %v1700 = vunpack.c.l.b16 %v925
      %v1701 = vunpack.c.l.b16 %v926
      %v1702 = vunpack.c.l.b16 %v927
      %v1703 = vunpack.c.l.b16 %v928
      %v1704 = vunpack.c.l.b16 %v929
      %v1705 = vunpack.c.l.b16 %v930
      %v1706 = vunpack.c.l.b16 %v931
      %v1707 = vunpack.c.l.b16 %v932
      %v1708 = vunpack.c.l.b16 %v933
      %v1709 = vunpack.c.l.b16 %v934
      %v1710 = vunpack.c.l.b16 %v935
      %v1711 = vunpack.c.l.b16 %v936
      %v1712 = vunpack.c.l.b16 %v937
      %v1713 = vunpack.c.l.b16 %v938
      %v1714 = vunpack.c.l.b16 %v939
      %v1715 = vunpack.c.l.b16 %v940
      %v1716 = vunpack.c.l.b16 %v941
      %v1717 = vunpack.c.l.b16 %v942
      %v1718 = vunpack.c.l.b16 %v943
      %v1719 = vunpack.c.l.b16 %v944
      %v1720 = vunpack.c.l.b16 %v945
      %v1721 = vunpack.c.l.b16 %v946
      %v1722 = vunpack.c.l.b16 %v947
      %v1723 = vunpack.c.l.b16 %v948
      %v1724 = vunpack.c.l.b16 %v949
      %v1725 = vunpack.c.l.b16 %v950
      %v1726 = vunpack.c.l.b16 %v951
      %v1727 = vunpack.c.l.b16 %v952
      %v1728 = vunpack.c.l.b16 %v953
      %v1729 = vunpack.c.l.b16 %v954
      %v1730 = vunpack.c.l.b16 %v955
      %v1731 = vunpack.c.l.b16 %v956
      %v1732 = vunpack.c.l.b16 %v957
      %v1733 = vunpack.c.l.b16 %v958
      %v1734 = vunpack.c.l.b16 %v959
      %v1735 = vunpack.c.l.b16 %v960
      %v1736 = vunpack.c.l.b16 %v961
      %v1737 = vunpack.c.l.b16 %v962
      %v1738 = vunpack.c.l.b16 %v963
      %v1739 = vunpack.c.l.b16 %v964
      %v1740 = vunpack.c.l.b16 %v965
      %v1741 = vunpack.c.l.b16 %v966
      %v1742 = vunpack.c.l.b16 %v967
      %v1743 = vunpack.c.l.b16 %v968
      %v1744 = vunpack.c.l.b16 %v969
      %v1745 = vunpack.c.l.b16 %v970
      %v1746 = vunpack.c.l.b16 %v971
      %v1747 = vunpack.c.l.b16 %v972
      %v1748 = vunpack.c.l.b16 %v973
      %v1749 = vunpack.c.l.b16 %v974
      %v1750 = vunpack.c.l.b16 %v975
      %v1751 = vunpack.c.l.b16 %v976
      %v1752 = vunpack.c.l.b16 %v977
      %v1753 = vunpack.c.l.b16 %v978
      %v1754 = vunpack.c.l.b16 %v979
      %v1755 = vunpack.c.l.b16 %v980
      %v1756 = vunpack.c.l.b16 %v981
      %v1757 = vunpack.c.l.b16 %v982
      %v1758 = vunpack.c.l.b16 %v983
      %v1759 = vunpack.c.l.b16 %v984
      %v1760 = vunpack.c.l.b16 %v985
      %v1761 = vunpack.c.l.b16 %v986
      %v1762 = vunpack.c.l.b16 %v987
      %v1763 = vunpack.c.l.b16 %v988
      %v1764 = vunpack.c.l.b16 %v989
      %v1765 = vunpack.c.l.b16 %v990
      %v1766 = vunpack.c.l.b16 %v991
      %v1767 = vunpack.c.l.b16 %v992
      %v1768 = vunpack.c.l.b16 %v993
      %v1769 = vunpack.c.l.b16 %v994
      %v1770 = vunpack.c.l.b16 %v995
      %v1771 = vunpack.c.l.b16 %v996
      %v1772 = vunpack.c.l.b16 %v997
      %v1773 = vunpack.c.l.b16 %v998
      %v1774 = vunpack.c.l.b16 %v999
      %v1775 = vunpack.c.l.b16 %v1000
      %v1776 = vunpack.c.l.b16 %v1001
      %v1777 = vunpack.c.l.b16 %v1002
      %v1778 = vunpack.c.l.b16 %v1003
      %v1779 = vunpack.c.l.b16 %v1004
      %v1780 = vunpack.c.l.b16 %v1005
      %v1781 = vunpack.c.l.b16 %v1006
      %v1782 = vunpack.c.l.b16 %v1007
      %v1783 = vunpack.c.l.b16 %v1008
      %v1784 = vunpack.c.l.b16 %v1009
      %v1785 = vunpack.c.l.b16 %v1010
      %v1786 = vunpack.c.l.b16 %v1011
      %v1787 = vunpack.c.l.b16 %v1012
      %v1788 = vunpack.c.l.b16 %v1013
      %v1789 = vunpack.c.l.b16 %v1014
      %v1790 = vunpack.c.l.b16 %v1015
      %v1791 = vunpack.c.l.b16 %v1016
      %v1792 = vunpack.c.l.b16 %v1017
      %v1793 = vunpack.c.l.b16 %v1018
      %v1794 = vunpack.c.l.b16 %v1019
      %v1795 = vunpack.c.l.b16 %v1020
      %v1796 = vunpack.c.l.b16 %v1021
      %v1797 = vunpack.c.l.b16 %v1022
      %v1798 = vunpack.c.l.b16 %v1023
      %v1799 = vunpack.c.l.b16 %v1024
      %v1800 = vunpack.c.l.b16 %v1025
      %v1801 = vunpack.c.l.b16 %v1026
      %v1802 = vunpack.c.l.b16 %v1027
      %v1803 = vunpack.c.l.b16 %v1028
      %v1804 = vunpack.c.l.b16 %v1029
      %v1805 = vunpack.c.l.b16 %v1030
      %v1806 = vunpack.c.l.b16 %v1031
      %v1807 = vunpack.c.l.b16 %v1032
      %v1808 = vunpack.c.l.b16 %v1033
      %v1809 = vunpack.c.l.b16 %v1034
      %v1810 = vunpack.c.l.b16 %v1035
      %v1811 = vunpack.c.l.b16 %v1036
      %v1812 = vunpack.c.l.b16 %v1037
      %v1813 = vunpack.c.l.b16 %v1038
      %v1814 = vunpack.c.l.b16 %v1039
      %v1815 = vunpack.c.l.b16 %v1040
      %v1816 = vunpack.c.l.b16 %v1041
      %v1817 = vunpack.c.l.b16 %v1042
      %v1818 = vunpack.c.l.b16 %v1043
      %v1819 = vunpack.c.l.b16 %v1044
      %v1820 = vunpack.c.l.b16 %v1045
      %v1821 = vunpack.c.l.b16 %v1046
      %v1822 = vunpack.c.l.b16 %v1047
      %v1823 = vunpack.c.l.b16 %v1048
      %v1824 = vunpack.c.l.b16 %v1049
      %v1825 = vunpack.c.l.b16 %v1050
      %v1826 = vunpack.c.l.b16 %v1051
      %v1827 = vunpack.c.l.b16 %v1052
      %v1828 = vunpack.c.l.b16 %v1053
      %v1829 = vunpack.c.l.b16 %v1054
      %v1830 = vunpack.c.l.b16 %v1055
      %v1831 = vunpack.c.l.b16 %v1056
      %v1832 = vunpack.c.l.b16 %v1057
      %v1833 = vunpack.c.l.b16 %v1058
      %v1834 = vunpack.c.l.b16 %v1059
      %v1835 = vunpack.c.l.b16 %v1060
      %v1836 = vunpack.c.l.b16 %v1061
      %v1837 = vunpack.c.l.b16 %v1062
      %v1838 = vunpack.c.l.b16 %v1063
      %v1839 = vunpack.c.l.b16 %v1064
      %v1840 = vunpack.c.l.b16 %v1065
      %v1841 = vunpack.c.l.b16 %v1066
      %v1842 = vunpack.c.l.b16 %v1067
      %v1843 = vunpack.c.l.b16 %v1068
      %v1844 = vunpack.c.l.b16 %v1069
      %v1845 = vunpack.c.l.b16 %v1070
      %v1846 = vunpack.c.l.b16 %v1071
      %v1847 = vunpack.c.l.b16 %v1072
      %v1848 = vunpack.c.l.b16 %v1073
      %v1849 = vunpack.c.l.b16 %v1074
      %v1850 = vunpack.c.l.b16 %v1075
      %v1851 = vunpack.c.l.b16 %v1076
      %v1852 = vunpack.c.l.b16 %v1077
      %v1853 = vunpack.c.l.b16 %v1078
      %v1854 = vunpack.c.l.b16 %v1079
      %v1855 = vunpack.c.l.b16 %v1080
      %v1856 = vunpack.c.l.b16 %v1081
      %v1857 = vunpack.c.l.b16 %v1082
      %v1858 = vunpack.c.l.b16 %v1083
      %v1859 = vunpack.c.l.b16 %v1084
      %v1860 = vunpack.c.l.b16 %v1085
      %v1861 = vunpack.c.l.b16 %v1086
      %v1862 = vunpack.c.l.b16 %v1087
      %v1863 = vunpack.c.l.b16 %v1088
      %v1864 = vunpack.c.l.b16 %v1089
      %v1865 = vunpack.c.l.b16 %v1090
      %v1866 = vunpack.c.l.b16 %v1091
      %v1867 = vunpack.c.l.b16 %v1092
      %v1868 = vunpack.c.l.b16 %v1093
      %v1869 = vunpack.c.l.b16 %v1094
      %v1870 = vunpack.c.l.b16 %v1095
      %v1871 = vunpack.c.l.b16 %v1096
      %v1872 = vunpack.c.l.b16 %v1097
      %v1873 = vunpack.c.l.b16 %v1098
      %v1874 = vunpack.c.l.b16 %v1099
      %v1875 = vunpack.c.l.b16 %v1100
      %v1876 = vunpack.c.l.b16 %v1101
      %v1877 = vunpack.c.l.b16 %v1102
      %v1878 = vunpack.c.l.b16 %v1103
      %v1879 = vunpack.c.l.b16 %v1104
      %v1880 = vunpack.c.l.b16 %v1105
      %v1881 = vunpack.c.l.b16 %v1106
      %v1882 = vunpack.c.l.b16 %v1107
      %v1883 = vunpack.c.l.b16 %v1108
      %v1884 = vunpack.c.l.b16 %v1109
      %v1885 = vunpack.c.l.b16 %v1110
      %v1886 = vunpack.c.l.b16 %v1111
      %v1887 = vunpack.c.l.b16 %v1112
      %v1888 = vunpack.c.l.b16 %v1113
      %v1889 = vunpack.c.l.b16 %v1114
      %v1890 = vunpack.c.l.b16 %v1115
      %v1891 = vunpack.c.l.b16 %v1116
      %v1892 = vunpack.c.l.b16 %v1117
      %v1893 = vunpack.c.l.b16 %v1118
      %v1894 = vunpack.c.l.b16 %v1119
      %v1895 = vunpack.c.l.b16 %v1120
      %v1896 = vunpack.c.l.b16 %v1121
      %v1897 = vunpack.c.l.b16 %v1122
      %v1898 = vunpack.c.l.b16 %v1123
      %v1899 = vunpack.c.l.b16 %v1124
      %v1900 = vunpack.c.l.b16 %v1125
      %v1901 = vunpack.c.l.b16 %v1126
      %v1902 = vunpack.c.l.b16 %v1127
      %v1903 = vunpack.c.l.b16 %v1128
      %v1904 = vunpack.c.l.b16 %v1129
      %v1905 = vunpack.c.l.b16 %v1130
      %v1906 = vunpack.c.l.b16 %v1131
      %v1907 = vunpack.c.l.b16 %v1132
      %v1908 = vunpack.c.l.b16 %v1133
      %v1909 = vunpack.c.l.b16 %v1134
      %v1910 = vunpack.c.l.b16 %v1135
      %v1911 = vunpack.c.l.b16 %v1136
      %v1912 = vunpack.c.l.b16 %v1137
      %v1913 = vunpack.c.l.b16 %v1138
      %v1914 = vunpack.c.l.b16 %v1139
      %v1915 = vunpack.c.l.b16 %v1140
      %v1916 = vunpack.c.l.b16 %v1141
      %v1917 = vunpack.c.l.b16 %v1142
      %v1918 = vunpack.c.l.b16 %v1143
      %v1919 = vunpack.c.l.b16 %v1144
      %v1920 = vunpack.c.l.b16 %v1145
      %v1921 = vunpack.c.l.b16 %v1146
      %v1922 = vunpack.c.l.b16 %v1147
      %v1923 = vunpack.c.l.b16 %v1148
      %v1924 = vunpack.c.l.b16 %v1149
      %v1925 = vunpack.c.l.b16 %v1150
      %v1926 = vunpack.c.l.b16 %v1151
      %v1927 = vunpack.c.l.b16 %v1152
      %v1928 = vunpack.c.l.b16 %v1153
      %v1929 = vunpack.c.l.b16 %v1154
      %v1930 = vunpack.c.l.b16 %v1155
      %v1931 = vunpack.c.l.b16 %v1156
      %v1932 = vunpack.c.l.b16 %v1157
      %v1933 = vunpack.c.l.b16 %v1158
      %v1934 = vunpack.c.l.b16 %v1159
      %v1935 = vunpack.c.l.b16 %v1160
      %v1936 = vunpack.c.l.b16 %v1161
      %v1937 = vunpack.c.l.b16 %v1162
      %v1938 = vunpack.c.l.b16 %v1163
      %v1939 = vunpack.c.l.b16 %v1164
      %v1940 = vunpack.c.l.b16 %v1165
      %v1941 = vunpack.c.l.b16 %v1166
      %v1942 = vunpack.c.l.b16 %v1167
      %v1943 = vpack.c.b16 %v1688, %v1687
      %v1944 = vpack.c.b16 %v1690, %v1689
      %v1945 = vpack.c.b16 %v1692, %v1691
      %v1946 = vpack.c.b16 %v1694, %v1693
      %v1947 = vpack.c.b16 %v1696, %v1695
      %v1948 = vpack.c.b16 %v1698, %v1697
      %v1949 = vpack.c.b16 %v1700, %v1699
      %v1950 = vpack.c.b16 %v1702, %v1701
      %v1951 = vpack.c.b16 %v1704, %v1703
      %v1952 = vpack.c.b16 %v1706, %v1705
      %v1953 = vpack.c.b16 %v1708, %v1707
      %v1954 = vpack.c.b16 %v1710, %v1709
      %v1955 = vpack.c.b16 %v1712, %v1711
      %v1956 = vpack.c.b16 %v1714, %v1713
      %v1957 = vpack.c.b16 %v1716, %v1715
      %v1958 = vpack.c.b16 %v1718, %v1717
      %v1959 = vpack.c.b16 %v1720, %v1719
      %v1960 = vpack.c.b16 %v1722, %v1721
      %v1961 = vpack.c.b16 %v1724, %v1723
      %v1962 = vpack.c.b16 %v1726, %v1725
      %v1963 = vpack.c.b16 %v1728, %v1727
      %v1964 = vpack.c.b16 %v1730, %v1729
      %v1965 = vpack.c.b16 %v1732, %v1731
      %v1966 = vpack.c.b16 %v1734, %v1733
      %v1967 = vpack.c.b16 %v1736, %v1735
      %v1968 = vpack.c.b16 %v1738, %v1737
      %v1969 = vpack.c.b16 %v1740, %v1739
      %v1970 = vpack.c.b16 %v1742, %v1741
      %v1971 = vpack.c.b16 %v1744, %v1743
      %v1972 = vpack.c.b16 %v1746, %v1745
      %v1973 = vpack.c.b16 %v1748, %v1747
      %v1974 = vpack.c.b16 %v1750, %v1749
      %v1975 = vpack.c.b16 %v1752, %v1751
      %v1976 = vpack.c.b16 %v1754, %v1753
      %v1977 = vpack.c.b16 %v1756, %v1755
      %v1978 = vpack.c.b16 %v1758, %v1757
      %v1979 = vpack.c.b16 %v1760, %v1759
      %v1980 = vpack.c.b16 %v1762, %v1761
      %v1981 = vpack.c.b16 %v1764, %v1763
      %v1982 = vpack.c.b16 %v1766, %v1765
      %v1983 = vpack.c.b16 %v1768, %v1767
      %v1984 = vpack.c.b16 %v1770, %v1769
      %v1985 = vpack.c.b16 %v1772, %v1771
      %v1986 = vpack.c.b16 %v1774, %v1773
      %v1987 = vpack.c.b16 %v1776, %v1775
      %v1988 = vpack.c.b16 %v1778, %v1777
      %v1989 = vpack.c.b16 %v1780, %v1779
      %v1990 = vpack.c.b16 %v1782, %v1781
      %v1991 = vpack.c.b16 %v1784, %v1783
      %v1992 = vpack.c.b16 %v1786, %v1785
      %v1993 = vpack.c.b16 %v1788, %v1787
      %v1994 = vpack.c.b16 %v1790, %v1789
      %v1995 = vpack.c.b16 %v1792, %v1791
      %v1996 = vpack.c.b16 %v1794, %v1793
      %v1997 = vpack.c.b16 %v1796, %v1795
      %v1998 = vpack.c.b16 %v1798, %v1797
      %v1999 = vpack.c.b16 %v1800, %v1799
      %v2000 = vpack.c.b16 %v1802, %v1801
      %v2001 = vpack.c.b16 %v1804, %v1803
      %v2002 = vpack.c.b16 %v1806, %v1805
      %v2003 = vpack.c.b16 %v1808, %v1807
      %v2004 = vpack.c.b16 %v1810, %v1809
      %v2005 = vpack.c.b16 %v1812, %v1811
      %v2006 = vpack.c.b16 %v1814, %v1813
      %v2007 = vpack.c.b16 %v1816, %v1815
      %v2008 = vpack.c.b16 %v1818, %v1817
      %v2009 = vpack.c.b16 %v1820, %v1819
      %v2010 = vpack.c.b16 %v1822, %v1821
      %v2011 = vpack.c.b16 %v1824, %v1823
      %v2012 = vpack.c.b16 %v1826, %v1825
      %v2013 = vpack.c.b16 %v1828, %v1827
      %v2014 = vpack.c.b16 %v1830, %v1829
      %v2015 = vpack.c.b16 %v1832, %v1831
      %v2016 = vpack.c.b16 %v1834, %v1833
      %v2017 = vpack.c.b16 %v1836, %v1835
      %v2018 = vpack.c.b16 %v1838, %v1837
      %v2019 = vpack.c.b16 %v1840, %v1839
      %v2020 = vpack.c.b16 %v1842, %v1841
      %v2021 = vpack.c.b16 %v1844, %v1843
      %v2022 = vpack.c.b16 %v1846, %v1845
      %v2023 = vpack.c.b16 %v1848, %v1847
      %v2024 = vpack.c.b16 %v1850, %v1849
      %v2025 = vpack.c.b16 %v1852, %v1851
      %v2026 = vpack.c.b16 %v1854, %v1853
      %v2027 = vpack.c.b16 %v1856, %v1855
      %v2028 = vpack.c.b16 %v1858, %v1857
      %v2029 = vpack.c.b16 %v1860, %v1859
      %v2030 = vpack.c.b16 %v1862, %v1861
      %v2031 = vpack.c.b16 %v1864, %v1863
      %v2032 = vpack.c.b16 %v1866, %v1865
      %v2033 = vpack.c.b16 %v1868, %v1867
      %v2034 = vpack.c.b16 %v1870, %v1869
      %v2035 = vpack.c.b16 %v1872, %v1871
      %v2036 = vpack.c.b16 %v1874, %v1873
      %v2037 = vpack.c.b16 %v1876, %v1875
      %v2038 = vpack.c.b16 %v1878, %v1877
      %v2039 = vpack.c.b16 %v1880, %v1879
      %v2040 = vpack.c.b16 %v1882, %v1881
      %v2041 = vpack.c.b16 %v1884, %v1883
      %v2042 = vpack.c.b16 %v1886, %v1885
      %v2043 = vpack.c.b16 %v1888, %v1887
      %v2044 = vpack.c.b16 %v1890, %v1889
      %v2045 = vpack.c.b16 %v1892, %v1891
      %v2046 = vpack.c.b16 %v1894, %v1893
      %v2047 = vpack.c.b16 %v1896, %v1895
      %v2048 = vpack.c.b16 %v1898, %v1897
      %v2049 = vpack.c.b16 %v1900, %v1899
      %v2050 = vpack.c.b16 %v1902, %v1901
      %v2051 = vpack.c.b16 %v1904, %v1903
      %v2052 = vpack.c.b16 %v1906, %v1905
      %v2053 = vpack.c.b16 %v1908, %v1907
      %v2054 = vpack.c.b16 %v1910, %v1909
      %v2055 = vpack.c.b16 %v1912, %v1911
      %v2056 = vpack.c.b16 %v1914, %v1913
      %v2057 = vpack.c.b16 %v1916, %v1915
      %v2058 = vpack.c.b16 %v1918, %v1917
      %v2059 = vpack.c.b16 %v1920, %v1919
      %v2060 = vpack.c.b16 %v1922, %v1921
      %v2061 = vpack.c.b16 %v1924, %v1923
      %v2062 = vpack.c.b16 %v1926, %v1925
      %v2063 = vpack.c.b16 %v1928, %v1927
      %v2064 = vpack.c.b16 %v1930, %v1929
      %v2065 = vpack.c.b16 %v1932, %v1931
      %v2066 = vpack.c.b16 %v1934, %v1933
      %v2067 = vpack.c.b16 %v1936, %v1935
      %v2068 = vpack.c.b16 %v1938, %v1937
      %v2069 = vpack.c.b16 %v1940, %v1939
      %v2070 = vpack.c.b16 %v1942, %v1941
      %2199 = vxpose.xlu0.c.b16.start [1/8] %v1943, 128
      %2200 = vxpose.xlu0.c.b16.cont [2/8] %v1944, 128
      %2201 = vxpose.xlu0.c.b16.cont [3/8] %v1945, 128
      %2202 = vxpose.xlu0.c.b16.cont [4/8] %v1946, 128
      %2203 = vxpose.xlu0.c.b16.cont [5/8] %v1947, 128
      %2204 = vxpose.xlu0.c.b16.cont [6/8] %v1948, 128
      %2205 = vxpose.xlu0.c.b16.cont [7/8] %v1949, 128
      %2206 = vxpose.xlu0.c.b16.end [8/8] %v1950, 128
      %v2207 = vpop.trf.xlu0
      %v2208 = vpop.trf.xlu0
      %v2209 = vpop.trf.xlu0
      %v2210 = vpop.trf.xlu0
      %v2211 = vpop.trf.xlu0
      %v2212 = vpop.trf.xlu0
      %v2213 = vpop.trf.xlu0
      %v2214 = vpop.trf.xlu0
      %2215 = vxpose.xlu0.c.b16.start [1/8] %v1951, 128
      %2216 = vxpose.xlu0.c.b16.cont [2/8] %v1952, 128
      %2217 = vxpose.xlu0.c.b16.cont [3/8] %v1953, 128
      %2218 = vxpose.xlu0.c.b16.cont [4/8] %v1954, 128
      %2219 = vxpose.xlu0.c.b16.cont [5/8] %v1955, 128
      %2220 = vxpose.xlu0.c.b16.cont [6/8] %v1956, 128
      %2221 = vxpose.xlu0.c.b16.cont [7/8] %v1957, 128
      %2222 = vxpose.xlu0.c.b16.end [8/8] %v1958, 128
      %v2223 = vpop.trf.xlu0
      %v2224 = vpop.trf.xlu0
      %v2225 = vpop.trf.xlu0
      %v2226 = vpop.trf.xlu0
      %v2227 = vpop.trf.xlu0
      %v2228 = vpop.trf.xlu0
      %v2229 = vpop.trf.xlu0
      %v2230 = vpop.trf.xlu0
      %2231 = vxpose.xlu0.c.b16.start [1/8] %v1959, 128
      %2232 = vxpose.xlu0.c.b16.cont [2/8] %v1960, 128
      %2233 = vxpose.xlu0.c.b16.cont [3/8] %v1961, 128
      %2234 = vxpose.xlu0.c.b16.cont [4/8] %v1962, 128
      %2235 = vxpose.xlu0.c.b16.cont [5/8] %v1963, 128
      %2236 = vxpose.xlu0.c.b16.cont [6/8] %v1964, 128
      %2237 = vxpose.xlu0.c.b16.cont [7/8] %v1965, 128
      %2238 = vxpose.xlu0.c.b16.end [8/8] %v1966, 128
      %v2239 = vpop.trf.xlu0
      %v2240 = vpop.trf.xlu0
      %v2241 = vpop.trf.xlu0
      %v2242 = vpop.trf.xlu0
      %v2243 = vpop.trf.xlu0
      %v2244 = vpop.trf.xlu0
      %v2245 = vpop.trf.xlu0
      %v2246 = vpop.trf.xlu0
      %2247 = vxpose.xlu0.c.b16.start [1/8] %v1967, 128
      %2248 = vxpose.xlu0.c.b16.cont [2/8] %v1968, 128
      %2249 = vxpose.xlu0.c.b16.cont [3/8] %v1969, 128
      %2250 = vxpose.xlu0.c.b16.cont [4/8] %v1970, 128
      %2251 = vxpose.xlu0.c.b16.cont [5/8] %v1971, 128
      %2252 = vxpose.xlu0.c.b16.cont [6/8] %v1972, 128
      %2253 = vxpose.xlu0.c.b16.cont [7/8] %v1973, 128
      %2254 = vxpose.xlu0.c.b16.end [8/8] %v1974, 128
      %v2255 = vpop.trf.xlu0
      %v2256 = vpop.trf.xlu0
      %v2257 = vpop.trf.xlu0
      %v2258 = vpop.trf.xlu0
      %v2259 = vpop.trf.xlu0
      %v2260 = vpop.trf.xlu0
      %v2261 = vpop.trf.xlu0
      %v2262 = vpop.trf.xlu0
      %2263 = vxpose.xlu0.c.b16.start [1/8] %v1975, 128
      %2264 = vxpose.xlu0.c.b16.cont [2/8] %v1976, 128
      %2265 = vxpose.xlu0.c.b16.cont [3/8] %v1977, 128
      %2266 = vxpose.xlu0.c.b16.cont [4/8] %v1978, 128
      %2267 = vxpose.xlu0.c.b16.cont [5/8] %v1979, 128
      %2268 = vxpose.xlu0.c.b16.cont [6/8] %v1980, 128
      %2269 = vxpose.xlu0.c.b16.cont [7/8] %v1981, 128
      %2270 = vxpose.xlu0.c.b16.end [8/8] %v1982, 128
      %v2271 = vpop.trf.xlu0
      %v2272 = vpop.trf.xlu0
      %v2273 = vpop.trf.xlu0
      %v2274 = vpop.trf.xlu0
      %v2275 = vpop.trf.xlu0
      %v2276 = vpop.trf.xlu0
      %v2277 = vpop.trf.xlu0
      %v2278 = vpop.trf.xlu0
      %2279 = vxpose.xlu0.c.b16.start [1/8] %v1983, 128
      %2280 = vxpose.xlu0.c.b16.cont [2/8] %v1984, 128
      %2281 = vxpose.xlu0.c.b16.cont [3/8] %v1985, 128
      %2282 = vxpose.xlu0.c.b16.cont [4/8] %v1986, 128
      %2283 = vxpose.xlu0.c.b16.cont [5/8] %v1987, 128
      %2284 = vxpose.xlu0.c.b16.cont [6/8] %v1988, 128
      %2285 = vxpose.xlu0.c.b16.cont [7/8] %v1989, 128
      %2286 = vxpose.xlu0.c.b16.end [8/8] %v1990, 128
      %v2287 = vpop.trf.xlu0
      %v2288 = vpop.trf.xlu0
      %v2289 = vpop.trf.xlu0
      %v2290 = vpop.trf.xlu0
      %v2291 = vpop.trf.xlu0
      %v2292 = vpop.trf.xlu0
      %v2293 = vpop.trf.xlu0
      %v2294 = vpop.trf.xlu0
      %2295 = vxpose.xlu0.c.b16.start [1/8] %v1991, 128
      %2296 = vxpose.xlu0.c.b16.cont [2/8] %v1992, 128
      %2297 = vxpose.xlu0.c.b16.cont [3/8] %v1993, 128
      %2298 = vxpose.xlu0.c.b16.cont [4/8] %v1994, 128
      %2299 = vxpose.xlu0.c.b16.cont [5/8] %v1995, 128
      %2300 = vxpose.xlu0.c.b16.cont [6/8] %v1996, 128
      %2301 = vxpose.xlu0.c.b16.cont [7/8] %v1997, 128
      %2302 = vxpose.xlu0.c.b16.end [8/8] %v1998, 128
      %v2303 = vpop.trf.xlu0
      %v2304 = vpop.trf.xlu0
      %v2305 = vpop.trf.xlu0
      %v2306 = vpop.trf.xlu0
      %v2307 = vpop.trf.xlu0
      %v2308 = vpop.trf.xlu0
      %v2309 = vpop.trf.xlu0
      %v2310 = vpop.trf.xlu0
      %2311 = vxpose.xlu0.c.b16.start [1/8] %v1999, 128
      %2312 = vxpose.xlu0.c.b16.cont [2/8] %v2000, 128
      %2313 = vxpose.xlu0.c.b16.cont [3/8] %v2001, 128
      %2314 = vxpose.xlu0.c.b16.cont [4/8] %v2002, 128
      %2315 = vxpose.xlu0.c.b16.cont [5/8] %v2003, 128
      %2316 = vxpose.xlu0.c.b16.cont [6/8] %v2004, 128
      %2317 = vxpose.xlu0.c.b16.cont [7/8] %v2005, 128
      %2318 = vxpose.xlu0.c.b16.end [8/8] %v2006, 128
      %v2319 = vpop.trf.xlu0
      %v2320 = vpop.trf.xlu0
      %v2321 = vpop.trf.xlu0
      %v2322 = vpop.trf.xlu0
      %v2323 = vpop.trf.xlu0
      %v2324 = vpop.trf.xlu0
      %v2325 = vpop.trf.xlu0
      %v2326 = vpop.trf.xlu0
      %2327 = vxpose.xlu0.c.b16.start [1/8] %v2007, 128
      %2328 = vxpose.xlu0.c.b16.cont [2/8] %v2008, 128
      %2329 = vxpose.xlu0.c.b16.cont [3/8] %v2009, 128
      %2330 = vxpose.xlu0.c.b16.cont [4/8] %v2010, 128
      %2331 = vxpose.xlu0.c.b16.cont [5/8] %v2011, 128
      %2332 = vxpose.xlu0.c.b16.cont [6/8] %v2012, 128
      %2333 = vxpose.xlu0.c.b16.cont [7/8] %v2013, 128
      %2334 = vxpose.xlu0.c.b16.end [8/8] %v2014, 128
      %v2335 = vpop.trf.xlu0
      %v2336 = vpop.trf.xlu0
      %v2337 = vpop.trf.xlu0
      %v2338 = vpop.trf.xlu0
      %v2339 = vpop.trf.xlu0
      %v2340 = vpop.trf.xlu0
      %v2341 = vpop.trf.xlu0
      %v2342 = vpop.trf.xlu0
      %2343 = vxpose.xlu0.c.b16.start [1/8] %v2015, 128
      %2344 = vxpose.xlu0.c.b16.cont [2/8] %v2016, 128
      %2345 = vxpose.xlu0.c.b16.cont [3/8] %v2017, 128
      %2346 = vxpose.xlu0.c.b16.cont [4/8] %v2018, 128
      %2347 = vxpose.xlu0.c.b16.cont [5/8] %v2019, 128
      %2348 = vxpose.xlu0.c.b16.cont [6/8] %v2020, 128
      %2349 = vxpose.xlu0.c.b16.cont [7/8] %v2021, 128
      %2350 = vxpose.xlu0.c.b16.end [8/8] %v2022, 128
      %v2351 = vpop.trf.xlu0
      %v2352 = vpop.trf.xlu0
      %v2353 = vpop.trf.xlu0
      %v2354 = vpop.trf.xlu0
      %v2355 = vpop.trf.xlu0
      %v2356 = vpop.trf.xlu0
      %v2357 = vpop.trf.xlu0
      %v2358 = vpop.trf.xlu0
      %2359 = vxpose.xlu0.c.b16.start [1/8] %v2023, 128
      %2360 = vxpose.xlu0.c.b16.cont [2/8] %v2024, 128
      %2361 = vxpose.xlu0.c.b16.cont [3/8] %v2025, 128
      %2362 = vxpose.xlu0.c.b16.cont [4/8] %v2026, 128
      %2363 = vxpose.xlu0.c.b16.cont [5/8] %v2027, 128
      %2364 = vxpose.xlu0.c.b16.cont [6/8] %v2028, 128
      %2365 = vxpose.xlu0.c.b16.cont [7/8] %v2029, 128
      %2366 = vxpose.xlu0.c.b16.end [8/8] %v2030, 128
      %v2367 = vpop.trf.xlu0
      %v2368 = vpop.trf.xlu0
      %v2369 = vpop.trf.xlu0
      %v2370 = vpop.trf.xlu0
      %v2371 = vpop.trf.xlu0
      %v2372 = vpop.trf.xlu0
      %v2373 = vpop.trf.xlu0
      %v2374 = vpop.trf.xlu0
      %2375 = vxpose.xlu0.c.b16.start [1/8] %v2031, 128
      %2376 = vxpose.xlu0.c.b16.cont [2/8] %v2032, 128
      %2377 = vxpose.xlu0.c.b16.cont [3/8] %v2033, 128
      %2378 = vxpose.xlu0.c.b16.cont [4/8] %v2034, 128
      %2379 = vxpose.xlu0.c.b16.cont [5/8] %v2035, 128
      %2380 = vxpose.xlu0.c.b16.cont [6/8] %v2036, 128
      %2381 = vxpose.xlu0.c.b16.cont [7/8] %v2037, 128
      %2382 = vxpose.xlu0.c.b16.end [8/8] %v2038, 128
      %v2383 = vpop.trf.xlu0
      %v2384 = vpop.trf.xlu0
      %v2385 = vpop.trf.xlu0
      %v2386 = vpop.trf.xlu0
      %v2387 = vpop.trf.xlu0
      %v2388 = vpop.trf.xlu0
      %v2389 = vpop.trf.xlu0
      %v2390 = vpop.trf.xlu0
      %2391 = vxpose.xlu0.c.b16.start [1/8] %v2039, 128
      %2392 = vxpose.xlu0.c.b16.cont [2/8] %v2040, 128
      %2393 = vxpose.xlu0.c.b16.cont [3/8] %v2041, 128
      %2394 = vxpose.xlu0.c.b16.cont [4/8] %v2042, 128
      %2395 = vxpose.xlu0.c.b16.cont [5/8] %v2043, 128
      %2396 = vxpose.xlu0.c.b16.cont [6/8] %v2044, 128
      %2397 = vxpose.xlu0.c.b16.cont [7/8] %v2045, 128
      %2398 = vxpose.xlu0.c.b16.end [8/8] %v2046, 128
      %v2399 = vpop.trf.xlu0
      %v2400 = vpop.trf.xlu0
      %v2401 = vpop.trf.xlu0
      %v2402 = vpop.trf.xlu0
      %v2403 = vpop.trf.xlu0
      %v2404 = vpop.trf.xlu0
      %v2405 = vpop.trf.xlu0
      %v2406 = vpop.trf.xlu0
      %2407 = vxpose.xlu0.c.b16.start [1/8] %v2047, 128
      %2408 = vxpose.xlu0.c.b16.cont [2/8] %v2048, 128
      %2409 = vxpose.xlu0.c.b16.cont [3/8] %v2049, 128
      %2410 = vxpose.xlu0.c.b16.cont [4/8] %v2050, 128
      %2411 = vxpose.xlu0.c.b16.cont [5/8] %v2051, 128
      %2412 = vxpose.xlu0.c.b16.cont [6/8] %v2052, 128
      %2413 = vxpose.xlu0.c.b16.cont [7/8] %v2053, 128
      %2414 = vxpose.xlu0.c.b16.end [8/8] %v2054, 128
      %v2415 = vpop.trf.xlu0
      %v2416 = vpop.trf.xlu0
      %v2417 = vpop.trf.xlu0
      %v2418 = vpop.trf.xlu0
      %v2419 = vpop.trf.xlu0
      %v2420 = vpop.trf.xlu0
      %v2421 = vpop.trf.xlu0
      %v2422 = vpop.trf.xlu0
      %2423 = vxpose.xlu0.c.b16.start [1/8] %v2055, 128
      %2424 = vxpose.xlu0.c.b16.cont [2/8] %v2056, 128
      %2425 = vxpose.xlu0.c.b16.cont [3/8] %v2057, 128
      %2426 = vxpose.xlu0.c.b16.cont [4/8] %v2058, 128
      %2427 = vxpose.xlu0.c.b16.cont [5/8] %v2059, 128
      %2428 = vxpose.xlu0.c.b16.cont [6/8] %v2060, 128
      %2429 = vxpose.xlu0.c.b16.cont [7/8] %v2061, 128
      %2430 = vxpose.xlu0.c.b16.end [8/8] %v2062, 128
      %v2431 = vpop.trf.xlu0
      %v2432 = vpop.trf.xlu0
      %v2433 = vpop.trf.xlu0
      %v2434 = vpop.trf.xlu0
      %v2435 = vpop.trf.xlu0
      %v2436 = vpop.trf.xlu0
      %v2437 = vpop.trf.xlu0
      %v2438 = vpop.trf.xlu0
      %2439 = vxpose.xlu0.c.b16.start [1/8] %v2063, 128
      %2440 = vxpose.xlu0.c.b16.cont [2/8] %v2064, 128
      %2441 = vxpose.xlu0.c.b16.cont [3/8] %v2065, 128
      %2442 = vxpose.xlu0.c.b16.cont [4/8] %v2066, 128
      %2443 = vxpose.xlu0.c.b16.cont [5/8] %v2067, 128
      %2444 = vxpose.xlu0.c.b16.cont [6/8] %v2068, 128
      %2445 = vxpose.xlu0.c.b16.cont [7/8] %v2069, 128
      %2446 = vxpose.xlu0.c.b16.end [8/8] %v2070, 128
      %v2447 = vpop.trf.xlu0
      %v2448 = vpop.trf.xlu0
      %v2449 = vpop.trf.xlu0
      %v2450 = vpop.trf.xlu0
      %v2451 = vpop.trf.xlu0
      %v2452 = vpop.trf.xlu0
      %v2453 = vpop.trf.xlu0
      %v2454 = vpop.trf.xlu0
      %v2711 = vunpack.c.l.b16 %v1168
      %v2712 = vunpack.c.l.b16 %v1169
      %v2713 = vunpack.c.l.b16 %v1170
      %v2714 = vunpack.c.l.b16 %v1171
      %v2715 = vunpack.c.l.b16 %v1172
      %v2716 = vunpack.c.l.b16 %v1173
      %v2717 = vunpack.c.l.b16 %v1174
      %v2718 = vunpack.c.l.b16 %v1175
      %v2719 = vunpack.c.l.b16 %v1176
      %v2720 = vunpack.c.l.b16 %v1177
      %v2721 = vunpack.c.l.b16 %v1178
      %v2722 = vunpack.c.l.b16 %v1179
      %v2723 = vunpack.c.l.b16 %v1180
      %v2724 = vunpack.c.l.b16 %v1181
      %v2725 = vunpack.c.l.b16 %v1182
      %v2726 = vunpack.c.l.b16 %v1183
      %v2727 = vunpack.c.l.b16 %v1184
      %v2728 = vunpack.c.l.b16 %v1185
      %v2729 = vunpack.c.l.b16 %v1186
      %v2730 = vunpack.c.l.b16 %v1187
      %v2731 = vunpack.c.l.b16 %v1188
      %v2732 = vunpack.c.l.b16 %v1189
      %v2733 = vunpack.c.l.b16 %v1190
      %v2734 = vunpack.c.l.b16 %v1191
      %v2735 = vunpack.c.l.b16 %v1192
      %v2736 = vunpack.c.l.b16 %v1193
      %v2737 = vunpack.c.l.b16 %v1194
      %v2738 = vunpack.c.l.b16 %v1195
      %v2739 = vunpack.c.l.b16 %v1196
      %v2740 = vunpack.c.l.b16 %v1197
      %v2741 = vunpack.c.l.b16 %v1198
      %v2742 = vunpack.c.l.b16 %v1199
      %v2743 = vunpack.c.l.b16 %v1200
      %v2744 = vunpack.c.l.b16 %v1201
      %v2745 = vunpack.c.l.b16 %v1202
      %v2746 = vunpack.c.l.b16 %v1203
      %v2747 = vunpack.c.l.b16 %v1204
      %v2748 = vunpack.c.l.b16 %v1205
      %v2749 = vunpack.c.l.b16 %v1206
      %v2750 = vunpack.c.l.b16 %v1207
      %v2751 = vunpack.c.l.b16 %v1208
      %v2752 = vunpack.c.l.b16 %v1209
      %v2753 = vunpack.c.l.b16 %v1210
      %v2754 = vunpack.c.l.b16 %v1211
      %v2755 = vunpack.c.l.b16 %v1212
      %v2756 = vunpack.c.l.b16 %v1213
      %v2757 = vunpack.c.l.b16 %v1214
      %v2758 = vunpack.c.l.b16 %v1215
      %v2759 = vunpack.c.l.b16 %v1216
      %v2760 = vunpack.c.l.b16 %v1217
      %v2761 = vunpack.c.l.b16 %v1218
      %v2762 = vunpack.c.l.b16 %v1219
      %v2763 = vunpack.c.l.b16 %v1220
      %v2764 = vunpack.c.l.b16 %v1221
      %v2765 = vunpack.c.l.b16 %v1222
      %v2766 = vunpack.c.l.b16 %v1223
      %v2767 = vunpack.c.l.b16 %v1224
      %v2768 = vunpack.c.l.b16 %v1225
      %v2769 = vunpack.c.l.b16 %v1226
      %v2770 = vunpack.c.l.b16 %v1227
      %v2771 = vunpack.c.l.b16 %v1228
      %v2772 = vunpack.c.l.b16 %v1229
      %v2773 = vunpack.c.l.b16 %v1230
      %v2774 = vunpack.c.l.b16 %v1231
      %v2775 = vunpack.c.l.b16 %v1232
      %v2776 = vunpack.c.l.b16 %v1233
      %v2777 = vunpack.c.l.b16 %v1234
      %v2778 = vunpack.c.l.b16 %v1235
      %v2779 = vunpack.c.l.b16 %v1236
      %v2780 = vunpack.c.l.b16 %v1237
      %v2781 = vunpack.c.l.b16 %v1238
      %v2782 = vunpack.c.l.b16 %v1239
      %v2783 = vunpack.c.l.b16 %v1240
      %v2784 = vunpack.c.l.b16 %v1241
      %v2785 = vunpack.c.l.b16 %v1242
      %v2786 = vunpack.c.l.b16 %v1243
      %v2787 = vunpack.c.l.b16 %v1244
      %v2788 = vunpack.c.l.b16 %v1245
      %v2789 = vunpack.c.l.b16 %v1246
      %v2790 = vunpack.c.l.b16 %v1247
      %v2791 = vunpack.c.l.b16 %v1248
      %v2792 = vunpack.c.l.b16 %v1249
      %v2793 = vunpack.c.l.b16 %v1250
      %v2794 = vunpack.c.l.b16 %v1251
      %v2795 = vunpack.c.l.b16 %v1252
      %v2796 = vunpack.c.l.b16 %v1253
      %v2797 = vunpack.c.l.b16 %v1254
      %v2798 = vunpack.c.l.b16 %v1255
      %v2799 = vunpack.c.l.b16 %v1256
      %v2800 = vunpack.c.l.b16 %v1257
      %v2801 = vunpack.c.l.b16 %v1258
      %v2802 = vunpack.c.l.b16 %v1259
      %v2803 = vunpack.c.l.b16 %v1260
      %v2804 = vunpack.c.l.b16 %v1261
      %v2805 = vunpack.c.l.b16 %v1262
      %v2806 = vunpack.c.l.b16 %v1263
      %v2807 = vunpack.c.l.b16 %v1264
      %v2808 = vunpack.c.l.b16 %v1265
      %v2809 = vunpack.c.l.b16 %v1266
      %v2810 = vunpack.c.l.b16 %v1267
      %v2811 = vunpack.c.l.b16 %v1268
      %v2812 = vunpack.c.l.b16 %v1269
      %v2813 = vunpack.c.l.b16 %v1270
      %v2814 = vunpack.c.l.b16 %v1271
      %v2815 = vunpack.c.l.b16 %v1272
      %v2816 = vunpack.c.l.b16 %v1273
      %v2817 = vunpack.c.l.b16 %v1274
      %v2818 = vunpack.c.l.b16 %v1275
      %v2819 = vunpack.c.l.b16 %v1276
      %v2820 = vunpack.c.l.b16 %v1277
      %v2821 = vunpack.c.l.b16 %v1278
      %v2822 = vunpack.c.l.b16 %v1279
      %v2823 = vunpack.c.l.b16 %v1280
      %v2824 = vunpack.c.l.b16 %v1281
      %v2825 = vunpack.c.l.b16 %v1282
      %v2826 = vunpack.c.l.b16 %v1283
      %v2827 = vunpack.c.l.b16 %v1284
      %v2828 = vunpack.c.l.b16 %v1285
      %v2829 = vunpack.c.l.b16 %v1286
      %v2830 = vunpack.c.l.b16 %v1287
      %v2831 = vunpack.c.l.b16 %v1288
      %v2832 = vunpack.c.l.b16 %v1289
      %v2833 = vunpack.c.l.b16 %v1290
      %v2834 = vunpack.c.l.b16 %v1291
      %v2835 = vunpack.c.l.b16 %v1292
      %v2836 = vunpack.c.l.b16 %v1293
      %v2837 = vunpack.c.l.b16 %v1294
      %v2838 = vunpack.c.l.b16 %v1295
      %v2839 = vunpack.c.l.b16 %v1296
      %v2840 = vunpack.c.l.b16 %v1297
      %v2841 = vunpack.c.l.b16 %v1298
      %v2842 = vunpack.c.l.b16 %v1299
      %v2843 = vunpack.c.l.b16 %v1300
      %v2844 = vunpack.c.l.b16 %v1301
      %v2845 = vunpack.c.l.b16 %v1302
      %v2846 = vunpack.c.l.b16 %v1303
      %v2847 = vunpack.c.l.b16 %v1304
      %v2848 = vunpack.c.l.b16 %v1305
      %v2849 = vunpack.c.l.b16 %v1306
      %v2850 = vunpack.c.l.b16 %v1307
      %v2851 = vunpack.c.l.b16 %v1308
      %v2852 = vunpack.c.l.b16 %v1309
      %v2853 = vunpack.c.l.b16 %v1310
      %v2854 = vunpack.c.l.b16 %v1311
      %v2855 = vunpack.c.l.b16 %v1312
      %v2856 = vunpack.c.l.b16 %v1313
      %v2857 = vunpack.c.l.b16 %v1314
      %v2858 = vunpack.c.l.b16 %v1315
      %v2859 = vunpack.c.l.b16 %v1316
      %v2860 = vunpack.c.l.b16 %v1317
      %v2861 = vunpack.c.l.b16 %v1318
      %v2862 = vunpack.c.l.b16 %v1319
      %v2863 = vunpack.c.l.b16 %v1320
      %v2864 = vunpack.c.l.b16 %v1321
      %v2865 = vunpack.c.l.b16 %v1322
      %v2866 = vunpack.c.l.b16 %v1323
      %v2867 = vunpack.c.l.b16 %v1324
      %v2868 = vunpack.c.l.b16 %v1325
      %v2869 = vunpack.c.l.b16 %v1326
      %v2870 = vunpack.c.l.b16 %v1327
      %v2871 = vunpack.c.l.b16 %v1328
      %v2872 = vunpack.c.l.b16 %v1329
      %v2873 = vunpack.c.l.b16 %v1330
      %v2874 = vunpack.c.l.b16 %v1331
      %v2875 = vunpack.c.l.b16 %v1332
      %v2876 = vunpack.c.l.b16 %v1333
      %v2877 = vunpack.c.l.b16 %v1334
      %v2878 = vunpack.c.l.b16 %v1335
      %v2879 = vunpack.c.l.b16 %v1336
      %v2880 = vunpack.c.l.b16 %v1337
      %v2881 = vunpack.c.l.b16 %v1338
      %v2882 = vunpack.c.l.b16 %v1339
      %v2883 = vunpack.c.l.b16 %v1340
      %v2884 = vunpack.c.l.b16 %v1341
      %v2885 = vunpack.c.l.b16 %v1342
      %v2886 = vunpack.c.l.b16 %v1343
      %v2887 = vunpack.c.l.b16 %v1344
      %v2888 = vunpack.c.l.b16 %v1345
      %v2889 = vunpack.c.l.b16 %v1346
      %v2890 = vunpack.c.l.b16 %v1347
      %v2891 = vunpack.c.l.b16 %v1348
      %v2892 = vunpack.c.l.b16 %v1349
      %v2893 = vunpack.c.l.b16 %v1350
      %v2894 = vunpack.c.l.b16 %v1351
      %v2895 = vunpack.c.l.b16 %v1352
      %v2896 = vunpack.c.l.b16 %v1353
      %v2897 = vunpack.c.l.b16 %v1354
      %v2898 = vunpack.c.l.b16 %v1355
      %v2899 = vunpack.c.l.b16 %v1356
      %v2900 = vunpack.c.l.b16 %v1357
      %v2901 = vunpack.c.l.b16 %v1358
      %v2902 = vunpack.c.l.b16 %v1359
      %v2903 = vunpack.c.l.b16 %v1360
      %v2904 = vunpack.c.l.b16 %v1361
      %v2905 = vunpack.c.l.b16 %v1362
      %v2906 = vunpack.c.l.b16 %v1363
      %v2907 = vunpack.c.l.b16 %v1364
      %v2908 = vunpack.c.l.b16 %v1365
      %v2909 = vunpack.c.l.b16 %v1366
      %v2910 = vunpack.c.l.b16 %v1367
      %v2911 = vunpack.c.l.b16 %v1368
      %v2912 = vunpack.c.l.b16 %v1369
      %v2913 = vunpack.c.l.b16 %v1370
      %v2914 = vunpack.c.l.b16 %v1371
      %v2915 = vunpack.c.l.b16 %v1372
      %v2916 = vunpack.c.l.b16 %v1373
      %v2917 = vunpack.c.l.b16 %v1374
      %v2918 = vunpack.c.l.b16 %v1375
      %v2919 = vunpack.c.l.b16 %v1376
      %v2920 = vunpack.c.l.b16 %v1377
      %v2921 = vunpack.c.l.b16 %v1378
      %v2922 = vunpack.c.l.b16 %v1379
      %v2923 = vunpack.c.l.b16 %v1380
      %v2924 = vunpack.c.l.b16 %v1381
      %v2925 = vunpack.c.l.b16 %v1382
      %v2926 = vunpack.c.l.b16 %v1383
      %v2927 = vunpack.c.l.b16 %v1384
      %v2928 = vunpack.c.l.b16 %v1385
      %v2929 = vunpack.c.l.b16 %v1386
      %v2930 = vunpack.c.l.b16 %v1387
      %v2931 = vunpack.c.l.b16 %v1388
      %v2932 = vunpack.c.l.b16 %v1389
      %v2933 = vunpack.c.l.b16 %v1390
      %v2934 = vunpack.c.l.b16 %v1391
      %v2935 = vunpack.c.l.b16 %v1392
      %v2936 = vunpack.c.l.b16 %v1393
      %v2937 = vunpack.c.l.b16 %v1394
      %v2938 = vunpack.c.l.b16 %v1395
      %v2939 = vunpack.c.l.b16 %v1396
      %v2940 = vunpack.c.l.b16 %v1397
      %v2941 = vunpack.c.l.b16 %v1398
      %v2942 = vunpack.c.l.b16 %v1399
      %v2943 = vunpack.c.l.b16 %v1400
      %v2944 = vunpack.c.l.b16 %v1401
      %v2945 = vunpack.c.l.b16 %v1402
      %v2946 = vunpack.c.l.b16 %v1403
      %v2947 = vunpack.c.l.b16 %v1404
      %v2948 = vunpack.c.l.b16 %v1405
      %v2949 = vunpack.c.l.b16 %v1406
      %v2950 = vunpack.c.l.b16 %v1407
      %v2951 = vunpack.c.l.b16 %v1408
      %v2952 = vunpack.c.l.b16 %v1409
      %v2953 = vunpack.c.l.b16 %v1410
      %v2954 = vunpack.c.l.b16 %v1411
      %v2955 = vunpack.c.l.b16 %v1412
      %v2956 = vunpack.c.l.b16 %v1413
      %v2957 = vunpack.c.l.b16 %v1414
      %v2958 = vunpack.c.l.b16 %v1415
      %v2959 = vunpack.c.l.b16 %v1416
      %v2960 = vunpack.c.l.b16 %v1417
      %v2961 = vunpack.c.l.b16 %v1418
      %v2962 = vunpack.c.l.b16 %v1419
      %v2963 = vunpack.c.l.b16 %v1420
      %v2964 = vunpack.c.l.b16 %v1421
      %v2965 = vunpack.c.l.b16 %v1422
      %v2966 = vunpack.c.l.b16 %v1423
      %v2967 = vpack.c.b16 %v2712, %v2711
      %v2968 = vpack.c.b16 %v2714, %v2713
      %v2969 = vpack.c.b16 %v2716, %v2715
      %v2970 = vpack.c.b16 %v2718, %v2717
      %v2971 = vpack.c.b16 %v2720, %v2719
      %v2972 = vpack.c.b16 %v2722, %v2721
      %v2973 = vpack.c.b16 %v2724, %v2723
      %v2974 = vpack.c.b16 %v2726, %v2725
      %v2975 = vpack.c.b16 %v2728, %v2727
      %v2976 = vpack.c.b16 %v2730, %v2729
      %v2977 = vpack.c.b16 %v2732, %v2731
      %v2978 = vpack.c.b16 %v2734, %v2733
      %v2979 = vpack.c.b16 %v2736, %v2735
      %v2980 = vpack.c.b16 %v2738, %v2737
      %v2981 = vpack.c.b16 %v2740, %v2739
      %v2982 = vpack.c.b16 %v2742, %v2741
      %v2983 = vpack.c.b16 %v2744, %v2743
      %v2984 = vpack.c.b16 %v2746, %v2745
      %v2985 = vpack.c.b16 %v2748, %v2747
      %v2986 = vpack.c.b16 %v2750, %v2749
      %v2987 = vpack.c.b16 %v2752, %v2751
      %v2988 = vpack.c.b16 %v2754, %v2753
      %v2989 = vpack.c.b16 %v2756, %v2755
      %v2990 = vpack.c.b16 %v2758, %v2757
      %v2991 = vpack.c.b16 %v2760, %v2759
      %v2992 = vpack.c.b16 %v2762, %v2761
      %v2993 = vpack.c.b16 %v2764, %v2763
      %v2994 = vpack.c.b16 %v2766, %v2765
      %v2995 = vpack.c.b16 %v2768, %v2767
      %v2996 = vpack.c.b16 %v2770, %v2769
      %v2997 = vpack.c.b16 %v2772, %v2771
      %v2998 = vpack.c.b16 %v2774, %v2773
      %v2999 = vpack.c.b16 %v2776, %v2775
      %v3000 = vpack.c.b16 %v2778, %v2777
      %v3001 = vpack.c.b16 %v2780, %v2779
      %v3002 = vpack.c.b16 %v2782, %v2781
      %v3003 = vpack.c.b16 %v2784, %v2783
      %v3004 = vpack.c.b16 %v2786, %v2785
      %v3005 = vpack.c.b16 %v2788, %v2787
      %v3006 = vpack.c.b16 %v2790, %v2789
      %v3007 = vpack.c.b16 %v2792, %v2791
      %v3008 = vpack.c.b16 %v2794, %v2793
      %v3009 = vpack.c.b16 %v2796, %v2795
      %v3010 = vpack.c.b16 %v2798, %v2797
      %v3011 = vpack.c.b16 %v2800, %v2799
      %v3012 = vpack.c.b16 %v2802, %v2801
      %v3013 = vpack.c.b16 %v2804, %v2803
      %v3014 = vpack.c.b16 %v2806, %v2805
      %v3015 = vpack.c.b16 %v2808, %v2807
      %v3016 = vpack.c.b16 %v2810, %v2809
      %v3017 = vpack.c.b16 %v2812, %v2811
      %v3018 = vpack.c.b16 %v2814, %v2813
      %v3019 = vpack.c.b16 %v2816, %v2815
      %v3020 = vpack.c.b16 %v2818, %v2817
      %v3021 = vpack.c.b16 %v2820, %v2819
      %v3022 = vpack.c.b16 %v2822, %v2821
      %v3023 = vpack.c.b16 %v2824, %v2823
      %v3024 = vpack.c.b16 %v2826, %v2825
      %v3025 = vpack.c.b16 %v2828, %v2827
      %v3026 = vpack.c.b16 %v2830, %v2829
      %v3027 = vpack.c.b16 %v2832, %v2831
      %v3028 = vpack.c.b16 %v2834, %v2833
      %v3029 = vpack.c.b16 %v2836, %v2835
      %v3030 = vpack.c.b16 %v2838, %v2837
      %v3031 = vpack.c.b16 %v2840, %v2839
      %v3032 = vpack.c.b16 %v2842, %v2841
      %v3033 = vpack.c.b16 %v2844, %v2843
      %v3034 = vpack.c.b16 %v2846, %v2845
      %v3035 = vpack.c.b16 %v2848, %v2847
      %v3036 = vpack.c.b16 %v2850, %v2849
      %v3037 = vpack.c.b16 %v2852, %v2851
      %v3038 = vpack.c.b16 %v2854, %v2853
      %v3039 = vpack.c.b16 %v2856, %v2855
      %v3040 = vpack.c.b16 %v2858, %v2857
      %v3041 = vpack.c.b16 %v2860, %v2859
      %v3042 = vpack.c.b16 %v2862, %v2861
      %v3043 = vpack.c.b16 %v2864, %v2863
      %v3044 = vpack.c.b16 %v2866, %v2865
      %v3045 = vpack.c.b16 %v2868, %v2867
      %v3046 = vpack.c.b16 %v2870, %v2869
      %v3047 = vpack.c.b16 %v2872, %v2871
      %v3048 = vpack.c.b16 %v2874, %v2873
      %v3049 = vpack.c.b16 %v2876, %v2875
      %v3050 = vpack.c.b16 %v2878, %v2877
      %v3051 = vpack.c.b16 %v2880, %v2879
      %v3052 = vpack.c.b16 %v2882, %v2881
      %v3053 = vpack.c.b16 %v2884, %v2883
      %v3054 = vpack.c.b16 %v2886, %v2885
      %v3055 = vpack.c.b16 %v2888, %v2887
      %v3056 = vpack.c.b16 %v2890, %v2889
      %v3057 = vpack.c.b16 %v2892, %v2891
      %v3058 = vpack.c.b16 %v2894, %v2893
      %v3059 = vpack.c.b16 %v2896, %v2895
      %v3060 = vpack.c.b16 %v2898, %v2897
      %v3061 = vpack.c.b16 %v2900, %v2899
      %v3062 = vpack.c.b16 %v2902, %v2901
      %v3063 = vpack.c.b16 %v2904, %v2903
      %v3064 = vpack.c.b16 %v2906, %v2905
      %v3065 = vpack.c.b16 %v2908, %v2907
      %v3066 = vpack.c.b16 %v2910, %v2909
      %v3067 = vpack.c.b16 %v2912, %v2911
      %v3068 = vpack.c.b16 %v2914, %v2913
      %v3069 = vpack.c.b16 %v2916, %v2915
      %v3070 = vpack.c.b16 %v2918, %v2917
      %v3071 = vpack.c.b16 %v2920, %v2919
      %v3072 = vpack.c.b16 %v2922, %v2921
      %v3073 = vpack.c.b16 %v2924, %v2923
      %v3074 = vpack.c.b16 %v2926, %v2925
      %v3075 = vpack.c.b16 %v2928, %v2927
      %v3076 = vpack.c.b16 %v2930, %v2929
      %v3077 = vpack.c.b16 %v2932, %v2931
      %v3078 = vpack.c.b16 %v2934, %v2933
      %v3079 = vpack.c.b16 %v2936, %v2935
      %v3080 = vpack.c.b16 %v2938, %v2937
      %v3081 = vpack.c.b16 %v2940, %v2939
      %v3082 = vpack.c.b16 %v2942, %v2941
      %v3083 = vpack.c.b16 %v2944, %v2943
      %v3084 = vpack.c.b16 %v2946, %v2945
      %v3085 = vpack.c.b16 %v2948, %v2947
      %v3086 = vpack.c.b16 %v2950, %v2949
      %v3087 = vpack.c.b16 %v2952, %v2951
      %v3088 = vpack.c.b16 %v2954, %v2953
      %v3089 = vpack.c.b16 %v2956, %v2955
      %v3090 = vpack.c.b16 %v2958, %v2957
      %v3091 = vpack.c.b16 %v2960, %v2959
      %v3092 = vpack.c.b16 %v2962, %v2961
      %v3093 = vpack.c.b16 %v2964, %v2963
      %v3094 = vpack.c.b16 %v2966, %v2965
      %3223 = vmatprep.subr.bf16.mxu0 0
      %3224 = vmatpush1.bf16.msra.mxu0 %v2974
      %3225 = vmatprep.subr.bf16.mxu0 0
      %3226 = vmatpush1.bf16.msra.mxu0 %v2973
      %3227 = vmatprep.subr.bf16.mxu0 0
      %3228 = vmatpush1.bf16.msra.mxu0 %v2972
      %3229 = vmatprep.subr.bf16.mxu0 0
      %3230 = vmatpush1.bf16.msra.mxu0 %v2971
      %3231 = vmatprep.subr.bf16.mxu0 0
      %3232 = vmatpush1.bf16.msra.mxu0 %v2970
      %3233 = vmatprep.subr.bf16.mxu0 0
      %3234 = vmatpush1.bf16.msra.mxu0 %v2969
      %3235 = vmatprep.subr.bf16.mxu0 0
      %3236 = vmatpush1.bf16.msra.mxu0 %v2968
      %3237 = vmatprep.subr.bf16.mxu0 0
      %3238 = vmatpush1.bf16.msra.mxu0 %v2967
      %3239 = vmatprep.subr.bf16.mxu0 0
      %3240 = vmatpush2.bf16.msra.mxu0 %v2982
      %3241 = vmatprep.subr.bf16.mxu0 0
      %3242 = vmatpush2.bf16.msra.mxu0 %v2981
      %3243 = vmatprep.subr.bf16.mxu0 0
      %3244 = vmatpush2.bf16.msra.mxu0 %v2980
      %3245 = vmatprep.subr.bf16.mxu0 0
      %3246 = vmatpush2.bf16.msra.mxu0 %v2979
      %3247 = vmatprep.subr.bf16.mxu0 0
      %3248 = vmatpush2.bf16.msra.mxu0 %v2978
      %3249 = vmatprep.subr.bf16.mxu0 0
      %3250 = vmatpush2.bf16.msra.mxu0 %v2977
      %3251 = vmatprep.subr.bf16.mxu0 0
      %3252 = vmatpush2.bf16.msra.mxu0 %v2976
      %3253 = vmatprep.subr.bf16.mxu0 0
      %3254 = vmatpush2.bf16.msra.mxu0 %v2975
      %3255 = vmatprep.mubr.bf16.mxu0 %v2223
      %3256 = vmatmul.mubr.bf16.gmra.mxu0 %v2207
      %v3257 = vpop.f32.mrf.mxu0
      %v3258 = vadd.f32 %v1429, %v3257
      %v3259 = vpop.f32.mrf.mxu0
      %v3260 = vpop.f32.mrf.mxu0
      %v3261 = vadd.f32 %v1429, %v3260
      %v3262 = vpop.f32.mrf.mxu0
      %3263 = vdwg.mxu0
      %3264 = vmatprep.subr.bf16.mxu0 0
      %3265 = vmatpush1.bf16.msra.mxu0 %v2990
      %3266 = vmatprep.subr.bf16.mxu0 0
      %3267 = vmatpush1.bf16.msra.mxu0 %v2989
      %3268 = vmatprep.subr.bf16.mxu0 0
      %3269 = vmatpush1.bf16.msra.mxu0 %v2988
      %3270 = vmatprep.subr.bf16.mxu0 0
      %3271 = vmatpush1.bf16.msra.mxu0 %v2987
      %3272 = vmatprep.subr.bf16.mxu0 0
      %3273 = vmatpush1.bf16.msra.mxu0 %v2986
      %3274 = vmatprep.subr.bf16.mxu0 0
      %3275 = vmatpush1.bf16.msra.mxu0 %v2985
      %3276 = vmatprep.subr.bf16.mxu0 0
      %3277 = vmatpush1.bf16.msra.mxu0 %v2984
      %3278 = vmatprep.subr.bf16.mxu0 0
      %3279 = vmatpush1.bf16.msra.mxu0 %v2983
      %3280 = vmatprep.subr.bf16.mxu0 0
      %3281 = vmatpush2.bf16.msra.mxu0 %v2998
      %3282 = vmatprep.subr.bf16.mxu0 0
      %3283 = vmatpush2.bf16.msra.mxu0 %v2997
      %3284 = vmatprep.subr.bf16.mxu0 0
      %3285 = vmatpush2.bf16.msra.mxu0 %v2996
      %3286 = vmatprep.subr.bf16.mxu0 0
      %3287 = vmatpush2.bf16.msra.mxu0 %v2995
      %3288 = vmatprep.subr.bf16.mxu0 0
      %3289 = vmatpush2.bf16.msra.mxu0 %v2994
      %3290 = vmatprep.subr.bf16.mxu0 0
      %3291 = vmatpush2.bf16.msra.mxu0 %v2993
      %3292 = vmatprep.subr.bf16.mxu0 0
      %3293 = vmatpush2.bf16.msra.mxu0 %v2992
      %3294 = vmatprep.subr.bf16.mxu0 0
      %3295 = vmatpush2.bf16.msra.mxu0 %v2991
      %3296 = vmatprep.mubr.bf16.mxu0 %v2255
      %3297 = vmatmul.mubr.bf16.gmra.mxu0 %v2239
      %v3298 = vpop.f32.mrf.mxu0
      %v3299 = vadd.f32 %v3258, %v3298
      %v3300 = vpop.f32.mrf.mxu0
      %v3301 = vpop.f32.mrf.mxu0
      %v3302 = vadd.f32 %v3261, %v3301
      %v3303 = vpop.f32.mrf.mxu0
      %3304 = vdwg.mxu0
      %3305 = vmatprep.subr.bf16.mxu0 0
      %3306 = vmatpush1.bf16.msra.mxu0 %v3006
      %3307 = vmatprep.subr.bf16.mxu0 0
      %3308 = vmatpush1.bf16.msra.mxu0 %v3005
      %3309 = vmatprep.subr.bf16.mxu0 0
      %3310 = vmatpush1.bf16.msra.mxu0 %v3004
      %3311 = vmatprep.subr.bf16.mxu0 0
      %3312 = vmatpush1.bf16.msra.mxu0 %v3003
      %3313 = vmatprep.subr.bf16.mxu0 0
      %3314 = vmatpush1.bf16.msra.mxu0 %v3002
      %3315 = vmatprep.subr.bf16.mxu0 0
      %3316 = vmatpush1.bf16.msra.mxu0 %v3001
      %3317 = vmatprep.subr.bf16.mxu0 0
      %3318 = vmatpush1.bf16.msra.mxu0 %v3000
      %3319 = vmatprep.subr.bf16.mxu0 0
      %3320 = vmatpush1.bf16.msra.mxu0 %v2999
      %3321 = vmatprep.subr.bf16.mxu0 0
      %3322 = vmatpush2.bf16.msra.mxu0 %v3014
      %3323 = vmatprep.subr.bf16.mxu0 0
      %3324 = vmatpush2.bf16.msra.mxu0 %v3013
      %3325 = vmatprep.subr.bf16.mxu0 0
      %3326 = vmatpush2.bf16.msra.mxu0 %v3012
      %3327 = vmatprep.subr.bf16.mxu0 0
      %3328 = vmatpush2.bf16.msra.mxu0 %v3011
      %3329 = vmatprep.subr.bf16.mxu0 0
      %3330 = vmatpush2.bf16.msra.mxu0 %v3010
      %3331 = vmatprep.subr.bf16.mxu0 0
      %3332 = vmatpush2.bf16.msra.mxu0 %v3009
      %3333 = vmatprep.subr.bf16.mxu0 0
      %3334 = vmatpush2.bf16.msra.mxu0 %v3008
      %3335 = vmatprep.subr.bf16.mxu0 0
      %3336 = vmatpush2.bf16.msra.mxu0 %v3007
      %3337 = vmatprep.mubr.bf16.mxu0 %v2287
      %3338 = vmatmul.mubr.bf16.gmra.mxu0 %v2271
      %v3339 = vpop.f32.mrf.mxu0
      %v3340 = vadd.f32 %v3299, %v3339
      %v3341 = vpop.f32.mrf.mxu0
      %v3342 = vpop.f32.mrf.mxu0
      %v3343 = vadd.f32 %v3302, %v3342
      %v3344 = vpop.f32.mrf.mxu0
      %3345 = vdwg.mxu0
      %3346 = vmatprep.subr.bf16.mxu0 0
      %3347 = vmatpush1.bf16.msra.mxu0 %v3022
      %3348 = vmatprep.subr.bf16.mxu0 0
      %3349 = vmatpush1.bf16.msra.mxu0 %v3021
      %3350 = vmatprep.subr.bf16.mxu0 0
      %3351 = vmatpush1.bf16.msra.mxu0 %v3020
      %3352 = vmatprep.subr.bf16.mxu0 0
      %3353 = vmatpush1.bf16.msra.mxu0 %v3019
      %3354 = vmatprep.subr.bf16.mxu0 0
      %3355 = vmatpush1.bf16.msra.mxu0 %v3018
      %3356 = vmatprep.subr.bf16.mxu0 0
      %3357 = vmatpush1.bf16.msra.mxu0 %v3017
      %3358 = vmatprep.subr.bf16.mxu0 0
      %3359 = vmatpush1.bf16.msra.mxu0 %v3016
      %3360 = vmatprep.subr.bf16.mxu0 0
      %3361 = vmatpush1.bf16.msra.mxu0 %v3015
      %3362 = vmatprep.subr.bf16.mxu0 0
      %3363 = vmatpush2.bf16.msra.mxu0 %v3030
      %3364 = vmatprep.subr.bf16.mxu0 0
      %3365 = vmatpush2.bf16.msra.mxu0 %v3029
      %3366 = vmatprep.subr.bf16.mxu0 0
      %3367 = vmatpush2.bf16.msra.mxu0 %v3028
      %3368 = vmatprep.subr.bf16.mxu0 0
      %3369 = vmatpush2.bf16.msra.mxu0 %v3027
      %3370 = vmatprep.subr.bf16.mxu0 0
      %3371 = vmatpush2.bf16.msra.mxu0 %v3026
      %3372 = vmatprep.subr.bf16.mxu0 0
      %3373 = vmatpush2.bf16.msra.mxu0 %v3025
      %3374 = vmatprep.subr.bf16.mxu0 0
      %3375 = vmatpush2.bf16.msra.mxu0 %v3024
      %3376 = vmatprep.subr.bf16.mxu0 0
      %3377 = vmatpush2.bf16.msra.mxu0 %v3023
      %3378 = vmatprep.mubr.bf16.mxu0 %v2319
      %3379 = vmatmul.mubr.bf16.gmra.mxu0 %v2303
      %v3380 = vpop.f32.mrf.mxu0
      %v3381 = vadd.f32 %v3340, %v3380
      %v3382 = vpop.f32.mrf.mxu0
      %v3383 = vpop.f32.mrf.mxu0
      %v3384 = vadd.f32 %v3343, %v3383
      %v3385 = vpop.f32.mrf.mxu0
      %3386 = vdwg.mxu0
      %3387 = vmatprep.subr.bf16.mxu0 0
      %3388 = vmatpush1.bf16.msra.mxu0 %v3038
      %3389 = vmatprep.subr.bf16.mxu0 0
      %3390 = vmatpush1.bf16.msra.mxu0 %v3037
      %3391 = vmatprep.subr.bf16.mxu0 0
      %3392 = vmatpush1.bf16.msra.mxu0 %v3036
      %3393 = vmatprep.subr.bf16.mxu0 0
      %3394 = vmatpush1.bf16.msra.mxu0 %v3035
      %3395 = vmatprep.subr.bf16.mxu0 0
      %3396 = vmatpush1.bf16.msra.mxu0 %v3034
      %3397 = vmatprep.subr.bf16.mxu0 0
      %3398 = vmatpush1.bf16.msra.mxu0 %v3033
      %3399 = vmatprep.subr.bf16.mxu0 0
      %3400 = vmatpush1.bf16.msra.mxu0 %v3032
      %3401 = vmatprep.subr.bf16.mxu0 0
      %3402 = vmatpush1.bf16.msra.mxu0 %v3031
      %3403 = vmatprep.subr.bf16.mxu0 0
      %3404 = vmatpush2.bf16.msra.mxu0 %v3046
      %3405 = vmatprep.subr.bf16.mxu0 0
      %3406 = vmatpush2.bf16.msra.mxu0 %v3045
      %3407 = vmatprep.subr.bf16.mxu0 0
      %3408 = vmatpush2.bf16.msra.mxu0 %v3044
      %3409 = vmatprep.subr.bf16.mxu0 0
      %3410 = vmatpush2.bf16.msra.mxu0 %v3043
      %3411 = vmatprep.subr.bf16.mxu0 0
      %3412 = vmatpush2.bf16.msra.mxu0 %v3042
      %3413 = vmatprep.subr.bf16.mxu0 0
      %3414 = vmatpush2.bf16.msra.mxu0 %v3041
      %3415 = vmatprep.subr.bf16.mxu0 0
      %3416 = vmatpush2.bf16.msra.mxu0 %v3040
      %3417 = vmatprep.subr.bf16.mxu0 0
      %3418 = vmatpush2.bf16.msra.mxu0 %v3039
      %3419 = vmatprep.mubr.bf16.mxu0 %v2351
      %3420 = vmatmul.mubr.bf16.gmra.mxu0 %v2335
      %v3421 = vpop.f32.mrf.mxu0
      %v3422 = vadd.f32 %v3381, %v3421
      %v3423 = vpop.f32.mrf.mxu0
      %v3424 = vpop.f32.mrf.mxu0
      %v3425 = vadd.f32 %v3384, %v3424
      %v3426 = vpop.f32.mrf.mxu0
      %3427 = vdwg.mxu0
      %3428 = vmatprep.subr.bf16.mxu0 0
      %3429 = vmatpush1.bf16.msra.mxu0 %v3054
      %3430 = vmatprep.subr.bf16.mxu0 0
      %3431 = vmatpush1.bf16.msra.mxu0 %v3053
      %3432 = vmatprep.subr.bf16.mxu0 0
      %3433 = vmatpush1.bf16.msra.mxu0 %v3052
      %3434 = vmatprep.subr.bf16.mxu0 0
      %3435 = vmatpush1.bf16.msra.mxu0 %v3051
      %3436 = vmatprep.subr.bf16.mxu0 0
      %3437 = vmatpush1.bf16.msra.mxu0 %v3050
      %3438 = vmatprep.subr.bf16.mxu0 0
      %3439 = vmatpush1.bf16.msra.mxu0 %v3049
      %3440 = vmatprep.subr.bf16.mxu0 0
      %3441 = vmatpush1.bf16.msra.mxu0 %v3048
      %3442 = vmatprep.subr.bf16.mxu0 0
      %3443 = vmatpush1.bf16.msra.mxu0 %v3047
      %3444 = vmatprep.subr.bf16.mxu0 0
      %3445 = vmatpush2.bf16.msra.mxu0 %v3062
      %3446 = vmatprep.subr.bf16.mxu0 0
      %3447 = vmatpush2.bf16.msra.mxu0 %v3061
      %3448 = vmatprep.subr.bf16.mxu0 0
      %3449 = vmatpush2.bf16.msra.mxu0 %v3060
      %3450 = vmatprep.subr.bf16.mxu0 0
      %3451 = vmatpush2.bf16.msra.mxu0 %v3059
      %3452 = vmatprep.subr.bf16.mxu0 0
      %3453 = vmatpush2.bf16.msra.mxu0 %v3058
      %3454 = vmatprep.subr.bf16.mxu0 0
      %3455 = vmatpush2.bf16.msra.mxu0 %v3057
      %3456 = vmatprep.subr.bf16.mxu0 0
      %3457 = vmatpush2.bf16.msra.mxu0 %v3056
      %3458 = vmatprep.subr.bf16.mxu0 0
      %3459 = vmatpush2.bf16.msra.mxu0 %v3055
      %3460 = vmatprep.mubr.bf16.mxu0 %v2383
      %3461 = vmatmul.mubr.bf16.gmra.mxu0 %v2367
      %v3462 = vpop.f32.mrf.mxu0
      %v3463 = vadd.f32 %v3422, %v3462
      %v3464 = vpop.f32.mrf.mxu0
      %v3465 = vpop.f32.mrf.mxu0
      %v3466 = vadd.f32 %v3425, %v3465
      %v3467 = vpop.f32.mrf.mxu0
      %3468 = vdwg.mxu0
      %3469 = vmatprep.subr.bf16.mxu0 0
      %3470 = vmatpush1.bf16.msra.mxu0 %v3070
      %3471 = vmatprep.subr.bf16.mxu0 0
      %3472 = vmatpush1.bf16.msra.mxu0 %v3069
      %3473 = vmatprep.subr.bf16.mxu0 0
      %3474 = vmatpush1.bf16.msra.mxu0 %v3068
      %3475 = vmatprep.subr.bf16.mxu0 0
      %3476 = vmatpush1.bf16.msra.mxu0 %v3067
      %3477 = vmatprep.subr.bf16.mxu0 0
      %3478 = vmatpush1.bf16.msra.mxu0 %v3066
      %3479 = vmatprep.subr.bf16.mxu0 0
      %3480 = vmatpush1.bf16.msra.mxu0 %v3065
      %3481 = vmatprep.subr.bf16.mxu0 0
      %3482 = vmatpush1.bf16.msra.mxu0 %v3064
      %3483 = vmatprep.subr.bf16.mxu0 0
      %3484 = vmatpush1.bf16.msra.mxu0 %v3063
      %3485 = vmatprep.subr.bf16.mxu0 0
      %3486 = vmatpush2.bf16.msra.mxu0 %v3078
      %3487 = vmatprep.subr.bf16.mxu0 0
      %3488 = vmatpush2.bf16.msra.mxu0 %v3077
      %3489 = vmatprep.subr.bf16.mxu0 0
      %3490 = vmatpush2.bf16.msra.mxu0 %v3076
      %3491 = vmatprep.subr.bf16.mxu0 0
      %3492 = vmatpush2.bf16.msra.mxu0 %v3075
      %3493 = vmatprep.subr.bf16.mxu0 0
      %3494 = vmatpush2.bf16.msra.mxu0 %v3074
      %3495 = vmatprep.subr.bf16.mxu0 0
      %3496 = vmatpush2.bf16.msra.mxu0 %v3073
      %3497 = vmatprep.subr.bf16.mxu0 0
      %3498 = vmatpush2.bf16.msra.mxu0 %v3072
      %3499 = vmatprep.subr.bf16.mxu0 0
      %3500 = vmatpush2.bf16.msra.mxu0 %v3071
      %3501 = vmatprep.mubr.bf16.mxu0 %v2415
      %3502 = vmatmul.mubr.bf16.gmra.mxu0 %v2399
      %v3503 = vpop.f32.mrf.mxu0
      %v3504 = vadd.f32 %v3463, %v3503
      %v3505 = vpop.f32.mrf.mxu0
      %v3506 = vpop.f32.mrf.mxu0
      %v3507 = vadd.f32 %v3466, %v3506
      %v3508 = vpop.f32.mrf.mxu0
      %3509 = vdwg.mxu0
      %3510 = vmatprep.subr.bf16.mxu0 0
      %3511 = vmatpush1.bf16.msra.mxu0 %v3086
      %3512 = vmatprep.subr.bf16.mxu0 0
      %3513 = vmatpush1.bf16.msra.mxu0 %v3085
      %3514 = vmatprep.subr.bf16.mxu0 0
      %3515 = vmatpush1.bf16.msra.mxu0 %v3084
      %3516 = vmatprep.subr.bf16.mxu0 0
      %3517 = vmatpush1.bf16.msra.mxu0 %v3083
      %3518 = vmatprep.subr.bf16.mxu0 0
      %3519 = vmatpush1.bf16.msra.mxu0 %v3082
      %3520 = vmatprep.subr.bf16.mxu0 0
      %3521 = vmatpush1.bf16.msra.mxu0 %v3081
      %3522 = vmatprep.subr.bf16.mxu0 0
      %3523 = vmatpush1.bf16.msra.mxu0 %v3080
      %3524 = vmatprep.subr.bf16.mxu0 0
      %3525 = vmatpush1.bf16.msra.mxu0 %v3079
      %3526 = vmatprep.subr.bf16.mxu0 0
      %3527 = vmatpush2.bf16.msra.mxu0 %v3094
      %3528 = vmatprep.subr.bf16.mxu0 0
      %3529 = vmatpush2.bf16.msra.mxu0 %v3093
      %3530 = vmatprep.subr.bf16.mxu0 0
      %3531 = vmatpush2.bf16.msra.mxu0 %v3092
      %3532 = vmatprep.subr.bf16.mxu0 0
      %3533 = vmatpush2.bf16.msra.mxu0 %v3091
      %3534 = vmatprep.subr.bf16.mxu0 0
      %3535 = vmatpush2.bf16.msra.mxu0 %v3090
      %3536 = vmatprep.subr.bf16.mxu0 0
      %3537 = vmatpush2.bf16.msra.mxu0 %v3089
      %3538 = vmatprep.subr.bf16.mxu0 0
      %3539 = vmatpush2.bf16.msra.mxu0 %v3088
      %3540 = vmatprep.subr.bf16.mxu0 0
      %3541 = vmatpush2.bf16.msra.mxu0 %v3087
      %3542 = vmatprep.mubr.bf16.mxu0 %v2447
      %3543 = vmatmul.mubr.bf16.gmra.mxu0 %v2431
      %v3544 = vpop.f32.mrf.mxu0
      %v3545 = vadd.f32 %v3504, %v3544
      %v3546 = vpop.f32.mrf.mxu0
      %v3547 = vpop.f32.mrf.mxu0
      %v3548 = vadd.f32 %v3507, %v3547
      %v3549 = vpop.f32.mrf.mxu0
      %3550 = vdwg.mxu0
      %v3551 = vpack.c.bf16 %v3548, %v3545
      %v3552 = vld [vmem:[%s6] sm:$0xff]
      %v3553 = vld [vmem:[%s6 + $0x8] sm:$0xf]
      %v3554 = vld [vmem:[%s6 + $0xc] sm:$0xff]
      %v3555 = vld [vmem:[%s6 + $0x14] sm:$0xf]
      %v3556 = vld [vmem:[%s6 + $0x18] sm:$0xff]
      %v3557 = vld [vmem:[%s6 + $0x20] sm:$0xf]
      %v3558 = vld [vmem:[%s6 + $0x24] sm:$0xff]
      %v3559 = vld [vmem:[%s6 + $0x2c] sm:$0xf]
      %v3560 = vld [vmem:[%s6 + $0x30] sm:$0xff]
      %v3561 = vld [vmem:[%s6 + $0x38] sm:$0xf]
      %v3562 = vld [vmem:[%s6 + $0x3c] sm:$0xff]
      %v3563 = vld [vmem:[%s6 + $0x44] sm:$0xf]
      %v3564 = vld [vmem:[%s6 + $0x48] sm:$0xff]
      %v3565 = vld [vmem:[%s6 + $0x50] sm:$0xf]
      %v3566 = vld [vmem:[%s6 + $0x54] sm:$0xff]
      %v3567 = vld [vmem:[%s6 + $0x5c] sm:$0xf]
      %v3568 = vld [vmem:[%s6 + $0x60] sm:$0xff]
      %v3569 = vld [vmem:[%s6 + $0x68] sm:$0xf]
      %v3570 = vld [vmem:[%s6 + $0x6c] sm:$0xff]
      %v3571 = vld [vmem:[%s6 + $0x74] sm:$0xf]
      %v3572 = vld [vmem:[%s6 + $0x78] sm:$0xff]
      %v3573 = vld [vmem:[%s6 + $0x80] sm:$0xf]
      %v3574 = vld [vmem:[%s6 + $0x84] sm:$0xff]
      %v3575 = vld [vmem:[%s6 + $0x8c] sm:$0xf]
      %v3576 = vld [vmem:[%s6 + $0x90] sm:$0xff]
      %v3577 = vld [vmem:[%s6 + $0x98] sm:$0xf]
      %v3578 = vld [vmem:[%s6 + $0x9c] sm:$0xff]
      %v3579 = vld [vmem:[%s6 + $0xa4] sm:$0xf]
      %v3580 = vld [vmem:[%s6 + $0xa8] sm:$0xff]
      %v3581 = vld [vmem:[%s6 + $0xb0] sm:$0xf]
      %v3582 = vld [vmem:[%s6 + $0xb4] sm:$0xff]
      %v3583 = vld [vmem:[%s6 + $0xbc] sm:$0xf]
      %v3584 = vld [vmem:[%s7] sm:$0x7]
      %v3586 = vlaneseq
      %v3587 = vshrl.u32 %v3586, 7
      %v3588 = vsub.s32 0, %v3587
      %v3589 = vrot.slane %v3584, %v3588
      %v3590 = vlaneseq
      %v3591 = vshrl.u32 %v3590, 7
      %v3592 = vsub.s32 1, %v3591
      %v3593 = vrot.slane %v3584, %v3592
      %v3594 = vlaneseq
      %v3595 = vshrl.u32 %v3594, 7
      %v3596 = vsub.s32 2, %v3595
      %v3597 = vrot.slane %v3584, %v3596
      %v3633 = vunpack.c.l.b16 %v3552
      %v3634 = vunpack.c.h.b16 %v3552
      %v3635 = vunpack.c.l.b16 %v3553
      %v3636 = vunpack.c.l.b16 %v3554
      %v3637 = vunpack.c.h.b16 %v3554
      %v3638 = vunpack.c.l.b16 %v3555
      %v3639 = vunpack.c.l.b16 %v3556
      %v3640 = vunpack.c.h.b16 %v3556
      %v3641 = vunpack.c.l.b16 %v3557
      %v3642 = vunpack.c.l.b16 %v3558
      %v3643 = vunpack.c.h.b16 %v3558
      %v3644 = vunpack.c.l.b16 %v3559
      %v3645 = vunpack.c.l.b16 %v3560
      %v3646 = vunpack.c.h.b16 %v3560
      %v3647 = vunpack.c.l.b16 %v3561
      %v3648 = vunpack.c.l.b16 %v3562
      %v3649 = vunpack.c.h.b16 %v3562
      %v3650 = vunpack.c.l.b16 %v3563
      %v3651 = vunpack.c.l.b16 %v3564
      %v3652 = vunpack.c.h.b16 %v3564
      %v3653 = vunpack.c.l.b16 %v3565
      %v3654 = vunpack.c.l.b16 %v3566
      %v3655 = vunpack.c.h.b16 %v3566
      %v3656 = vunpack.c.l.b16 %v3567
      %v3657 = vunpack.c.l.b16 %v3568
      %v3658 = vunpack.c.h.b16 %v3568
      %v3659 = vunpack.c.l.b16 %v3569
      %v3660 = vunpack.c.l.b16 %v3570
      %v3661 = vunpack.c.h.b16 %v3570
      %v3662 = vunpack.c.l.b16 %v3571
      %v3663 = vunpack.c.l.b16 %v3572
      %v3664 = vunpack.c.h.b16 %v3572
      %v3665 = vunpack.c.l.b16 %v3573
      %v3666 = vunpack.c.l.b16 %v3574
      %v3667 = vunpack.c.h.b16 %v3574
      %v3668 = vunpack.c.l.b16 %v3575
      %v3669 = vunpack.c.l.b16 %v3576
      %v3670 = vunpack.c.h.b16 %v3576
      %v3671 = vunpack.c.l.b16 %v3577
      %v3672 = vunpack.c.l.b16 %v3578
      %v3673 = vunpack.c.h.b16 %v3578
      %v3674 = vunpack.c.l.b16 %v3579
      %v3675 = vunpack.c.l.b16 %v3580
      %v3676 = vunpack.c.h.b16 %v3580
      %v3677 = vunpack.c.l.b16 %v3581
      %v3678 = vunpack.c.l.b16 %v3582
      %v3679 = vunpack.c.h.b16 %v3582
      %v3680 = vunpack.c.l.b16 %v3583
      %v3681 = vpack.c.b16 %v3636, %v3633
      %v3682 = vpack.c.b16 %v3637, %v3634
      %v3683 = vpack.c.b16 %v3638, %v3635
      %v3684 = vpack.c.b16 %v3642, %v3639
      %v3685 = vpack.c.b16 %v3643, %v3640
      %v3686 = vpack.c.b16 %v3644, %v3641
      %v3687 = vpack.c.b16 %v3648, %v3645
      %v3688 = vpack.c.b16 %v3649, %v3646
      %v3689 = vpack.c.b16 %v3650, %v3647
      %v3690 = vpack.c.b16 %v3654, %v3651
      %v3691 = vpack.c.b16 %v3655, %v3652
      %v3692 = vpack.c.b16 %v3656, %v3653
      %v3693 = vpack.c.b16 %v3660, %v3657
      %v3694 = vpack.c.b16 %v3661, %v3658
      %v3695 = vpack.c.b16 %v3662, %v3659
      %v3696 = vpack.c.b16 %v3666, %v3663
      %v3697 = vpack.c.b16 %v3667, %v3664
      %v3698 = vpack.c.b16 %v3668, %v3665
      %v3699 = vpack.c.b16 %v3672, %v3669
      %v3700 = vpack.c.b16 %v3673, %v3670
      %v3701 = vpack.c.b16 %v3674, %v3671
      %v3702 = vpack.c.b16 %v3678, %v3675
      %v3703 = vpack.c.b16 %v3679, %v3676
      %v3704 = vpack.c.b16 %v3680, %v3677
      %3729 = vmatprep.subr.bf16.mxu0 %v3703
      %3730 = vmatpush1.bf16.msra.mxu0 %v3702
      %3731 = vmatprep.subr.bf16.mxu0 %v3700
      %3732 = vmatpush1.bf16.msra.mxu0 %v3699
      %3733 = vmatprep.subr.bf16.mxu0 %v3697
      %3734 = vmatpush1.bf16.msra.mxu0 %v3696
      %3735 = vmatprep.subr.bf16.mxu0 %v3694
      %3736 = vmatpush1.bf16.msra.mxu0 %v3693
      %3737 = vmatprep.subr.bf16.mxu0 %v3691
      %3738 = vmatpush1.bf16.msra.mxu0 %v3690
      %3739 = vmatprep.subr.bf16.mxu0 %v3688
      %3740 = vmatpush1.bf16.msra.mxu0 %v3687
      %3741 = vmatprep.subr.bf16.mxu0 %v3685
      %3742 = vmatpush1.bf16.msra.mxu0 %v3684
      %3743 = vmatprep.subr.bf16.mxu0 %v3682
      %3744 = vmatpush1.bf16.msra.mxu0 %v3681
      %3745 = vmatprep.subr.bf16.mxu0 0
      %3746 = vmatpush2.bf16.msra.mxu0 0
      %3747 = vmatprep.subr.bf16.mxu0 0
      %3748 = vmatpush2.bf16.msra.mxu0 0
      %3749 = vmatprep.subr.bf16.mxu0 0
      %3750 = vmatpush2.bf16.msra.mxu0 0
      %3751 = vmatprep.subr.bf16.mxu0 0
      %3752 = vmatpush2.bf16.msra.mxu0 0
      %3753 = vmatprep.subr.bf16.mxu0 0
      %3754 = vmatpush2.bf16.msra.mxu0 0
      %3755 = vmatprep.subr.bf16.mxu0 0
      %3756 = vmatpush2.bf16.msra.mxu0 0
      %3757 = vmatprep.subr.bf16.mxu0 0
      %3758 = vmatpush2.bf16.msra.mxu0 0
      %3759 = vmatprep.subr.bf16.mxu0 0
      %3760 = vmatpush2.bf16.msra.mxu0 0
      %3761 = vmatprep.mubr.bf16.mxu0 0
      %3762 = vmatmul.mubr.bf16.gmra.mxu0 %v3551
      %v3763 = vpop.f32.mrf.mxu0
      %v3764 = vadd.f32 %v3589, %v3763
      %v3765 = vpop.f32.mrf.mxu0
      %v3766 = vadd.f32 %v3593, %v3765
      %v3767 = vpop.f32.mrf.mxu0
      %v3768 = vadd.f32 %v3589, %v3767
      %v3769 = vpop.f32.mrf.mxu0
      %v3770 = vadd.f32 %v3593, %v3769
      %3771 = vdwg.mxu0
      %3772 = vmatprep.subr.bf16.mxu0 0
      %3773 = vmatpush1.bf16.msra.mxu0 %v3704
      %3774 = vmatprep.subr.bf16.mxu0 0
      %3775 = vmatpush1.bf16.msra.mxu0 %v3701
      %3776 = vmatprep.subr.bf16.mxu0 0
      %3777 = vmatpush1.bf16.msra.mxu0 %v3698
      %3778 = vmatprep.subr.bf16.mxu0 0
      %3779 = vmatpush1.bf16.msra.mxu0 %v3695
      %3780 = vmatprep.subr.bf16.mxu0 0
      %3781 = vmatpush1.bf16.msra.mxu0 %v3692
      %3782 = vmatprep.subr.bf16.mxu0 0
      %3783 = vmatpush1.bf16.msra.mxu0 %v3689
      %3784 = vmatprep.subr.bf16.mxu0 0
      %3785 = vmatpush1.bf16.msra.mxu0 %v3686
      %3786 = vmatprep.subr.bf16.mxu0 0
      %3787 = vmatpush1.bf16.msra.mxu0 %v3683
      %3788 = vmatprep.subr.bf16.mxu0 0
      %3789 = vmatpush2.bf16.msra.mxu0 0
      %3790 = vmatprep.subr.bf16.mxu0 0
      %3791 = vmatpush2.bf16.msra.mxu0 0
      %3792 = vmatprep.subr.bf16.mxu0 0
      %3793 = vmatpush2.bf16.msra.mxu0 0
      %3794 = vmatprep.subr.bf16.mxu0 0
      %3795 = vmatpush2.bf16.msra.mxu0 0
      %3796 = vmatprep.subr.bf16.mxu0 0
      %3797 = vmatpush2.bf16.msra.mxu0 0
      %3798 = vmatprep.subr.bf16.mxu0 0
      %3799 = vmatpush2.bf16.msra.mxu0 0
      %3800 = vmatprep.subr.bf16.mxu0 0
      %3801 = vmatpush2.bf16.msra.mxu0 0
      %3802 = vmatprep.subr.bf16.mxu0 0
      %3803 = vmatpush2.bf16.msra.mxu0 0
      %3804 = vmatprep.mubr.bf16.mxu0 0
      %3805 = vmatmul.mubr.bf16.gmra.mxu0 %v3551
      %v3806 = vpop.f32.mrf.mxu0
      %v3807 = vadd.f32 %v3597, %v3806
      %v3808 = vpop.f32.mrf.mxu0
      %v3809 = vpop.f32.mrf.mxu0
      %v3810 = vadd.f32 %v3597, %v3809
      %v3811 = vpop.f32.mrf.mxu0
      %3812 = vdwg.mxu0
      %v3813 = vpack.c.bf16 %v907, %v907
      %s3814 = scalar_lea.vmem %s6, 192
      %v3815 = vld [vmem:[%s3814] sm:$0xff]
      %v3816 = vld [vmem:[%s3814 + $0x8] sm:$0xf]
      %v3817 = vld [vmem:[%s3814 + $0xc] sm:$0xff]
      %v3818 = vld [vmem:[%s3814 + $0x14] sm:$0xf]
      %v3819 = vld [vmem:[%s3814 + $0x18] sm:$0xff]
      %v3820 = vld [vmem:[%s3814 + $0x20] sm:$0xf]
      %v3821 = vld [vmem:[%s3814 + $0x24] sm:$0xff]
      %v3822 = vld [vmem:[%s3814 + $0x2c] sm:$0xf]
      %v3823 = vld [vmem:[%s3814 + $0x30] sm:$0xff]
      %v3824 = vld [vmem:[%s3814 + $0x38] sm:$0xf]
      %v3825 = vld [vmem:[%s3814 + $0x3c] sm:$0xff]
      %v3826 = vld [vmem:[%s3814 + $0x44] sm:$0xf]
      %v3827 = vld [vmem:[%s3814 + $0x48] sm:$0xff]
      %v3828 = vld [vmem:[%s3814 + $0x50] sm:$0xf]
      %v3829 = vld [vmem:[%s3814 + $0x54] sm:$0xff]
      %v3830 = vld [vmem:[%s3814 + $0x5c] sm:$0xf]
      %v3831 = vld [vmem:[%s3814 + $0x60] sm:$0xff]
      %v3832 = vld [vmem:[%s3814 + $0x68] sm:$0xf]
      %v3833 = vld [vmem:[%s3814 + $0x6c] sm:$0xff]
      %v3834 = vld [vmem:[%s3814 + $0x74] sm:$0xf]
      %v3835 = vld [vmem:[%s3814 + $0x78] sm:$0xff]
      %v3836 = vld [vmem:[%s3814 + $0x80] sm:$0xf]
      %v3837 = vld [vmem:[%s3814 + $0x84] sm:$0xff]
      %v3838 = vld [vmem:[%s3814 + $0x8c] sm:$0xf]
      %v3839 = vld [vmem:[%s3814 + $0x90] sm:$0xff]
      %v3840 = vld [vmem:[%s3814 + $0x98] sm:$0xf]
      %v3841 = vld [vmem:[%s3814 + $0x9c] sm:$0xff]
      %v3842 = vld [vmem:[%s3814 + $0xa4] sm:$0xf]
      %v3843 = vld [vmem:[%s3814 + $0xa8] sm:$0xff]
      %v3844 = vld [vmem:[%s3814 + $0xb0] sm:$0xf]
      %v3845 = vld [vmem:[%s3814 + $0xb4] sm:$0xff]
      %v3846 = vld [vmem:[%s3814 + $0xbc] sm:$0xf]
      %s3847 = scalar_lea.vmem %s7, 3
      %v3848 = vld [vmem:[%s3847] sm:$0x7]
      %v3850 = vlaneseq
      %v3851 = vshrl.u32 %v3850, 7
      %v3852 = vsub.s32 0, %v3851
      %v3853 = vrot.slane %v3848, %v3852
      %v3854 = vlaneseq
      %v3855 = vshrl.u32 %v3854, 7
      %v3856 = vsub.s32 1, %v3855
      %v3857 = vrot.slane %v3848, %v3856
      %v3858 = vlaneseq
      %v3859 = vshrl.u32 %v3858, 7
      %v3860 = vsub.s32 2, %v3859
      %v3861 = vrot.slane %v3848, %v3860
      %v3897 = vunpack.c.l.b16 %v3815
      %v3898 = vunpack.c.h.b16 %v3815
      %v3899 = vunpack.c.l.b16 %v3816
      %v3900 = vunpack.c.l.b16 %v3817
      %v3901 = vunpack.c.h.b16 %v3817
      %v3902 = vunpack.c.l.b16 %v3818
      %v3903 = vunpack.c.l.b16 %v3819
      %v3904 = vunpack.c.h.b16 %v3819
      %v3905 = vunpack.c.l.b16 %v3820
      %v3906 = vunpack.c.l.b16 %v3821
      %v3907 = vunpack.c.h.b16 %v3821
      %v3908 = vunpack.c.l.b16 %v3822
      %v3909 = vunpack.c.l.b16 %v3823
      %v3910 = vunpack.c.h.b16 %v3823
      %v3911 = vunpack.c.l.b16 %v3824
      %v3912 = vunpack.c.l.b16 %v3825
      %v3913 = vunpack.c.h.b16 %v3825
      %v3914 = vunpack.c.l.b16 %v3826
      %v3915 = vunpack.c.l.b16 %v3827
      %v3916 = vunpack.c.h.b16 %v3827
      %v3917 = vunpack.c.l.b16 %v3828
      %v3918 = vunpack.c.l.b16 %v3829
      %v3919 = vunpack.c.h.b16 %v3829
      %v3920 = vunpack.c.l.b16 %v3830
      %v3921 = vunpack.c.l.b16 %v3831
      %v3922 = vunpack.c.h.b16 %v3831
      %v3923 = vunpack.c.l.b16 %v3832
      %v3924 = vunpack.c.l.b16 %v3833
      %v3925 = vunpack.c.h.b16 %v3833
      %v3926 = vunpack.c.l.b16 %v3834
      %v3927 = vunpack.c.l.b16 %v3835
      %v3928 = vunpack.c.h.b16 %v3835
      %v3929 = vunpack.c.l.b16 %v3836
      %v3930 = vunpack.c.l.b16 %v3837
      %v3931 = vunpack.c.h.b16 %v3837
      %v3932 = vunpack.c.l.b16 %v3838
      %v3933 = vunpack.c.l.b16 %v3839
      %v3934 = vunpack.c.h.b16 %v3839
      %v3935 = vunpack.c.l.b16 %v3840
      %v3936 = vunpack.c.l.b16 %v3841
      %v3937 = vunpack.c.h.b16 %v3841
      %v3938 = vunpack.c.l.b16 %v3842
      %v3939 = vunpack.c.l.b16 %v3843
      %v3940 = vunpack.c.h.b16 %v3843
      %v3941 = vunpack.c.l.b16 %v3844
      %v3942 = vunpack.c.l.b16 %v3845
      %v3943 = vunpack.c.h.b16 %v3845
      %v3944 = vunpack.c.l.b16 %v3846
      %v3945 = vpack.c.b16 %v3900, %v3897
      %v3946 = vpack.c.b16 %v3901, %v3898
      %v3947 = vpack.c.b16 %v3902, %v3899
      %v3948 = vpack.c.b16 %v3906, %v3903
      %v3949 = vpack.c.b16 %v3907, %v3904
      %v3950 = vpack.c.b16 %v3908, %v3905
      %v3951 = vpack.c.b16 %v3912, %v3909
      %v3952 = vpack.c.b16 %v3913, %v3910
      %v3953 = vpack.c.b16 %v3914, %v3911
      %v3954 = vpack.c.b16 %v3918, %v3915
      %v3955 = vpack.c.b16 %v3919, %v3916
      %v3956 = vpack.c.b16 %v3920, %v3917
      %v3957 = vpack.c.b16 %v3924, %v3921
      %v3958 = vpack.c.b16 %v3925, %v3922
      %v3959 = vpack.c.b16 %v3926, %v3923
      %v3960 = vpack.c.b16 %v3930, %v3927
      %v3961 = vpack.c.b16 %v3931, %v3928
      %v3962 = vpack.c.b16 %v3932, %v3929
      %v3963 = vpack.c.b16 %v3936, %v3933
      %v3964 = vpack.c.b16 %v3937, %v3934
      %v3965 = vpack.c.b16 %v3938, %v3935
      %v3966 = vpack.c.b16 %v3942, %v3939
      %v3967 = vpack.c.b16 %v3943, %v3940
      %v3968 = vpack.c.b16 %v3944, %v3941
      %3993 = vmatprep.subr.bf16.mxu0 %v3967
      %3994 = vmatpush1.bf16.msra.mxu0 %v3966
      %3995 = vmatprep.subr.bf16.mxu0 %v3964
      %3996 = vmatpush1.bf16.msra.mxu0 %v3963
      %3997 = vmatprep.subr.bf16.mxu0 %v3961
      %3998 = vmatpush1.bf16.msra.mxu0 %v3960
      %3999 = vmatprep.subr.bf16.mxu0 %v3958
      %4000 = vmatpush1.bf16.msra.mxu0 %v3957
      %4001 = vmatprep.subr.bf16.mxu0 %v3955
      %4002 = vmatpush1.bf16.msra.mxu0 %v3954
      %4003 = vmatprep.subr.bf16.mxu0 %v3952
      %4004 = vmatpush1.bf16.msra.mxu0 %v3951
      %4005 = vmatprep.subr.bf16.mxu0 %v3949
      %4006 = vmatpush1.bf16.msra.mxu0 %v3948
      %4007 = vmatprep.subr.bf16.mxu0 %v3946
      %4008 = vmatpush1.bf16.msra.mxu0 %v3945
      %4009 = vmatprep.subr.bf16.mxu0 0
      %4010 = vmatpush2.bf16.msra.mxu0 0
      %4011 = vmatprep.subr.bf16.mxu0 0
      %4012 = vmatpush2.bf16.msra.mxu0 0
      %4013 = vmatprep.subr.bf16.mxu0 0
      %4014 = vmatpush2.bf16.msra.mxu0 0
      %4015 = vmatprep.subr.bf16.mxu0 0
      %4016 = vmatpush2.bf16.msra.mxu0 0
      %4017 = vmatprep.subr.bf16.mxu0 0
      %4018 = vmatpush2.bf16.msra.mxu0 0
      %4019 = vmatprep.subr.bf16.mxu0 0
      %4020 = vmatpush2.bf16.msra.mxu0 0
      %4021 = vmatprep.subr.bf16.mxu0 0
      %4022 = vmatpush2.bf16.msra.mxu0 0
      %4023 = vmatprep.subr.bf16.mxu0 0
      %4024 = vmatpush2.bf16.msra.mxu0 0
      %4025 = vmatprep.mubr.bf16.mxu0 0
      %4026 = vmatmul.mubr.bf16.gmra.mxu0 %v3813
      %v4027 = vpop.f32.mrf.mxu0
      %v4028 = vadd.f32 %v3853, %v4027
      %v4029 = vpop.f32.mrf.mxu0
      %v4030 = vadd.f32 %v3857, %v4029
      %v4031 = vpop.f32.mrf.mxu0
      %v4032 = vpop.f32.mrf.mxu0
      %4033 = vdwg.mxu0
      %4034 = vmatprep.subr.bf16.mxu0 0
      %4035 = vmatpush1.bf16.msra.mxu0 %v3968
      %4036 = vmatprep.subr.bf16.mxu0 0
      %4037 = vmatpush1.bf16.msra.mxu0 %v3965
      %4038 = vmatprep.subr.bf16.mxu0 0
      %4039 = vmatpush1.bf16.msra.mxu0 %v3962
      %4040 = vmatprep.subr.bf16.mxu0 0
      %4041 = vmatpush1.bf16.msra.mxu0 %v3959
      %4042 = vmatprep.subr.bf16.mxu0 0
      %4043 = vmatpush1.bf16.msra.mxu0 %v3956
      %4044 = vmatprep.subr.bf16.mxu0 0
      %4045 = vmatpush1.bf16.msra.mxu0 %v3953
      %4046 = vmatprep.subr.bf16.mxu0 0
      %4047 = vmatpush1.bf16.msra.mxu0 %v3950
      %4048 = vmatprep.subr.bf16.mxu0 0
      %4049 = vmatpush1.bf16.msra.mxu0 %v3947
      %4050 = vmatprep.subr.bf16.mxu0 0
      %4051 = vmatpush2.bf16.msra.mxu0 0
      %4052 = vmatprep.subr.bf16.mxu0 0
      %4053 = vmatpush2.bf16.msra.mxu0 0
      %4054 = vmatprep.subr.bf16.mxu0 0
      %4055 = vmatpush2.bf16.msra.mxu0 0
      %4056 = vmatprep.subr.bf16.mxu0 0
      %4057 = vmatpush2.bf16.msra.mxu0 0
      %4058 = vmatprep.subr.bf16.mxu0 0
      %4059 = vmatpush2.bf16.msra.mxu0 0
      %4060 = vmatprep.subr.bf16.mxu0 0
      %4061 = vmatpush2.bf16.msra.mxu0 0
      %4062 = vmatprep.subr.bf16.mxu0 0
      %4063 = vmatpush2.bf16.msra.mxu0 0
      %4064 = vmatprep.subr.bf16.mxu0 0
      %4065 = vmatpush2.bf16.msra.mxu0 0
      %4066 = vmatprep.mubr.bf16.mxu0 0
      %4067 = vmatmul.mubr.bf16.gmra.mxu0 %v3813
      %v4068 = vpop.f32.mrf.mxu0
      %v4069 = vadd.f32 %v3861, %v4068
      %v4070 = vpop.f32.mrf.mxu0
      %v4071 = vpop.f32.mrf.mxu0
      %v4072 = vpop.f32.mrf.mxu0
      %4073 = vdwg.mxu0
      %v4074 = vlaneseq
      %v4075 = vand.u32 %v4074, 127
      %vm4076 = vcmp.ge.s32.totalorder %v4075, 0
      %vm4077 = vcmp.lt.s32.totalorder %v4075, 32
      %vm4078 = vmand %vm4076, %vm4077
      %v4079 = vsel %vm4078, 1, 0
      %v4080 = vcvt.s32.f32 %v4079
      %vm4081 = vcmp.ge.s32.totalorder %v4075, 32
      %vm4082 = vcmp.lt.s32.totalorder %v4075, 64
      %vm4083 = vmand %vm4081, %vm4082
      %v4084 = vsel %vm4083, 1, 0
      %v4085 = vcvt.s32.f32 %v4084
      %vm4086 = vcmp.ge.s32.totalorder %v4075, 64
      %vm4087 = vcmp.lt.s32.totalorder %v4075, 96
      %vm4088 = vmand %vm4086, %vm4087
      %v4089 = vsel %vm4088, 1, 0
      %v4090 = vcvt.s32.f32 %v4089
      %vm4091 = vcmp.ge.s32.totalorder %v4075, 96
      %vm4092 = vcmp.lt.s32.totalorder %v4075, 128
      %vm4093 = vmand %vm4091, %vm4092
      %v4094 = vsel %vm4093, 1, 0
      %v4095 = vcvt.s32.f32 %v4094
      %v4096 = vpack.c.bf16 %v4030, %v4030
      %v4097 = vmul.f32 %v3764, %v4080
      %v4098 = vmul.f32 %v3768, %v4080
      %v4099 = vpack.c.bf16 %v4098, %v4097
      %4100 = vmatprep.subr.bf16.mxu0 0
      %4101 = vmatpush1.bf16.xpose.msra.mxu0 0
      %4102 = vmatprep.subr.bf16.mxu0 0
      %4103 = vmatpush1.bf16.xpose.msra.mxu0 0
      %4104 = vmatprep.subr.bf16.mxu0 0
      %4105 = vmatpush1.bf16.xpose.msra.mxu0 0
      %4106 = vmatprep.subr.bf16.mxu0 0
      %4107 = vmatpush1.bf16.xpose.msra.mxu0 0
      %4108 = vmatprep.subr.bf16.mxu0 0
      %4109 = vmatpush1.bf16.xpose.msra.mxu0 0
      %4110 = vmatprep.subr.bf16.mxu0 0
      %4111 = vmatpush1.bf16.xpose.msra.mxu0 0
      %4112 = vmatprep.subr.bf16.mxu0 0
      %4113 = vmatpush1.bf16.xpose.msra.mxu0 0
      %4114 = vmatprep.subr.bf16.mxu0 0
      %4115 = vmatpush1.bf16.xpose.msra.mxu0 %v4096
      %4116 = vmatprep.subr.bf16.mxu0 0
      %4117 = vmatpush2.bf16.xpose.msra.mxu0 0
      %4118 = vmatprep.subr.bf16.mxu0 0
      %4119 = vmatpush2.bf16.xpose.msra.mxu0 0
      %4120 = vmatprep.subr.bf16.mxu0 0
      %4121 = vmatpush2.bf16.xpose.msra.mxu0 0
      %4122 = vmatprep.subr.bf16.mxu0 0
      %4123 = vmatpush2.bf16.xpose.msra.mxu0 0
      %4124 = vmatprep.subr.bf16.mxu0 0
      %4125 = vmatpush2.bf16.xpose.msra.mxu0 0
      %4126 = vmatprep.subr.bf16.mxu0 0
      %4127 = vmatpush2.bf16.xpose.msra.mxu0 0
      %4128 = vmatprep.subr.bf16.mxu0 0
      %4129 = vmatpush2.bf16.xpose.msra.mxu0 0
      %4130 = vmatprep.subr.bf16.mxu0 0
      %4131 = vmatpush2.bf16.xpose.msra.mxu0 0
      %4132 = vmatprep.mubr.bf16.mxu0 0
      %4133 = vmatmul.mubr.bf16.gmra.mxu0 %v4099
      %v4134 = vpop.f32.mrf.mxu0
      %v4135 = vadd.f32 0.0, %v4134
      %v4136 = vpop.f32.mrf.mxu0
      %v4137 = vpop.f32.mrf.mxu0
      %v4138 = vadd.f32 0.0, %v4137
      %v4139 = vpop.f32.mrf.mxu0
      %4140 = vdwg.mxu0
      %vm4141 = vcmask 64512
      %v4142 = vsel %vm4141, %v4135, -inf
      %4143 = vmax.xlane.f32.xlu0 %v4142
      %v4144 = vpop.xlane.xlu0 %4143
      %v4145 = vsel %vm4141, %v4138, -inf
      %4146 = vmax.xlane.f32.xlu0 %v4145
      %v4147 = vpop.xlane.xlu0 %4146
      %v4148 = vsub.f32 %v4135, %v4144
      %v4149 = vsub.f32 %v4138, %v4147
      %v4150 = vmul.f32 %v4148, 1.442695
      %v4151 = vpow.pop %v4150
      %v4152 = vmul.f32 %v4149, 1.442695
      %v4153 = vpow.pop %v4152
      %v4154 = vsel %vm4141, %v4151, 0.0
      %4155 = vadd.xlane.f32.xlu0 %v4154
      %v4156 = vpop.xlane.xlu0 %4155
      %v4157 = vsel %vm4141, %v4153, 0.0
      %4158 = vadd.xlane.f32.xlu0 %v4157
      %v4159 = vpop.xlane.xlu0 %4158
      %v4160 = vrcp.pop %v4156
      %v4161 = vrcp.pop %v4159
      %v4162 = vmul.f32 %v4151, %v4160
      %v4163 = vmul.f32 %v4153, %v4161
      %v4164 = vmul.f32 %v4069, %v4080
      %v4165 = vpack.c.bf16 %v4164, %v4164
      %v4166 = vpack.c.bf16 %v4163, %v4162
      %v4167 = vmul.f32 %v3764, %v4085
      %v4168 = vmul.f32 %v3768, %v4085
      %v4169 = vpack.c.bf16 %v4168, %v4167
      %4170 = vmatprep.subr.bf16.mxu0 0
      %4171 = vmatpush1.bf16.xpose.msra.mxu0 0
      %4172 = vmatprep.subr.bf16.mxu0 0
      %4173 = vmatpush1.bf16.xpose.msra.mxu0 0
      %4174 = vmatprep.subr.bf16.mxu0 0
      %4175 = vmatpush1.bf16.xpose.msra.mxu0 0
      %4176 = vmatprep.subr.bf16.mxu0 0
      %4177 = vmatpush1.bf16.xpose.msra.mxu0 0
      %4178 = vmatprep.subr.bf16.mxu0 0
      %4179 = vmatpush1.bf16.xpose.msra.mxu0 0
      %4180 = vmatprep.subr.bf16.mxu0 0
      %4181 = vmatpush1.bf16.xpose.msra.mxu0 0
      %4182 = vmatprep.subr.bf16.mxu0 0
      %4183 = vmatpush1.bf16.xpose.msra.mxu0 0
      %4184 = vmatprep.subr.bf16.mxu0 0
      %4185 = vmatpush1.bf16.xpose.msra.mxu0 %v4096
      %4186 = vmatprep.subr.bf16.mxu0 0
      %4187 = vmatpush2.bf16.xpose.msra.mxu0 0
      %4188 = vmatprep.subr.bf16.mxu0 0
      %4189 = vmatpush2.bf16.xpose.msra.mxu0 0
      %4190 = vmatprep.subr.bf16.mxu0 0
      %4191 = vmatpush2.bf16.xpose.msra.mxu0 0
      %4192 = vmatprep.subr.bf16.mxu0 0
      %4193 = vmatpush2.bf16.xpose.msra.mxu0 0
      %4194 = vmatprep.subr.bf16.mxu0 0
      %4195 = vmatpush2.bf16.xpose.msra.mxu0 0
      %4196 = vmatprep.subr.bf16.mxu0 0
      %4197 = vmatpush2.bf16.xpose.msra.mxu0 0
      %4198 = vmatprep.subr.bf16.mxu0 0
      %4199 = vmatpush2.bf16.xpose.msra.mxu0 0
      %4200 = vmatprep.subr.bf16.mxu0 0
      %4201 = vmatpush2.bf16.xpose.msra.mxu0 0
      %4202 = vmatprep.mubr.bf16.mxu0 0
      %4203 = vmatmul.mubr.bf16.gmra.mxu0 %v4169
      %v4204 = vpop.f32.mrf.mxu0
      %v4205 = vadd.f32 0.0, %v4204
      %v4206 = vpop.f32.mrf.mxu0
      %v4207 = vpop.f32.mrf.mxu0
      %v4208 = vadd.f32 0.0, %v4207
      %v4209 = vpop.f32.mrf.mxu0
      %4210 = vdwg.mxu0
      %v4211 = vsel %vm4141, %v4205, -inf
      %4212 = vmax.xlane.f32.xlu0 %v4211
      %v4213 = vpop.xlane.xlu0 %4212
      %v4214 = vsel %vm4141, %v4208, -inf
      %4215 = vmax.xlane.f32.xlu0 %v4214
      %v4216 = vpop.xlane.xlu0 %4215
      %v4217 = vsub.f32 %v4205, %v4213
      %v4218 = vsub.f32 %v4208, %v4216
      %v4219 = vmul.f32 %v4217, 1.442695
      %v4220 = vpow.pop %v4219
      %v4221 = vmul.f32 %v4218, 1.442695
      %v4222 = vpow.pop %v4221
      %v4223 = vsel %vm4141, %v4220, 0.0
      %4224 = vadd.xlane.f32.xlu0 %v4223
      %v4225 = vpop.xlane.xlu0 %4224
      %v4226 = vsel %vm4141, %v4222, 0.0
      %4227 = vadd.xlane.f32.xlu0 %v4226
      %v4228 = vpop.xlane.xlu0 %4227
      %v4229 = vrcp.pop %v4225
      %v4230 = vrcp.pop %v4228
      %v4231 = vmul.f32 %v4220, %v4229
      %v4232 = vmul.f32 %v4222, %v4230
      %v4233 = vmul.f32 %v4069, %v4085
      %v4234 = vpack.c.bf16 %v4233, %v4233
      %v4235 = vpack.c.bf16 %v4232, %v4231
      %v4237 = vsel %vm4141, %v4235, 0
      %vm4239 = vcmask 1043456
      %v4241 = vsel %vm4239, %v4234, 0
      %4243 = vmatprep.subr.bf16.mxu0 0
      %4244 = vmatpush1.bf16.msra.mxu0 0
      %4245 = vmatprep.subr.bf16.mxu0 0
      %4246 = vmatpush1.bf16.msra.mxu0 0
      %4247 = vmatprep.subr.bf16.mxu0 0
      %4248 = vmatpush1.bf16.msra.mxu0 0
      %4249 = vmatprep.subr.bf16.mxu0 0
      %4250 = vmatpush1.bf16.msra.mxu0 0
      %4251 = vmatprep.subr.bf16.mxu0 0
      %4252 = vmatpush1.bf16.msra.mxu0 0
      %4253 = vmatprep.subr.bf16.mxu0 0
      %4254 = vmatpush1.bf16.msra.mxu0 0
      %4255 = vmatprep.subr.bf16.mxu0 0
      %4256 = vmatpush1.bf16.msra.mxu0 0
      %4257 = vmatprep.subr.bf16.mxu0 0
      %4258 = vmatpush1.bf16.msra.mxu0 %v4241
      %4259 = vmatprep.subr.bf16.mxu0 0
      %4260 = vmatpush2.bf16.msra.mxu0 0
      %4261 = vmatprep.subr.bf16.mxu0 0
      %4262 = vmatpush2.bf16.msra.mxu0 0
      %4263 = vmatprep.subr.bf16.mxu0 0
      %4264 = vmatpush2.bf16.msra.mxu0 0
      %4265 = vmatprep.subr.bf16.mxu0 0
      %4266 = vmatpush2.bf16.msra.mxu0 0
      %4267 = vmatprep.subr.bf16.mxu0 0
      %4268 = vmatpush2.bf16.msra.mxu0 0
      %4269 = vmatprep.subr.bf16.mxu0 0
      %4270 = vmatpush2.bf16.msra.mxu0 0
      %4271 = vmatprep.subr.bf16.mxu0 0
      %4272 = vmatpush2.bf16.msra.mxu0 0
      %4273 = vmatprep.subr.bf16.mxu0 0
      %4274 = vmatpush2.bf16.msra.mxu0 0
      %4275 = vmatprep.mubr.bf16.mxu0 0
      %4276 = vmatmul.mubr.bf16.gmra.mxu0 %v4237
      %v4277 = vpop.f32.mrf.mxu0
      %v4278 = vadd.f32 0.0, %v4277
      %v4279 = vpop.f32.mrf.mxu0
      %v4280 = vpop.f32.mrf.mxu0
      %v4281 = vadd.f32 0.0, %v4280
      %v4282 = vpop.f32.mrf.mxu0
      %4283 = vdwg.mxu0
      %v4285 = vsel %vm4141, %v4166, 0
      %v4288 = vsel %vm4239, %v4165, 0
      %4290 = vmatprep.subr.bf16.mxu0 0
      %4291 = vmatpush1.bf16.msra.mxu0 0
      %4292 = vmatprep.subr.bf16.mxu0 0
      %4293 = vmatpush1.bf16.msra.mxu0 0
      %4294 = vmatprep.subr.bf16.mxu0 0
      %4295 = vmatpush1.bf16.msra.mxu0 0
      %4296 = vmatprep.subr.bf16.mxu0 0
      %4297 = vmatpush1.bf16.msra.mxu0 0
      %4298 = vmatprep.subr.bf16.mxu0 0
      %4299 = vmatpush1.bf16.msra.mxu0 0
      %4300 = vmatprep.subr.bf16.mxu0 0
      %4301 = vmatpush1.bf16.msra.mxu0 0
      %4302 = vmatprep.subr.bf16.mxu0 0
      %4303 = vmatpush1.bf16.msra.mxu0 0
      %4304 = vmatprep.subr.bf16.mxu0 0
      %4305 = vmatpush1.bf16.msra.mxu0 %v4288
      %4306 = vmatprep.subr.bf16.mxu0 0
      %4307 = vmatpush2.bf16.msra.mxu0 0
      %4308 = vmatprep.subr.bf16.mxu0 0
      %4309 = vmatpush2.bf16.msra.mxu0 0
      %4310 = vmatprep.subr.bf16.mxu0 0
      %4311 = vmatpush2.bf16.msra.mxu0 0
      %4312 = vmatprep.subr.bf16.mxu0 0
      %4313 = vmatpush2.bf16.msra.mxu0 0
      %4314 = vmatprep.subr.bf16.mxu0 0
      %4315 = vmatpush2.bf16.msra.mxu0 0
      %4316 = vmatprep.subr.bf16.mxu0 0
      %4317 = vmatpush2.bf16.msra.mxu0 0
      %4318 = vmatprep.subr.bf16.mxu0 0
      %4319 = vmatpush2.bf16.msra.mxu0 0
      %4320 = vmatprep.subr.bf16.mxu0 0
      %4321 = vmatpush2.bf16.msra.mxu0 0
      %4322 = vmatprep.mubr.bf16.mxu0 0
      %4323 = vmatmul.mubr.bf16.gmra.mxu0 %v4285
      %v4324 = vpop.f32.mrf.mxu0
      %v4325 = vadd.f32 %v4278, %v4324
      %v4326 = vpop.f32.mrf.mxu0
      %v4327 = vpop.f32.mrf.mxu0
      %v4328 = vadd.f32 %v4281, %v4327
      %v4329 = vpop.f32.mrf.mxu0
      %4330 = vdwg.mxu0
      %v4331 = vmul.f32 %v3764, %v4090
      %v4332 = vmul.f32 %v3768, %v4090
      %v4333 = vpack.c.bf16 %v4332, %v4331
      %4334 = vmatprep.subr.bf16.mxu0 0
      %4335 = vmatpush1.bf16.xpose.msra.mxu0 0
      %4336 = vmatprep.subr.bf16.mxu0 0
      %4337 = vmatpush1.bf16.xpose.msra.mxu0 0
      %4338 = vmatprep.subr.bf16.mxu0 0
      %4339 = vmatpush1.bf16.xpose.msra.mxu0 0
      %4340 = vmatprep.subr.bf16.mxu0 0
      %4341 = vmatpush1.bf16.xpose.msra.mxu0 0
      %4342 = vmatprep.subr.bf16.mxu0 0
      %4343 = vmatpush1.bf16.xpose.msra.mxu0 0
      %4344 = vmatprep.subr.bf16.mxu0 0
      %4345 = vmatpush1.bf16.xpose.msra.mxu0 0
      %4346 = vmatprep.subr.bf16.mxu0 0
      %4347 = vmatpush1.bf16.xpose.msra.mxu0 0
      %4348 = vmatprep.subr.bf16.mxu0 0
      %4349 = vmatpush1.bf16.xpose.msra.mxu0 %v4096
      %4350 = vmatprep.subr.bf16.mxu0 0
      %4351 = vmatpush2.bf16.xpose.msra.mxu0 0
      %4352 = vmatprep.subr.bf16.mxu0 0
      %4353 = vmatpush2.bf16.xpose.msra.mxu0 0
      %4354 = vmatprep.subr.bf16.mxu0 0
      %4355 = vmatpush2.bf16.xpose.msra.mxu0 0
      %4356 = vmatprep.subr.bf16.mxu0 0
      %4357 = vmatpush2.bf16.xpose.msra.mxu0 0
      %4358 = vmatprep.subr.bf16.mxu0 0
      %4359 = vmatpush2.bf16.xpose.msra.mxu0 0
      %4360 = vmatprep.subr.bf16.mxu0 0
      %4361 = vmatpush2.bf16.xpose.msra.mxu0 0
      %4362 = vmatprep.subr.bf16.mxu0 0
      %4363 = vmatpush2.bf16.xpose.msra.mxu0 0
      %4364 = vmatprep.subr.bf16.mxu0 0
      %4365 = vmatpush2.bf16.xpose.msra.mxu0 0
      %4366 = vmatprep.mubr.bf16.mxu0 0
      %4367 = vmatmul.mubr.bf16.gmra.mxu0 %v4333
      %v4368 = vpop.f32.mrf.mxu0
      %v4369 = vadd.f32 0.0, %v4368
      %v4370 = vpop.f32.mrf.mxu0
      %v4371 = vpop.f32.mrf.mxu0
      %v4372 = vadd.f32 0.0, %v4371
      %v4373 = vpop.f32.mrf.mxu0
      %4374 = vdwg.mxu0
      %v4375 = vsel %vm4141, %v4369, -inf
      %4376 = vmax.xlane.f32.xlu0 %v4375
      %v4377 = vpop.xlane.xlu0 %4376
      %v4378 = vsel %vm4141, %v4372, -inf
      %4379 = vmax.xlane.f32.xlu0 %v4378
      %v4380 = vpop.xlane.xlu0 %4379
      %v4381 = vsub.f32 %v4369, %v4377
      %v4382 = vsub.f32 %v4372, %v4380
      %v4383 = vmul.f32 %v4381, 1.442695
      %v4384 = vpow.pop %v4383
      %v4385 = vmul.f32 %v4382, 1.442695
      %v4386 = vpow.pop %v4385
      %v4387 = vsel %vm4141, %v4384, 0.0
      %4388 = vadd.xlane.f32.xlu0 %v4387
      %v4389 = vpop.xlane.xlu0 %4388
      %v4390 = vsel %vm4141, %v4386, 0.0
      %4391 = vadd.xlane.f32.xlu0 %v4390
      %v4392 = vpop.xlane.xlu0 %4391
      %v4393 = vrcp.pop %v4389
      %v4394 = vrcp.pop %v4392
      %v4395 = vmul.f32 %v4384, %v4393
      %v4396 = vmul.f32 %v4386, %v4394
      %v4397 = vmul.f32 %v4069, %v4090
      %v4398 = vpack.c.bf16 %v4397, %v4397
      %v4399 = vpack.c.bf16 %v4396, %v4395
      %v4401 = vsel %vm4141, %v4399, 0
      %v4404 = vsel %vm4239, %v4398, 0
      %4406 = vmatprep.subr.bf16.mxu0 0
      %4407 = vmatpush1.bf16.msra.mxu0 0
      %4408 = vmatprep.subr.bf16.mxu0 0
      %4409 = vmatpush1.bf16.msra.mxu0 0
      %4410 = vmatprep.subr.bf16.mxu0 0
      %4411 = vmatpush1.bf16.msra.mxu0 0
      %4412 = vmatprep.subr.bf16.mxu0 0
      %4413 = vmatpush1.bf16.msra.mxu0 0
      %4414 = vmatprep.subr.bf16.mxu0 0
      %4415 = vmatpush1.bf16.msra.mxu0 0
      %4416 = vmatprep.subr.bf16.mxu0 0
      %4417 = vmatpush1.bf16.msra.mxu0 0
      %4418 = vmatprep.subr.bf16.mxu0 0
      %4419 = vmatpush1.bf16.msra.mxu0 0
      %4420 = vmatprep.subr.bf16.mxu0 0
      %4421 = vmatpush1.bf16.msra.mxu0 %v4404
      %4422 = vmatprep.subr.bf16.mxu0 0
      %4423 = vmatpush2.bf16.msra.mxu0 0
      %4424 = vmatprep.subr.bf16.mxu0 0
      %4425 = vmatpush2.bf16.msra.mxu0 0
      %4426 = vmatprep.subr.bf16.mxu0 0
      %4427 = vmatpush2.bf16.msra.mxu0 0
      %4428 = vmatprep.subr.bf16.mxu0 0
      %4429 = vmatpush2.bf16.msra.mxu0 0
      %4430 = vmatprep.subr.bf16.mxu0 0
      %4431 = vmatpush2.bf16.msra.mxu0 0
      %4432 = vmatprep.subr.bf16.mxu0 0
      %4433 = vmatpush2.bf16.msra.mxu0 0
      %4434 = vmatprep.subr.bf16.mxu0 0
      %4435 = vmatpush2.bf16.msra.mxu0 0
      %4436 = vmatprep.subr.bf16.mxu0 0
      %4437 = vmatpush2.bf16.msra.mxu0 0
      %4438 = vmatprep.mubr.bf16.mxu0 0
      %4439 = vmatmul.mubr.bf16.gmra.mxu0 %v4401
      %v4440 = vpop.f32.mrf.mxu0
      %v4441 = vadd.f32 0.0, %v4440
      %v4442 = vpop.f32.mrf.mxu0
      %v4443 = vpop.f32.mrf.mxu0
      %v4444 = vadd.f32 0.0, %v4443
      %v4445 = vpop.f32.mrf.mxu0
      %4446 = vdwg.mxu0
      %v4447 = vadd.f32 %v4325, %v4441
      %v4448 = vadd.f32 %v4328, %v4444
      %v4449 = vmul.f32 %v3764, %v4095
      %v4450 = vmul.f32 %v3768, %v4095
      %v4451 = vpack.c.bf16 %v4450, %v4449
      %4452 = vmatprep.subr.bf16.mxu0 0
      %4453 = vmatpush1.bf16.xpose.msra.mxu0 0
      %4454 = vmatprep.subr.bf16.mxu0 0
      %4455 = vmatpush1.bf16.xpose.msra.mxu0 0
      %4456 = vmatprep.subr.bf16.mxu0 0
      %4457 = vmatpush1.bf16.xpose.msra.mxu0 0
      %4458 = vmatprep.subr.bf16.mxu0 0
      %4459 = vmatpush1.bf16.xpose.msra.mxu0 0
      %4460 = vmatprep.subr.bf16.mxu0 0
      %4461 = vmatpush1.bf16.xpose.msra.mxu0 0
      %4462 = vmatprep.subr.bf16.mxu0 0
      %4463 = vmatpush1.bf16.xpose.msra.mxu0 0
      %4464 = vmatprep.subr.bf16.mxu0 0
      %4465 = vmatpush1.bf16.xpose.msra.mxu0 0
      %4466 = vmatprep.subr.bf16.mxu0 0
      %4467 = vmatpush1.bf16.xpose.msra.mxu0 %v4096
      %4468 = vmatprep.subr.bf16.mxu0 0
      %4469 = vmatpush2.bf16.xpose.msra.mxu0 0
      %4470 = vmatprep.subr.bf16.mxu0 0
      %4471 = vmatpush2.bf16.xpose.msra.mxu0 0
      %4472 = vmatprep.subr.bf16.mxu0 0
      %4473 = vmatpush2.bf16.xpose.msra.mxu0 0
      %4474 = vmatprep.subr.bf16.mxu0 0
      %4475 = vmatpush2.bf16.xpose.msra.mxu0 0
      %4476 = vmatprep.subr.bf16.mxu0 0
      %4477 = vmatpush2.bf16.xpose.msra.mxu0 0
      %4478 = vmatprep.subr.bf16.mxu0 0
      %4479 = vmatpush2.bf16.xpose.msra.mxu0 0
      %4480 = vmatprep.subr.bf16.mxu0 0
      %4481 = vmatpush2.bf16.xpose.msra.mxu0 0
      %4482 = vmatprep.subr.bf16.mxu0 0
      %4483 = vmatpush2.bf16.xpose.msra.mxu0 0
      %4484 = vmatprep.mubr.bf16.mxu0 0
      %4485 = vmatmul.mubr.bf16.gmra.mxu0 %v4451
      %v4486 = vpop.f32.mrf.mxu0
      %v4487 = vadd.f32 0.0, %v4486
      %v4488 = vpop.f32.mrf.mxu0
      %v4489 = vpop.f32.mrf.mxu0
      %v4490 = vadd.f32 0.0, %v4489
      %v4491 = vpop.f32.mrf.mxu0
      %4492 = vdwg.mxu0
      %v4493 = vsel %vm4141, %v4487, -inf
      %4494 = vmax.xlane.f32.xlu0 %v4493
      %v4495 = vpop.xlane.xlu0 %4494
      %v4496 = vsel %vm4141, %v4490, -inf
      %4497 = vmax.xlane.f32.xlu0 %v4496
      %v4498 = vpop.xlane.xlu0 %4497
      %v4499 = vsub.f32 %v4487, %v4495
      %v4500 = vsub.f32 %v4490, %v4498
      %v4501 = vmul.f32 %v4499, 1.442695
      %v4502 = vpow.pop %v4501
      %v4503 = vmul.f32 %v4500, 1.442695
      %v4504 = vpow.pop %v4503
      %v4505 = vsel %vm4141, %v4502, 0.0
      %4506 = vadd.xlane.f32.xlu0 %v4505
      %v4507 = vpop.xlane.xlu0 %4506
      %v4508 = vsel %vm4141, %v4504, 0.0
      %4509 = vadd.xlane.f32.xlu0 %v4508
      %v4510 = vpop.xlane.xlu0 %4509
      %v4511 = vrcp.pop %v4507
      %v4512 = vrcp.pop %v4510
      %v4513 = vmul.f32 %v4502, %v4511
      %v4514 = vmul.f32 %v4504, %v4512
      %v4515 = vmul.f32 %v4069, %v4095
      %v4516 = vpack.c.bf16 %v4515, %v4515
      %v4517 = vpack.c.bf16 %v4514, %v4513
      %v4519 = vsel %vm4141, %v4517, 0
      %v4522 = vsel %vm4239, %v4516, 0
      %4524 = vmatprep.subr.bf16.mxu0 0
      %4525 = vmatpush1.bf16.msra.mxu0 0
      %4526 = vmatprep.subr.bf16.mxu0 0
      %4527 = vmatpush1.bf16.msra.mxu0 0
      %4528 = vmatprep.subr.bf16.mxu0 0
      %4529 = vmatpush1.bf16.msra.mxu0 0
      %4530 = vmatprep.subr.bf16.mxu0 0
      %4531 = vmatpush1.bf16.msra.mxu0 0
      %4532 = vmatprep.subr.bf16.mxu0 0
      %4533 = vmatpush1.bf16.msra.mxu0 0
      %4534 = vmatprep.subr.bf16.mxu0 0
      %4535 = vmatpush1.bf16.msra.mxu0 0
      %4536 = vmatprep.subr.bf16.mxu0 0
      %4537 = vmatpush1.bf16.msra.mxu0 0
      %4538 = vmatprep.subr.bf16.mxu0 0
      %4539 = vmatpush1.bf16.msra.mxu0 %v4522
      %4540 = vmatprep.subr.bf16.mxu0 0
      %4541 = vmatpush2.bf16.msra.mxu0 0
      %4542 = vmatprep.subr.bf16.mxu0 0
      %4543 = vmatpush2.bf16.msra.mxu0 0
      %4544 = vmatprep.subr.bf16.mxu0 0
      %4545 = vmatpush2.bf16.msra.mxu0 0
      %4546 = vmatprep.subr.bf16.mxu0 0
      %4547 = vmatpush2.bf16.msra.mxu0 0
      %4548 = vmatprep.subr.bf16.mxu0 0
      %4549 = vmatpush2.bf16.msra.mxu0 0
      %4550 = vmatprep.subr.bf16.mxu0 0
      %4551 = vmatpush2.bf16.msra.mxu0 0
      %4552 = vmatprep.subr.bf16.mxu0 0
      %4553 = vmatpush2.bf16.msra.mxu0 0
      %4554 = vmatprep.subr.bf16.mxu0 0
      %4555 = vmatpush2.bf16.msra.mxu0 0
      %4556 = vmatprep.mubr.bf16.mxu0 0
      %4557 = vmatmul.mubr.bf16.gmra.mxu0 %v4519
      %v4558 = vpop.f32.mrf.mxu0
      %v4559 = vadd.f32 0.0, %v4558
      %v4560 = vpop.f32.mrf.mxu0
      %v4561 = vpop.f32.mrf.mxu0
      %v4562 = vadd.f32 0.0, %v4561
      %v4563 = vpop.f32.mrf.mxu0
      %4564 = vdwg.mxu0
      %v4565 = vadd.f32 %v4447, %v4559
      %v4566 = vadd.f32 %v4448, %v4562
      %v4567 = vadd.f32 %v4565, %v4566
      %v4568 = vrot.slane %v4567, 4
      %v4569 = vadd.f32 %v4567, %v4568
      %v4570 = vrot.slane %v4569, 2
      %v4571 = vadd.f32 %v4569, %v4570
      %v4572 = vrot.slane %v4571, 1
      %v4573 = vadd.f32 %v4571, %v4572
      %v4574 = vrcp.pop 16.0
      %v4575 = vmul.f32 %v4573, %v4574
      %v4576 = vpack.c.bf16 %v3770, %v3766
      %v4577 = vmul.f32 %v4028, %v4080
      %v4578 = vpack.c.bf16 %v4577, %v4577
      %4579 = vmatprep.subr.bf16.mxu0 0
      %4580 = vmatpush1.bf16.xpose.msra.mxu0 0
      %4581 = vmatprep.subr.bf16.mxu0 0
      %4582 = vmatpush1.bf16.xpose.msra.mxu0 0
      %4583 = vmatprep.subr.bf16.mxu0 0
      %4584 = vmatpush1.bf16.xpose.msra.mxu0 0
      %4585 = vmatprep.subr.bf16.mxu0 0
      %4586 = vmatpush1.bf16.xpose.msra.mxu0 0
      %4587 = vmatprep.subr.bf16.mxu0 0
      %4588 = vmatpush1.bf16.xpose.msra.mxu0 0
      %4589 = vmatprep.subr.bf16.mxu0 0
      %4590 = vmatpush1.bf16.xpose.msra.mxu0 0
      %4591 = vmatprep.subr.bf16.mxu0 0
      %4592 = vmatpush1.bf16.xpose.msra.mxu0 0
      %4593 = vmatprep.subr.bf16.mxu0 0
      %4594 = vmatpush1.bf16.xpose.msra.mxu0 %v4576
      %4595 = vmatprep.subr.bf16.mxu0 0
      %4596 = vmatpush2.bf16.xpose.msra.mxu0 0
      %4597 = vmatprep.subr.bf16.mxu0 0
      %4598 = vmatpush2.bf16.xpose.msra.mxu0 0
      %4599 = vmatprep.subr.bf16.mxu0 0
      %4600 = vmatpush2.bf16.xpose.msra.mxu0 0
      %4601 = vmatprep.subr.bf16.mxu0 0
      %4602 = vmatpush2.bf16.xpose.msra.mxu0 0
      %4603 = vmatprep.subr.bf16.mxu0 0
      %4604 = vmatpush2.bf16.xpose.msra.mxu0 0
      %4605 = vmatprep.subr.bf16.mxu0 0
      %4606 = vmatpush2.bf16.xpose.msra.mxu0 0
      %4607 = vmatprep.subr.bf16.mxu0 0
      %4608 = vmatpush2.bf16.xpose.msra.mxu0 0
      %4609 = vmatprep.subr.bf16.mxu0 0
      %4610 = vmatpush2.bf16.xpose.msra.mxu0 0
      %4611 = vmatprep.mubr.bf16.mxu0 0
      %4612 = vmatmul.mubr.bf16.gmra.mxu0 %v4578
      %v4613 = vpop.f32.mrf.mxu0
      %v4614 = vadd.f32 0.0, %v4613
      %v4615 = vpop.f32.mrf.mxu0
      %v4616 = vpop.f32.mrf.mxu0
      %v4617 = vpop.f32.mrf.mxu0
      %4618 = vdwg.mxu0
      %vm4619 = vcmask 130048
      %v4620 = vsel %vm4619, %v4614, -inf
      %4621 = vmax.xlane.f32.xlu0 %v4620
      %v4622 = vpop.xlane.xlu0 %4621
      %v4623 = vsub.f32 %v4614, %v4622
      %v4624 = vmul.f32 %v4623, 1.442695
      %v4625 = vpow.pop %v4624
      %v4626 = vsel %vm4619, %v4625, 0.0
      %4627 = vadd.xlane.f32.xlu0 %v4626
      %v4628 = vpop.xlane.xlu0 %4627
      %v4629 = vrcp.pop %v4628
      %v4630 = vmul.f32 %v4625, %v4629
      %v4631 = vmul.f32 %v3807, %v4080
      %v4632 = vmul.f32 %v3810, %v4080
      %v4633 = vpack.c.bf16 %v4632, %v4631
      %v4634 = vpack.c.bf16 %v4630, %v4630
      %v4635 = vmul.f32 %v4028, %v4085
      %v4636 = vpack.c.bf16 %v4635, %v4635
      %4637 = vmatprep.subr.bf16.mxu0 0
      %4638 = vmatpush1.bf16.xpose.msra.mxu0 0
      %4639 = vmatprep.subr.bf16.mxu0 0
      %4640 = vmatpush1.bf16.xpose.msra.mxu0 0
      %4641 = vmatprep.subr.bf16.mxu0 0
      %4642 = vmatpush1.bf16.xpose.msra.mxu0 0
      %4643 = vmatprep.subr.bf16.mxu0 0
      %4644 = vmatpush1.bf16.xpose.msra.mxu0 0
      %4645 = vmatprep.subr.bf16.mxu0 0
      %4646 = vmatpush1.bf16.xpose.msra.mxu0 0
      %4647 = vmatprep.subr.bf16.mxu0 0
      %4648 = vmatpush1.bf16.xpose.msra.mxu0 0
      %4649 = vmatprep.subr.bf16.mxu0 0
      %4650 = vmatpush1.bf16.xpose.msra.mxu0 0
      %4651 = vmatprep.subr.bf16.mxu0 0
      %4652 = vmatpush1.bf16.xpose.msra.mxu0 %v4576
      %4653 = vmatprep.subr.bf16.mxu0 0
      %4654 = vmatpush2.bf16.xpose.msra.mxu0 0
      %4655 = vmatprep.subr.bf16.mxu0 0
      %4656 = vmatpush2.bf16.xpose.msra.mxu0 0
      %4657 = vmatprep.subr.bf16.mxu0 0
      %4658 = vmatpush2.bf16.xpose.msra.mxu0 0
      %4659 = vmatprep.subr.bf16.mxu0 0
      %4660 = vmatpush2.bf16.xpose.msra.mxu0 0
      %4661 = vmatprep.subr.bf16.mxu0 0
      %4662 = vmatpush2.bf16.xpose.msra.mxu0 0
      %4663 = vmatprep.subr.bf16.mxu0 0
      %4664 = vmatpush2.bf16.xpose.msra.mxu0 0
      %4665 = vmatprep.subr.bf16.mxu0 0
      %4666 = vmatpush2.bf16.xpose.msra.mxu0 0
      %4667 = vmatprep.subr.bf16.mxu0 0
      %4668 = vmatpush2.bf16.xpose.msra.mxu0 0
      %4669 = vmatprep.mubr.bf16.mxu0 0
      %4670 = vmatmul.mubr.bf16.gmra.mxu0 %v4636
      %v4671 = vpop.f32.mrf.mxu0
      %v4672 = vadd.f32 0.0, %v4671
      %v4673 = vpop.f32.mrf.mxu0
      %v4674 = vpop.f32.mrf.mxu0
      %v4675 = vpop.f32.mrf.mxu0
      %4676 = vdwg.mxu0
      %v4677 = vsel %vm4619, %v4672, -inf
      %4678 = vmax.xlane.f32.xlu0 %v4677
      %v4679 = vpop.xlane.xlu0 %4678
      %v4680 = vsub.f32 %v4672, %v4679
      %v4681 = vmul.f32 %v4680, 1.442695
      %v4682 = vpow.pop %v4681
      %v4683 = vsel %vm4619, %v4682, 0.0
      %4684 = vadd.xlane.f32.xlu0 %v4683
      %v4685 = vpop.xlane.xlu0 %4684
      %v4686 = vrcp.pop %v4685
      %v4687 = vmul.f32 %v4682, %v4686
      %v4688 = vmul.f32 %v3807, %v4085
      %v4689 = vmul.f32 %v3810, %v4085
      %v4690 = vpack.c.bf16 %v4689, %v4688
      %v4691 = vpack.c.bf16 %v4687, %v4687
      %v4693 = vsel %vm4619, %v4691, 0
      %4695 = vmatprep.subr.bf16.mxu0 0
      %4696 = vmatpush1.bf16.msra.mxu0 0
      %4697 = vmatprep.subr.bf16.mxu0 0
      %4698 = vmatpush1.bf16.msra.mxu0 0
      %4699 = vmatprep.subr.bf16.mxu0 0
      %4700 = vmatpush1.bf16.msra.mxu0 0
      %4701 = vmatprep.subr.bf16.mxu0 0
      %4702 = vmatpush1.bf16.msra.mxu0 0
      %4703 = vmatprep.subr.bf16.mxu0 0
      %4704 = vmatpush1.bf16.msra.mxu0 0
      %4705 = vmatprep.subr.bf16.mxu0 0
      %4706 = vmatpush1.bf16.msra.mxu0 0
      %4707 = vmatprep.subr.bf16.mxu0 0
      %4708 = vmatpush1.bf16.msra.mxu0 0
      %4709 = vmatprep.subr.bf16.mxu0 0
      %4710 = vmatpush1.bf16.msra.mxu0 %v4690
      %4711 = vmatprep.subr.bf16.mxu0 0
      %4712 = vmatpush2.bf16.msra.mxu0 0
      %4713 = vmatprep.subr.bf16.mxu0 0
      %4714 = vmatpush2.bf16.msra.mxu0 0
      %4715 = vmatprep.subr.bf16.mxu0 0
      %4716 = vmatpush2.bf16.msra.mxu0 0
      %4717 = vmatprep.subr.bf16.mxu0 0
      %4718 = vmatpush2.bf16.msra.mxu0 0
      %4719 = vmatprep.subr.bf16.mxu0 0
      %4720 = vmatpush2.bf16.msra.mxu0 0
      %4721 = vmatprep.subr.bf16.mxu0 0
      %4722 = vmatpush2.bf16.msra.mxu0 0
      %4723 = vmatprep.subr.bf16.mxu0 0
      %4724 = vmatpush2.bf16.msra.mxu0 0
      %4725 = vmatprep.subr.bf16.mxu0 0
      %4726 = vmatpush2.bf16.msra.mxu0 0
      %4727 = vmatprep.mubr.bf16.mxu0 0
      %4728 = vmatmul.mubr.bf16.gmra.mxu0 %v4693
      %v4729 = vpop.f32.mrf.mxu0
      %v4730 = vadd.f32 0.0, %v4729
      %v4731 = vpop.f32.mrf.mxu0
      %v4732 = vpop.f32.mrf.mxu0
      %v4733 = vpop.f32.mrf.mxu0
      %4734 = vdwg.mxu0
      %v4736 = vsel %vm4619, %v4634, 0
      %4738 = vmatprep.subr.bf16.mxu0 0
      %4739 = vmatpush1.bf16.msra.mxu0 0
      %4740 = vmatprep.subr.bf16.mxu0 0
      %4741 = vmatpush1.bf16.msra.mxu0 0
      %4742 = vmatprep.subr.bf16.mxu0 0
      %4743 = vmatpush1.bf16.msra.mxu0 0
      %4744 = vmatprep.subr.bf16.mxu0 0
      %4745 = vmatpush1.bf16.msra.mxu0 0
      %4746 = vmatprep.subr.bf16.mxu0 0
      %4747 = vmatpush1.bf16.msra.mxu0 0
      %4748 = vmatprep.subr.bf16.mxu0 0
      %4749 = vmatpush1.bf16.msra.mxu0 0
      %4750 = vmatprep.subr.bf16.mxu0 0
      %4751 = vmatpush1.bf16.msra.mxu0 0
      %4752 = vmatprep.subr.bf16.mxu0 0
      %4753 = vmatpush1.bf16.msra.mxu0 %v4633
      %4754 = vmatprep.subr.bf16.mxu0 0
      %4755 = vmatpush2.bf16.msra.mxu0 0
      %4756 = vmatprep.subr.bf16.mxu0 0
      %4757 = vmatpush2.bf16.msra.mxu0 0
      %4758 = vmatprep.subr.bf16.mxu0 0
      %4759 = vmatpush2.bf16.msra.mxu0 0
      %4760 = vmatprep.subr.bf16.mxu0 0
      %4761 = vmatpush2.bf16.msra.mxu0 0
      %4762 = vmatprep.subr.bf16.mxu0 0
      %4763 = vmatpush2.bf16.msra.mxu0 0
      %4764 = vmatprep.subr.bf16.mxu0 0
      %4765 = vmatpush2.bf16.msra.mxu0 0
      %4766 = vmatprep.subr.bf16.mxu0 0
      %4767 = vmatpush2.bf16.msra.mxu0 0
      %4768 = vmatprep.subr.bf16.mxu0 0
      %4769 = vmatpush2.bf16.msra.mxu0 0
      %4770 = vmatprep.mubr.bf16.mxu0 0
      %4771 = vmatmul.mubr.bf16.gmra.mxu0 %v4736
      %v4772 = vpop.f32.mrf.mxu0
      %v4773 = vadd.f32 %v4730, %v4772
      %v4774 = vpop.f32.mrf.mxu0
      %v4775 = vpop.f32.mrf.mxu0
      %v4776 = vpop.f32.mrf.mxu0
      %4777 = vdwg.mxu0
      %v4778 = vmul.f32 %v4028, %v4090
      %v4779 = vpack.c.bf16 %v4778, %v4778
      %4780 = vmatprep.subr.bf16.mxu0 0
      %4781 = vmatpush1.bf16.xpose.msra.mxu0 0
      %4782 = vmatprep.subr.bf16.mxu0 0
      %4783 = vmatpush1.bf16.xpose.msra.mxu0 0
      %4784 = vmatprep.subr.bf16.mxu0 0
      %4785 = vmatpush1.bf16.xpose.msra.mxu0 0
      %4786 = vmatprep.subr.bf16.mxu0 0
      %4787 = vmatpush1.bf16.xpose.msra.mxu0 0
      %4788 = vmatprep.subr.bf16.mxu0 0
      %4789 = vmatpush1.bf16.xpose.msra.mxu0 0
      %4790 = vmatprep.subr.bf16.mxu0 0
      %4791 = vmatpush1.bf16.xpose.msra.mxu0 0
      %4792 = vmatprep.subr.bf16.mxu0 0
      %4793 = vmatpush1.bf16.xpose.msra.mxu0 0
      %4794 = vmatprep.subr.bf16.mxu0 0
      %4795 = vmatpush1.bf16.xpose.msra.mxu0 %v4576
      %4796 = vmatprep.subr.bf16.mxu0 0
      %4797 = vmatpush2.bf16.xpose.msra.mxu0 0
      %4798 = vmatprep.subr.bf16.mxu0 0
      %4799 = vmatpush2.bf16.xpose.msra.mxu0 0
      %4800 = vmatprep.subr.bf16.mxu0 0
      %4801 = vmatpush2.bf16.xpose.msra.mxu0 0
      %4802 = vmatprep.subr.bf16.mxu0 0
      %4803 = vmatpush2.bf16.xpose.msra.mxu0 0
      %4804 = vmatprep.subr.bf16.mxu0 0
      %4805 = vmatpush2.bf16.xpose.msra.mxu0 0
      %4806 = vmatprep.subr.bf16.mxu0 0
      %4807 = vmatpush2.bf16.xpose.msra.mxu0 0
      %4808 = vmatprep.subr.bf16.mxu0 0
      %4809 = vmatpush2.bf16.xpose.msra.mxu0 0
      %4810 = vmatprep.subr.bf16.mxu0 0
      %4811 = vmatpush2.bf16.xpose.msra.mxu0 0
      %4812 = vmatprep.mubr.bf16.mxu0 0
      %4813 = vmatmul.mubr.bf16.gmra.mxu0 %v4779
      %v4814 = vpop.f32.mrf.mxu0
      %v4815 = vadd.f32 0.0, %v4814
      %v4816 = vpop.f32.mrf.mxu0
      %v4817 = vpop.f32.mrf.mxu0
      %v4818 = vpop.f32.mrf.mxu0
      %4819 = vdwg.mxu0
      %v4820 = vsel %vm4619, %v4815, -inf
      %4821 = vmax.xlane.f32.xlu0 %v4820
      %v4822 = vpop.xlane.xlu0 %4821
      %v4823 = vsub.f32 %v4815, %v4822
      %v4824 = vmul.f32 %v4823, 1.442695
      %v4825 = vpow.pop %v4824
      %v4826 = vsel %vm4619, %v4825, 0.0
      %4827 = vadd.xlane.f32.xlu0 %v4826
      %v4828 = vpop.xlane.xlu0 %4827
      %v4829 = vrcp.pop %v4828
      %v4830 = vmul.f32 %v4825, %v4829
      %v4831 = vmul.f32 %v3807, %v4090
      %v4832 = vmul.f32 %v3810, %v4090
      %v4833 = vpack.c.bf16 %v4832, %v4831
      %v4834 = vpack.c.bf16 %v4830, %v4830
      %v4836 = vsel %vm4619, %v4834, 0
      %4838 = vmatprep.subr.bf16.mxu0 0
      %4839 = vmatpush1.bf16.msra.mxu0 0
      %4840 = vmatprep.subr.bf16.mxu0 0
      %4841 = vmatpush1.bf16.msra.mxu0 0
      %4842 = vmatprep.subr.bf16.mxu0 0
      %4843 = vmatpush1.bf16.msra.mxu0 0
      %4844 = vmatprep.subr.bf16.mxu0 0
      %4845 = vmatpush1.bf16.msra.mxu0 0
      %4846 = vmatprep.subr.bf16.mxu0 0
      %4847 = vmatpush1.bf16.msra.mxu0 0
      %4848 = vmatprep.subr.bf16.mxu0 0
      %4849 = vmatpush1.bf16.msra.mxu0 0
      %4850 = vmatprep.subr.bf16.mxu0 0
      %4851 = vmatpush1.bf16.msra.mxu0 0
      %4852 = vmatprep.subr.bf16.mxu0 0
      %4853 = vmatpush1.bf16.msra.mxu0 %v4833
      %4854 = vmatprep.subr.bf16.mxu0 0
      %4855 = vmatpush2.bf16.msra.mxu0 0
      %4856 = vmatprep.subr.bf16.mxu0 0
      %4857 = vmatpush2.bf16.msra.mxu0 0
      %4858 = vmatprep.subr.bf16.mxu0 0
      %4859 = vmatpush2.bf16.msra.mxu0 0
      %4860 = vmatprep.subr.bf16.mxu0 0
      %4861 = vmatpush2.bf16.msra.mxu0 0
      %4862 = vmatprep.subr.bf16.mxu0 0
      %4863 = vmatpush2.bf16.msra.mxu0 0
      %4864 = vmatprep.subr.bf16.mxu0 0
      %4865 = vmatpush2.bf16.msra.mxu0 0
      %4866 = vmatprep.subr.bf16.mxu0 0
      %4867 = vmatpush2.bf16.msra.mxu0 0
      %4868 = vmatprep.subr.bf16.mxu0 0
      %4869 = vmatpush2.bf16.msra.mxu0 0
      %4870 = vmatprep.mubr.bf16.mxu0 0
      %4871 = vmatmul.mubr.bf16.gmra.mxu0 %v4836
      %v4872 = vpop.f32.mrf.mxu0
      %v4873 = vadd.f32 0.0, %v4872
      %v4874 = vpop.f32.mrf.mxu0
      %v4875 = vpop.f32.mrf.mxu0
      %v4876 = vpop.f32.mrf.mxu0
      %4877 = vdwg.mxu0
      %v4878 = vadd.f32 %v4773, %v4873
      %v4879 = vmul.f32 %v4028, %v4095
      %v4880 = vpack.c.bf16 %v4879, %v4879
      %4881 = vmatprep.subr.bf16.mxu0 0
      %4882 = vmatpush1.bf16.xpose.msra.mxu0 0
      %4883 = vmatprep.subr.bf16.mxu0 0
      %4884 = vmatpush1.bf16.xpose.msra.mxu0 0
      %4885 = vmatprep.subr.bf16.mxu0 0
      %4886 = vmatpush1.bf16.xpose.msra.mxu0 0
      %4887 = vmatprep.subr.bf16.mxu0 0
      %4888 = vmatpush1.bf16.xpose.msra.mxu0 0
      %4889 = vmatprep.subr.bf16.mxu0 0
      %4890 = vmatpush1.bf16.xpose.msra.mxu0 0
      %4891 = vmatprep.subr.bf16.mxu0 0
      %4892 = vmatpush1.bf16.xpose.msra.mxu0 0
      %4893 = vmatprep.subr.bf16.mxu0 0
      %4894 = vmatpush1.bf16.xpose.msra.mxu0 0
      %4895 = vmatprep.subr.bf16.mxu0 0
      %4896 = vmatpush1.bf16.xpose.msra.mxu0 %v4576
      %4897 = vmatprep.subr.bf16.mxu0 0
      %4898 = vmatpush2.bf16.xpose.msra.mxu0 0
      %4899 = vmatprep.subr.bf16.mxu0 0
      %4900 = vmatpush2.bf16.xpose.msra.mxu0 0
      %4901 = vmatprep.subr.bf16.mxu0 0
      %4902 = vmatpush2.bf16.xpose.msra.mxu0 0
      %4903 = vmatprep.subr.bf16.mxu0 0
      %4904 = vmatpush2.bf16.xpose.msra.mxu0 0
      %4905 = vmatprep.subr.bf16.mxu0 0
      %4906 = vmatpush2.bf16.xpose.msra.mxu0 0
      %4907 = vmatprep.subr.bf16.mxu0 0
      %4908 = vmatpush2.bf16.xpose.msra.mxu0 0
      %4909 = vmatprep.subr.bf16.mxu0 0
      %4910 = vmatpush2.bf16.xpose.msra.mxu0 0
      %4911 = vmatprep.subr.bf16.mxu0 0
      %4912 = vmatpush2.bf16.xpose.msra.mxu0 0
      %4913 = vmatprep.mubr.bf16.mxu0 0
      %4914 = vmatmul.mubr.bf16.gmra.mxu0 %v4880
      %v4915 = vpop.f32.mrf.mxu0
      %v4916 = vadd.f32 0.0, %v4915
      %v4917 = vpop.f32.mrf.mxu0
      %v4918 = vpop.f32.mrf.mxu0
      %v4919 = vpop.f32.mrf.mxu0
      %4920 = vdwg.mxu0
      %v4921 = vsel %vm4619, %v4916, -inf
      %4922 = vmax.xlane.f32.xlu0 %v4921
      %v4923 = vpop.xlane.xlu0 %4922
      %v4924 = vsub.f32 %v4916, %v4923
      %v4925 = vmul.f32 %v4924, 1.442695
      %v4926 = vpow.pop %v4925
      %v4927 = vsel %vm4619, %v4926, 0.0
      %4928 = vadd.xlane.f32.xlu0 %v4927
      %v4929 = vpop.xlane.xlu0 %4928
      %v4930 = vrcp.pop %v4929
      %v4931 = vmul.f32 %v4926, %v4930
      %v4932 = vmul.f32 %v3807, %v4095
      %v4933 = vmul.f32 %v3810, %v4095
      %v4934 = vpack.c.bf16 %v4933, %v4932
      %v4935 = vpack.c.bf16 %v4931, %v4931
      %v4937 = vsel %vm4619, %v4935, 0
      %4939 = vmatprep.subr.bf16.mxu0 0
      %4940 = vmatpush1.bf16.msra.mxu0 0
      %4941 = vmatprep.subr.bf16.mxu0 0
      %4942 = vmatpush1.bf16.msra.mxu0 0
      %4943 = vmatprep.subr.bf16.mxu0 0
      %4944 = vmatpush1.bf16.msra.mxu0 0
      %4945 = vmatprep.subr.bf16.mxu0 0
      %4946 = vmatpush1.bf16.msra.mxu0 0
      %4947 = vmatprep.subr.bf16.mxu0 0
      %4948 = vmatpush1.bf16.msra.mxu0 0
      %4949 = vmatprep.subr.bf16.mxu0 0
      %4950 = vmatpush1.bf16.msra.mxu0 0
      %4951 = vmatprep.subr.bf16.mxu0 0
      %4952 = vmatpush1.bf16.msra.mxu0 0
      %4953 = vmatprep.subr.bf16.mxu0 0
      %4954 = vmatpush1.bf16.msra.mxu0 %v4934
      %4955 = vmatprep.subr.bf16.mxu0 0
      %4956 = vmatpush2.bf16.msra.mxu0 0
      %4957 = vmatprep.subr.bf16.mxu0 0
      %4958 = vmatpush2.bf16.msra.mxu0 0
      %4959 = vmatprep.subr.bf16.mxu0 0
      %4960 = vmatpush2.bf16.msra.mxu0 0
      %4961 = vmatprep.subr.bf16.mxu0 0
      %4962 = vmatpush2.bf16.msra.mxu0 0
      %4963 = vmatprep.subr.bf16.mxu0 0
      %4964 = vmatpush2.bf16.msra.mxu0 0
      %4965 = vmatprep.subr.bf16.mxu0 0
      %4966 = vmatpush2.bf16.msra.mxu0 0
      %4967 = vmatprep.subr.bf16.mxu0 0
      %4968 = vmatpush2.bf16.msra.mxu0 0
      %4969 = vmatprep.subr.bf16.mxu0 0
      %4970 = vmatpush2.bf16.msra.mxu0 0
      %4971 = vmatprep.mubr.bf16.mxu0 0
      %4972 = vmatmul.mubr.bf16.gmra.mxu0 %v4937
      %v4973 = vpop.f32.mrf.mxu0
      %v4974 = vadd.f32 0.0, %v4973
      %v4975 = vpop.f32.mrf.mxu0
      %v4976 = vpop.f32.mrf.mxu0
      %v4977 = vpop.f32.mrf.mxu0
      %4978 = vdwg.mxu0
      %v4979 = vadd.f32 %v4878, %v4974
      %v4980 = vrot.slane %v4979, 4
      %v4981 = vadd.f32 %v4979, %v4980
      %v4982 = vrot.slane %v4981, 2
      %v4983 = vadd.f32 %v4981, %v4982
      %v4984 = vrot.slane %v4983, 1
      %v4985 = vadd.f32 %v4983, %v4984
      %v4986 = vrcp.pop 8.0
      %v4987 = vmul.f32 %v4985, %v4986
      %v4988 = vpack.c.bf16 %v4575, %v4575
      %v4989 = vld [vmem:[%s8] sm:$0xf]
      %v4990 = vld [vmem:[%s8 + $0x4] sm:$0xf]
      %v4991 = vld [vmem:[%s8 + $0x8] sm:$0xf]
      %v4992 = vld [vmem:[%s8 + $0xc] sm:$0xf]
      %v4993 = vld [vmem:[%s8 + $0x10] sm:$0xf]
      %v4994 = vld [vmem:[%s8 + $0x14] sm:$0xf]
      %v4995 = vld [vmem:[%s8 + $0x18] sm:$0xf]
      %v4996 = vld [vmem:[%s8 + $0x1c] sm:$0xf]
      %v4997 = vld [vmem:[%s8 + $0x20] sm:$0xf]
      %v4998 = vld [vmem:[%s8 + $0x24] sm:$0xf]
      %v4999 = vld [vmem:[%s8 + $0x28] sm:$0xf]
      %v5000 = vld [vmem:[%s8 + $0x2c] sm:$0xf]
      %v5001 = vld [vmem:[%s8 + $0x30] sm:$0xf]
      %v5002 = vld [vmem:[%s8 + $0x34] sm:$0xf]
      %v5003 = vld [vmem:[%s8 + $0x38] sm:$0xf]
      %v5004 = vld [vmem:[%s8 + $0x3c] sm:$0xf]
      %v5005 = vld [vmem:[%s9] sm:$0x1]
      %v5022 = vunpack.c.l.b16 %v4989
      %v5023 = vunpack.c.l.b16 %v4990
      %v5024 = vunpack.c.l.b16 %v4991
      %v5025 = vunpack.c.l.b16 %v4992
      %v5026 = vunpack.c.l.b16 %v4993
      %v5027 = vunpack.c.l.b16 %v4994
      %v5028 = vunpack.c.l.b16 %v4995
      %v5029 = vunpack.c.l.b16 %v4996
      %v5030 = vunpack.c.l.b16 %v4997
      %v5031 = vunpack.c.l.b16 %v4998
      %v5032 = vunpack.c.l.b16 %v4999
      %v5033 = vunpack.c.l.b16 %v5000
      %v5034 = vunpack.c.l.b16 %v5001
      %v5035 = vunpack.c.l.b16 %v5002
      %v5036 = vunpack.c.l.b16 %v5003
      %v5037 = vunpack.c.l.b16 %v5004
      %v5038 = vpack.c.b16 %v5023, %v5022
      %v5039 = vpack.c.b16 %v5025, %v5024
      %v5040 = vpack.c.b16 %v5027, %v5026
      %v5041 = vpack.c.b16 %v5029, %v5028
      %v5042 = vpack.c.b16 %v5031, %v5030
      %v5043 = vpack.c.b16 %v5033, %v5032
      %v5044 = vpack.c.b16 %v5035, %v5034
      %v5045 = vpack.c.b16 %v5037, %v5036
      %5054 = vmatprep.subr.bf16.mxu0 0
      %5055 = vmatpush1.bf16.msra.mxu0 %v5045
      %5056 = vmatprep.subr.bf16.mxu0 0
      %5057 = vmatpush1.bf16.msra.mxu0 %v5044
      %5058 = vmatprep.subr.bf16.mxu0 0
      %5059 = vmatpush1.bf16.msra.mxu0 %v5043
      %5060 = vmatprep.subr.bf16.mxu0 0
      %5061 = vmatpush1.bf16.msra.mxu0 %v5042
      %5062 = vmatprep.subr.bf16.mxu0 0
      %5063 = vmatpush1.bf16.msra.mxu0 %v5041
      %5064 = vmatprep.subr.bf16.mxu0 0
      %5065 = vmatpush1.bf16.msra.mxu0 %v5040
      %5066 = vmatprep.subr.bf16.mxu0 0
      %5067 = vmatpush1.bf16.msra.mxu0 %v5039
      %5068 = vmatprep.subr.bf16.mxu0 0
      %5069 = vmatpush1.bf16.msra.mxu0 %v5038
      %5070 = vmatprep.subr.bf16.mxu0 0
      %5071 = vmatpush2.bf16.msra.mxu0 0
      %5072 = vmatprep.subr.bf16.mxu0 0
      %5073 = vmatpush2.bf16.msra.mxu0 0
      %5074 = vmatprep.subr.bf16.mxu0 0
      %5075 = vmatpush2.bf16.msra.mxu0 0
      %5076 = vmatprep.subr.bf16.mxu0 0
      %5077 = vmatpush2.bf16.msra.mxu0 0
      %5078 = vmatprep.subr.bf16.mxu0 0
      %5079 = vmatpush2.bf16.msra.mxu0 0
      %5080 = vmatprep.subr.bf16.mxu0 0
      %5081 = vmatpush2.bf16.msra.mxu0 0
      %5082 = vmatprep.subr.bf16.mxu0 0
      %5083 = vmatpush2.bf16.msra.mxu0 0
      %5084 = vmatprep.subr.bf16.mxu0 0
      %5085 = vmatpush2.bf16.msra.mxu0 0
      %5086 = vmatprep.mubr.bf16.mxu0 0
      %5087 = vmatmul.mubr.bf16.gmra.mxu0 %v4988
      %v5088 = vpop.f32.mrf.mxu0
      %v5089 = vadd.f32 %v5005, %v5088
      %v5090 = vpop.f32.mrf.mxu0
      %v5091 = vpop.f32.mrf.mxu0
      %v5092 = vpop.f32.mrf.mxu0
      %5093 = vdwg.mxu0
      %v5094 = vpack.c.bf16 %v4987, %v4987
      %s5095 = scalar_lea.vmem %s8, 64
      %v5096 = vld [vmem:[%s5095] sm:$0xf]
      %v5097 = vld [vmem:[%s5095 + $0x4] sm:$0xf]
      %v5098 = vld [vmem:[%s5095 + $0x8] sm:$0xf]
      %v5099 = vld [vmem:[%s5095 + $0xc] sm:$0xf]
      %v5100 = vld [vmem:[%s5095 + $0x10] sm:$0xf]
      %v5101 = vld [vmem:[%s5095 + $0x14] sm:$0xf]
      %v5102 = vld [vmem:[%s5095 + $0x18] sm:$0xf]
      %v5103 = vld [vmem:[%s5095 + $0x1c] sm:$0xf]
      %v5104 = vld [vmem:[%s5095 + $0x20] sm:$0xf]
      %v5105 = vld [vmem:[%s5095 + $0x24] sm:$0xf]
      %v5106 = vld [vmem:[%s5095 + $0x28] sm:$0xf]
      %v5107 = vld [vmem:[%s5095 + $0x2c] sm:$0xf]
      %v5108 = vld [vmem:[%s5095 + $0x30] sm:$0xf]
      %v5109 = vld [vmem:[%s5095 + $0x34] sm:$0xf]
      %v5110 = vld [vmem:[%s5095 + $0x38] sm:$0xf]
      %v5111 = vld [vmem:[%s5095 + $0x3c] sm:$0xf]
      %s5112 = scalar_lea.vmem %s9, 1
      %v5113 = vld [vmem:[%s5112] sm:$0x1]
      %v5130 = vunpack.c.l.b16 %v5096
      %v5131 = vunpack.c.l.b16 %v5097
      %v5132 = vunpack.c.l.b16 %v5098
      %v5133 = vunpack.c.l.b16 %v5099
      %v5134 = vunpack.c.l.b16 %v5100
      %v5135 = vunpack.c.l.b16 %v5101
      %v5136 = vunpack.c.l.b16 %v5102
      %v5137 = vunpack.c.l.b16 %v5103
      %v5138 = vunpack.c.l.b16 %v5104
      %v5139 = vunpack.c.l.b16 %v5105
      %v5140 = vunpack.c.l.b16 %v5106
      %v5141 = vunpack.c.l.b16 %v5107
      %v5142 = vunpack.c.l.b16 %v5108
      %v5143 = vunpack.c.l.b16 %v5109
      %v5144 = vunpack.c.l.b16 %v5110
      %v5145 = vunpack.c.l.b16 %v5111
      %v5146 = vpack.c.b16 %v5131, %v5130
      %v5147 = vpack.c.b16 %v5133, %v5132
      %v5148 = vpack.c.b16 %v5135, %v5134
      %v5149 = vpack.c.b16 %v5137, %v5136
      %v5150 = vpack.c.b16 %v5139, %v5138
      %v5151 = vpack.c.b16 %v5141, %v5140
      %v5152 = vpack.c.b16 %v5143, %v5142
      %v5153 = vpack.c.b16 %v5145, %v5144
      %5162 = vmatprep.subr.bf16.mxu0 0
      %5163 = vmatpush1.bf16.msra.mxu0 %v5153
      %5164 = vmatprep.subr.bf16.mxu0 0
      %5165 = vmatpush1.bf16.msra.mxu0 %v5152
      %5166 = vmatprep.subr.bf16.mxu0 0
      %5167 = vmatpush1.bf16.msra.mxu0 %v5151
      %5168 = vmatprep.subr.bf16.mxu0 0
      %5169 = vmatpush1.bf16.msra.mxu0 %v5150
      %5170 = vmatprep.subr.bf16.mxu0 0
      %5171 = vmatpush1.bf16.msra.mxu0 %v5149
      %5172 = vmatprep.subr.bf16.mxu0 0
      %5173 = vmatpush1.bf16.msra.mxu0 %v5148
      %5174 = vmatprep.subr.bf16.mxu0 0
      %5175 = vmatpush1.bf16.msra.mxu0 %v5147
      %5176 = vmatprep.subr.bf16.mxu0 0
      %5177 = vmatpush1.bf16.msra.mxu0 %v5146
      %5178 = vmatprep.subr.bf16.mxu0 0
      %5179 = vmatpush2.bf16.msra.mxu0 0
      %5180 = vmatprep.subr.bf16.mxu0 0
      %5181 = vmatpush2.bf16.msra.mxu0 0
      %5182 = vmatprep.subr.bf16.mxu0 0
      %5183 = vmatpush2.bf16.msra.mxu0 0
      %5184 = vmatprep.subr.bf16.mxu0 0
      %5185 = vmatpush2.bf16.msra.mxu0 0
      %5186 = vmatprep.subr.bf16.mxu0 0
      %5187 = vmatpush2.bf16.msra.mxu0 0
      %5188 = vmatprep.subr.bf16.mxu0 0
      %5189 = vmatpush2.bf16.msra.mxu0 0
      %5190 = vmatprep.subr.bf16.mxu0 0
      %5191 = vmatpush2.bf16.msra.mxu0 0
      %5192 = vmatprep.subr.bf16.mxu0 0
      %5193 = vmatpush2.bf16.msra.mxu0 0
      %5194 = vmatprep.mubr.bf16.mxu0 0
      %5195 = vmatmul.mubr.bf16.gmra.mxu0 %v5094
      %v5196 = vpop.f32.mrf.mxu0
      %v5197 = vadd.f32 %v5113, %v5196
      %v5198 = vpop.f32.mrf.mxu0
      %v5199 = vpop.f32.mrf.mxu0
      %v5200 = vpop.f32.mrf.mxu0
      %5201 = vdwg.mxu0
      %v5202 = vadd.f32 %v5089, %v5197
      %v5203 = vmul.f32 %v5202, 0.5
      %5204 = vst [vmem:[%s375] sm:$0x1] %v5203
      %p5205 = scmp.lt.s32.totalorder %s21, 1
      %s5206 = scalar_select %p5205, %s21, 1
      %s5207 = scalar_lea.vmem %s10, %s5206
      // Predicated region
      $region61: #{img_text_matching_forward.1} parent=59 // pred_check
        %p5208 = pneg %p259
      $region62: #{img_text_matching_forward.1} parent=59 // pred_check_branch
        %5210 = sbr.rel (%p5208) target = $region64
      $region63: #{img_text_matching_forward.1} parent=59 // pred_region
        _
      $region64: #{img_text_matching_forward.1} parent=59 // pred_fallthru
        _
    $region60: #{img_text_matching_forward.1} parent=5 // pred_fallthru
      _
    %p5211 = scmp.le.s32.totalorder 2, %s16
    // Predicated region
    $region65: #{img_text_matching_forward.1} parent=5 // pred_check
      %p5212 = pneg %p5211
    $region66: #{img_text_matching_forward.1} parent=5 // pred_check_branch
      %5214 = sbr.rel (%p5212) target = $region68
    $region67: #{img_text_matching_forward.1} parent=5 // pred_region
      %s5215 = ssub.s32 %s16, 2
      // Predicated region
      $region69: #{img_text_matching_forward.1} parent=67 // pred_check
        %p5216 = pneg %p265
      $region70: #{img_text_matching_forward.1} parent=67 // pred_check_branch
        %5218 = sbr.rel (%p5216) target = $region72
      $region71: #{img_text_matching_forward.1} parent=67 // pred_region
        %p5219 = scmp.lt.s32.totalorder %s22, 1
        %s5220 = scalar_select %p5219, %s22, 1
        %s5221 = scalar_lea.vmem %s10, %s5220
      $region72: #{img_text_matching_forward.1} parent=67 // pred_fallthru
        _
    $region68: #{img_text_matching_forward.1} parent=5 // pred_fallthru
      _
  $region6: #{img_text_matching_forward.1} parent=0 // loop_footer
    %s20 = sadd.s32 1, %s16
  $region7: #{img_text_matching_forward.1} parent=0 // loop_footer_branch
    %15 = sbr.rel target = $region3
  $region8: #{img_text_matching_forward.1} parent=0 // loop_exit
    _

</llo_original>
